<compile_context>
chip_gen: v7x
topology: tpu7x:2x2x1
jax: 0.10.0
libtpu: 0.0.40
codegen_flags: <defaults>
</compile_context>

<pallas_src>
import functools
import jax
import jax.numpy as jnp
from jax import lax
from jax.experimental import pallas as pl
from jax.experimental.pallas import tpu as pltpu

EPS = 1e-5
_LANE = 128


def _round_up(x, m):
    return ((x + m - 1) // m) * m


def _default_vmem_limit():
    # Generation-conditioned scoped-VMEM cap: ~96 MiB on 128 MiB parts (v5e/v6e),
    # ~48 MiB on 64 MiB parts (v7x).  Conservative fallback if the query fails.
    try:
        cap = pltpu.get_tpu_info().vmem_capacity_bytes
        return int(min(96 * 1024 * 1024, (cap * 3) // 4))
    except Exception:
        return 32 * 1024 * 1024


_VMEM_LIMIT = _default_vmem_limit()


# ----------------------------------------------------------------------------
# Fused conv kernel: one stacked-K GEMM per image (taps packed along the
# contraction dim in a VMEM scratch) + conv bias + BN batch-stats epilogue,
# optionally with the previous layer's BN affine + ReLU fused into the input
# path (applied once per block, not per tap).
# ----------------------------------------------------------------------------
def _make_conv_kernel(taps, Ho, Wo, Hb, Wb, Cin, fuse_in_bnrelu):
    P = Ho * Wo
    inv_P = 1.0 / P

    def kernel(*refs):
        if fuse_in_bnrelu:
            (x_ref, w_ref, b_ref, isc_ref, ish_ref,
             o_ref, st_ref, lhs_ref, act_ref) = refs
        else:
            x_ref, w_ref, b_ref, o_ref, st_ref, lhs_ref = refs

        # ---- one-shot fused BN(prev layer) + ReLU over the whole padded block ----
        # The zero pad ring (width 1) must remain zero after the affine -> interior mask.
        if fuse_in_bnrelu:
            isc = isc_ref[...].reshape(1, 1, Cin)
            ish = ish_ref[...].reshape(1, 1, Cin)
            y = jnp.maximum(x_ref[...] * isc + ish, 0.0)
            hi = lax.broadcasted_iota(jnp.int32, (Hb, Wb, 1), 0)
            wj = lax.broadcasted_iota(jnp.int32, (Hb, Wb, 1), 1)
            interior = ((hi >= 1) & (hi <= Hb - 2) &
                        (wj >= 1) & (wj <= Wb - 2))
            act_ref[...] = jnp.where(interior, y, 0.0)
            src = act_ref
        else:
            src = x_ref

        # ---- pack the taps along the contraction dim into the VMEM LHS scratch ----
        for rs, cs, t in taps:                           # static unroll (<= 9 taps)
            x_t = src[pl.ds(rs, Ho), pl.ds(cs, Wo), :]   # contiguous static slice
            lhs_ref[:, pl.ds(t * Cin, Cin)] = x_t.reshape(P, Cin)

        # ---- single GEMM (K = ksize*ksize*Cin), weights pushed once per step ----
        acc = jnp.dot(lhs_ref[...], w_ref[...],
                      preferred_element_type=jnp.float32) + b_ref[...]
        o_ref[...] = acc                                  # lane-dense (Cpad % 128 == 0)

        # ---- BN batch-stats epilogue: sum + CENTERED sum of squares ----
        s = jnp.sum(acc, axis=0, keepdims=True)
        st_ref[pl.ds(0, 1), :] = s
        d = acc - s * inv_P
        st_ref[pl.ds(1, 1), :] = jnp.sum(d * d, axis=0, keepdims=True)

    return kernel


def conv2d_bias_stats(x_sp, w_oihw, bias, *, stride, ksize,
                      in_scale=None, in_shift=None):
    """Fused conv + bias + BN batch-stats (one grid step per image).

    x_sp: NHWC input, already spatially padded as required for this conv.
    Returns (out [N, Ho*Wo, Cout], stats [N, 2, Cout], (Ho, Wo)).
    If in_scale/in_shift are given, relu(x*scale+shift) (with the zero pad ring
    preserved) is fused into the input path (requires stride == 1, ksize == 3).
    """
    N, Hp, Wp, Cin = x_sp.shape
    Cout = w_oihw.shape[0]
    Cpad = _round_up(Cout, _LANE)           # lane-dense output channels
    Ho = (Hp - ksize) // stride + 1
    Wo = (Wp - ksize) // stride + 1
    P = Ho * Wo
    KK = ksize * ksize

    fuse = in_scale is not None
    if fuse:
        assert stride == 1 and ksize == 3, "fused BN+ReLU path assumes stride 1, pad 1"

    # Stride-phase repack so every tap window is a contiguous slice in VMEM.
    if stride == 1:
        phases, Hq, Wq = x_sp, Hp, Wp
    else:
        s = stride
        Hq, Wq = -(-Hp // s), -(-Wp // s)
        xq = jnp.pad(x_sp, ((0, 0), (0, s * Hq - Hp), (0, s * Wq - Wp), (0, 0)))
        xq = xq.reshape(N, Hq, s, Wq, s, Cin).transpose(0, 2, 4, 1, 3, 5)
        phases = xq.reshape(N, s * s * Hq, Wq, Cin)
    Hbp = phases.shape[1]

    taps = []
    for di in range(ksize):
        for dj in range(ksize):
            q = (di % stride) * stride + (dj % stride)
            taps.append((q * Hq + di // stride, dj // stride, di * ksize + dj))
    taps = tuple(taps)

    # Weights as a single (KK*Cin, Cpad) RHS; K ordering matches the LHS packing.
    w_k = jnp.transpose(w_oihw, (2, 3, 1, 0)).reshape(KK * Cin, Cout)
    w_k = jnp.pad(w_k, ((0, 0), (0, Cpad - Cout))).astype(jnp.float32)
    b = jnp.pad(bias.reshape(1, Cout), ((0, 0), (0, Cpad - Cout))).astype(jnp.float32)

    kernel = _make_conv_kernel(taps, Ho, Wo, Hp, Wp, Cin, fuse)

    in_specs = [
        pl.BlockSpec((None, Hbp, Wq, Cin), lambda n: (n, 0, 0, 0)),
        pl.BlockSpec((KK * Cin, Cpad), lambda n: (0, 0)),
        pl.BlockSpec((1, Cpad), lambda n: (0, 0)),
    ]
    args = [phases.astype(jnp.float32), w_k, b]
    if fuse:
        in_specs += [pl.BlockSpec((1, Cin), lambda n: (0, 0)),
                     pl.BlockSpec((1, Cin), lambda n: (0, 0))]
        args += [in_scale.reshape(1, Cin).astype(jnp.float32),
                 in_shift.reshape(1, Cin).astype(jnp.float32)]

    scratch = [pltpu.VMEM((P, KK * Cin), jnp.float32)]            # stacked-K LHS
    if fuse:
        scratch.append(pltpu.VMEM((Hp, Wp, Cin), jnp.float32))    # pre-activated block

    flops = 2 * N * P * (KK * Cin) * Cpad
    bytes_accessed = 4 * (phases.size + w_k.size + N * P * Cpad + N * 2 * Cpad)

    out, stats = pl.pallas_call(
        kernel,
        out_shape=(jax.ShapeDtypeStruct((N, P, Cpad), jnp.float32),
                   jax.ShapeDtypeStruct((N, 2, Cpad), jnp.float32)),
        grid=(N,),
        in_specs=in_specs,
        out_specs=(pl.BlockSpec((None, P, Cpad), lambda n: (n, 0, 0)),
                   pl.BlockSpec((None, 2, Cpad), lambda n: (n, 0, 0))),
        scratch_shapes=scratch,
        compiler_params=pltpu.CompilerParams(
            dimension_semantics=("parallel",),
            vmem_limit_bytes=_VMEM_LIMIT),
        cost_estimate=pl.CostEstimate(flops=flops, transcendentals=0,
                                      bytes_accessed=bytes_accessed),
    )(*args)
    return out[:, :, :Cout], stats[:, :, :Cout], (Ho, Wo)


# ----------------------------------------------------------------------------
# Final fused elementwise kernel: bn2(h2) + bn_sc(shortcut), add, ReLU
# Operates on a lane-dense folded layout: rows of width Wo*C, channel affines
# pre-tiled to that width in the wrapper.
# ----------------------------------------------------------------------------
def _bn_add_relu_kernel(a_ref, sa_ref, ba_ref, c_ref, sc_ref, bc_ref, o_ref):
    y = (a_ref[...] * sa_ref[...] + ba_ref[...]
         + c_ref[...] * sc_ref[...] + bc_ref[...])
    o_ref[...] = jnp.maximum(y, 0.0)


def pallas_bn_add_relu(a_rw, sa_w, ba_w, c_rw, sc_w, bc_w):
    R, W = a_rw.shape
    tr = min(_round_up(R, 8), 1024)          # large row tiles for the mem-bound pass
    Rp = _round_up(R, tr)
    a = a_rw.astype(jnp.float32)
    c = c_rw.astype(jnp.float32)
    if Rp != R:                              # at most one pad in the whole forward
        a = jnp.pad(a, ((0, Rp - R), (0, 0)))
        c = jnp.pad(c, ((0, Rp - R), (0, 0)))
    out = pl.pallas_call(
        _bn_add_relu_kernel,
        out_shape=jax.ShapeDtypeStruct((Rp, W), jnp.float32),
        grid=(Rp // tr,),
        in_specs=[
            pl.BlockSpec((tr, W), lambda i: (i, 0)),
            pl.BlockSpec((1, W), lambda i: (0, 0)),
            pl.BlockSpec((1, W), lambda i: (0, 0)),
            pl.BlockSpec((tr, W), lambda i: (i, 0)),
            pl.BlockSpec((1, W), lambda i: (0, 0)),
            pl.BlockSpec((1, W), lambda i: (0, 0)),
        ],
        out_specs=pl.BlockSpec((tr, W), lambda i: (i, 0)),
        compiler_params=pltpu.CompilerParams(
            dimension_semantics=("parallel",),
            vmem_limit_bytes=_VMEM_LIMIT),
    )(a, sa_w.reshape(1, W).astype(jnp.float32), ba_w.reshape(1, W).astype(jnp.float32),
      c, sc_w.reshape(1, W).astype(jnp.float32), bc_w.reshape(1, W).astype(jnp.float32))
    return out[:R] if Rp != R else out


# ----------------------------------------------------------------------------
# BN affine from fused per-image stats (robust parallel-variance combination)
# ----------------------------------------------------------------------------
def _bn_affine_from_stats(stats, gamma, beta, P):
    # stats: (N, 2, C) per image: [sum, centered sum of squares]
    n_img = stats.shape[0]
    M = n_img * P
    sums = stats[:, 0, :]
    css = stats[:, 1, :]
    mean = jnp.sum(sums, axis=0) / M
    block_mean = sums / P
    var = (jnp.sum(css, axis=0)
           + P * jnp.sum((block_mean - mean[None, :]) ** 2, axis=0)) / M
    var = jnp.maximum(var, 0.0)
    scale = gamma / jnp.sqrt(var + EPS)
    shift = beta - mean * scale
    return scale.astype(jnp.float32), shift.astype(jnp.float32)


# ----------------------------------------------------------------------------
# Module forward
# ----------------------------------------------------------------------------
def residual_block_forward(x_nchw, params, stride):
    x = jnp.transpose(x_nchw, (0, 2, 3, 1)).astype(jnp.float32)   # NHWC
    N, H, W, Cin = x.shape
    Cout = params["w1"].shape[0]

    # conv1 (3x3, stride, pad 1) + bias, with fused BN batch stats
    x_pad = jnp.pad(x, ((0, 0), (1, 1), (1, 1), (0, 0)))
    h1, st1, (Ho, Wo) = conv2d_bias_stats(x_pad, params["w1"], params["b1"],
                                          stride=stride, ksize=3)
    P = Ho * Wo
    s1, t1 = _bn_affine_from_stats(st1, params["g1"], params["be1"], P)

    # conv2 (3x3, stride 1, pad 1) on relu(bn1(h1)); bn1+relu fused inside the conv kernel
    h1_pad = jnp.pad(h1.reshape(N, Ho, Wo, Cout), ((0, 0), (1, 1), (1, 1), (0, 0)))
    h2, st2, _ = conv2d_bias_stats(h1_pad, params["w2"], params["b2"],
                                   stride=1, ksize=3, in_scale=s1, in_shift=t1)
    s2, t2 = _bn_affine_from_stats(st2, params["g2"], params["be2"], P)

    # shortcut
    if stride != 1 or Cin != Cout:
        x_s = x[:, ::stride, ::stride, :]        # exact input of the 1x1/stride conv
        sc, sts, _ = conv2d_bias_stats(x_s, params["ws"], params["bs"],
                                       stride=1, ksize=1)
        ss, ts = _bn_affine_from_stats(sts, params["gs"], params["bes"], P)
        c_rw = sc.reshape(N * Ho, Wo * Cout)
    else:
        c_rw = x.reshape(N * Ho, Wo * Cout)      # identity (Ho == H, Wo == W, Cin == Cout)
        ss = jnp.ones((Cout,), jnp.float32)
        ts = jnp.zeros((Cout,), jnp.float32)

    # final elementwise pass on the lane-dense folded (N*Ho, Wo*Cout) layout
    out_rw = pallas_bn_add_relu(
        h2.reshape(N * Ho, Wo * Cout),
        jnp.tile(s2, Wo), jnp.tile(t2, Wo),
        c_rw,
        jnp.tile(ss, Wo), jnp.tile(ts, Wo))
    out = out_rw.reshape(N, Ho, Wo, Cout)
    return jnp.transpose(out, (0, 3, 1, 2))       # back to NCHW


# ----------------------------------------------------------------------------
# Pure-JAX reference (for verification)
# ----------------------------------------------------------------------------
def _ref_conv(x, w, b, stride, padding):
    y = lax.conv_general_dilated(x, w, (stride, stride),
                                 [(padding, padding), (padding, padding)],
                                 dimension_numbers=("NCHW", "OIHW", "NCHW"))
    return y + b.reshape(1, -1, 1, 1)


def _ref_bn(x, gamma, beta):
    mean = jnp.mean(x, axis=(0, 2, 3), keepdims=True)
    var = jnp.var(x, axis=(0, 2, 3), keepdims=True)   # biased, training-mode BN
    return ((x - mean) / jnp.sqrt(var + EPS) * gamma.reshape(1, -1, 1, 1)
            + beta.reshape(1, -1, 1, 1))


def residual_block_ref(x, p, stride):
    in_ch, out_ch = p["w1"].shape[1], p["w1"].shape[0]
    if stride != 1 or in_ch != out_ch:
        sc = _ref_bn(_ref_conv(x, p["ws"], p["bs"], stride, 0), p["gs"], p["bes"])
    else:
        sc = x
    h = jax.nn.relu(_ref_bn(_ref_conv(x, p["w1"], p["b1"], stride, 1), p["g1"], p["be1"]))
    h = _ref_bn(_ref_conv(h, p["w2"], p["b2"], 1, 1), p["g2"], p["be2"])
    return jax.nn.relu(h + sc)


# ----------------------------------------------------------------------------
def make_params(key, in_ch, out_ch):
    ks = jax.random.split(key, 6)

    def conv_init(k, shape):
        fan_in = shape[1] * shape[2] * shape[3]
        bound = 1.0 / jnp.sqrt(fan_in)
        return jax.random.uniform(k, shape, jnp.float32, -bound, bound)

    def bias_init(k, shape, fan_in):
        bound = 1.0 / jnp.sqrt(fan_in)
        return jax.random.uniform(k, shape, jnp.float32, -bound, bound)

    return {
        "w1": conv_init(ks[0], (out_ch, in_ch, 3, 3)),
        "b1": bias_init(ks[1], (out_ch,), in_ch * 9),
        "g1": jnp.ones((out_ch,), jnp.float32),
        "be1": jnp.zeros((out_ch,), jnp.float32),
        "w2": conv_init(ks[2], (out_ch, out_ch, 3, 3)),
        "b2": bias_init(ks[3], (out_ch,), out_ch * 9),
        "g2": jnp.ones((out_ch,), jnp.float32),
        "be2": jnp.zeros((out_ch,), jnp.float32),
        "ws": conv_init(ks[4], (out_ch, in_ch, 1, 1)),
        "bs": bias_init(ks[5], (out_ch,), in_ch),
        "gs": jnp.ones((out_ch,), jnp.float32),
        "bes": jnp.zeros((out_ch,), jnp.float32),
    }


if __name__ == "__main__":
    key = jax.random.PRNGKey(0)
    k_x, k_p = jax.random.split(key)

    N, in_ch, H, W = 2, 4, 16, 16
    out_ch, stride = 8, 2

    x = jax.random.normal(k_x, (N, in_ch, H, W), jnp.float32)
    params = make_params(k_p, in_ch, out_ch)

    fwd = jax.jit(functools.partial(residual_block_forward, stride=stride))
    out = jax.block_until_ready(fwd(x, params))

    ref = jax.block_until_ready(residual_block_ref(x, params, stride))

    assert out.shape == (N, out_ch, H // stride, W // stride), out.shape
    assert jnp.allclose(out, ref, atol=1e-4, rtol=1e-4), float(jnp.max(jnp.abs(out - ref)))

    print("KERNEL_OK")
</pallas_src>

<mosaic_0001>
module attributes {stable_mosaic.version = 11 : i64} {
  func.func @kernel(%arg0: i32, %arg1: memref<1x36x9x4xf32, #tpu.memory_space<vmem>>, %arg2: memref<36x128xf32, #tpu.memory_space<vmem>>, %arg3: memref<1x128xf32, #tpu.memory_space<vmem>>, %arg4: memref<1x64x128xf32, #tpu.memory_space<vmem>>, %arg5: memref<1x2x128xf32, #tpu.memory_space<vmem>>, %arg6: memref<64x36xf32, #tpu.memory_space<vmem>>) attributes {dimension_semantics = [#tpu.dimension_semantics<parallel>], iteration_bounds = array<i64: 2>, scalar_prefetch = 0 : i64, scratch_operands = 1 : i64, tpu.core_type = #tpu.core_type<tc>, window_params = [{transform_indices = @transform_0, window_bounds = array<i64: 1, 36, 9, 4>}, {pipeline_mode = #tpu.pipeline_mode<synchronous>, transform_indices = @transform_1, window_bounds = array<i64: 36, 128>}, {pipeline_mode = #tpu.pipeline_mode<synchronous>, transform_indices = @transform_2, window_bounds = array<i64: 1, 128>}, {transform_indices = @transform_3, window_bounds = array<i64: 1, 64, 128>}, {transform_indices = @transform_4, window_bounds = array<i64: 1, 2, 128>}]} {
    %c0 = arith.constant 0 : index
    %c0_0 = arith.constant 0 : index
    %c0_1 = arith.constant 0 : index
    %c0_2 = arith.constant 0 : index
    %0 = vector.load %arg1[%c0, %c0_0, %c0_1, %c0_2] : memref<1x36x9x4xf32, #tpu.memory_space<vmem>>, vector<1x8x8x4xf32>
    %1 = vector.shape_cast %0 : vector<1x8x8x4xf32> to vector<8x8x4xf32>
    %2 = vector.shape_cast %1 : vector<8x8x4xf32> to vector<64x4xf32>
    %c0_3 = arith.constant 0 : index
    %c0_4 = arith.constant 0 : index
    %3 = vector.load %arg6[%c0_3, %c0_4] : memref<64x36xf32, #tpu.memory_space<vmem>>, vector<64x4xf32>
    tpu.vector_store %arg6[%c0_3, %c0_4], %2 {strides = array<i32>} : memref<64x36xf32, #tpu.memory_space<vmem>>, vector<64x4xf32>,
    %c0_5 = arith.constant 0 : index
    %c9 = arith.constant 9 : index
    %c0_6 = arith.constant 0 : index
    %c0_7 = arith.constant 0 : index
    %4 = vector.load %arg1[%c0_5, %c9, %c0_6, %c0_7] : memref<1x36x9x4xf32, #tpu.memory_space<vmem>>, vector<1x8x8x4xf32>
    %5 = vector.shape_cast %4 : vector<1x8x8x4xf32> to vector<8x8x4xf32>
    %6 = vector.shape_cast %5 : vector<8x8x4xf32> to vector<64x4xf32>
    %c0_8 = arith.constant 0 : index
    %c4 = arith.constant 4 : index
    %7 = vector.load %arg6[%c0_8, %c4] : memref<64x36xf32, #tpu.memory_space<vmem>>, vector<64x4xf32>
    tpu.vector_store %arg6[%c0_8, %c4], %6 {strides = array<i32>} : memref<64x36xf32, #tpu.memory_space<vmem>>, vector<64x4xf32>,
    %c0_9 = arith.constant 0 : index
    %c0_10 = arith.constant 0 : index
    %c1 = arith.constant 1 : index
    %c0_11 = arith.constant 0 : index
    %8 = vector.load %arg1[%c0_9, %c0_10, %c1, %c0_11] : memref<1x36x9x4xf32, #tpu.memory_space<vmem>>, vector<1x8x8x4xf32>
    %9 = vector.shape_cast %8 : vector<1x8x8x4xf32> to vector<8x8x4xf32>
    %10 = vector.shape_cast %9 : vector<8x8x4xf32> to vector<64x4xf32>
    %c0_12 = arith.constant 0 : index
    %c8 = arith.constant 8 : index
    %11 = vector.load %arg6[%c0_12, %c8] : memref<64x36xf32, #tpu.memory_space<vmem>>, vector<64x4xf32>
    tpu.vector_store %arg6[%c0_12, %c8], %10 {strides = array<i32>} : memref<64x36xf32, #tpu.memory_space<vmem>>, vector<64x4xf32>,
    %c0_13 = arith.constant 0 : index
    %c18 = arith.constant 18 : index
    %c0_14 = arith.constant 0 : index
    %c0_15 = arith.constant 0 : index
    %12 = vector.load %arg1[%c0_13, %c18, %c0_14, %c0_15] : memref<1x36x9x4xf32, #tpu.memory_space<vmem>>, vector<1x8x8x4xf32>
    %13 = vector.shape_cast %12 : vector<1x8x8x4xf32> to vector<8x8x4xf32>
    %14 = vector.shape_cast %13 : vector<8x8x4xf32> to vector<64x4xf32>
    %c0_16 = arith.constant 0 : index
    %c12 = arith.constant 12 : index
    %15 = vector.load %arg6[%c0_16, %c12] : memref<64x36xf32, #tpu.memory_space<vmem>>, vector<64x4xf32>
    tpu.vector_store %arg6[%c0_16, %c12], %14 {strides = array<i32>} : memref<64x36xf32, #tpu.memory_space<vmem>>, vector<64x4xf32>,
    %c0_17 = arith.constant 0 : index
    %c27 = arith.constant 27 : index
    %c0_18 = arith.constant 0 : index
    %c0_19 = arith.constant 0 : index
    %16 = vector.load %arg1[%c0_17, %c27, %c0_18, %c0_19] : memref<1x36x9x4xf32, #tpu.memory_space<vmem>>, vector<1x8x8x4xf32>
    %17 = vector.shape_cast %16 : vector<1x8x8x4xf32> to vector<8x8x4xf32>
    %18 = vector.shape_cast %17 : vector<8x8x4xf32> to vector<64x4xf32>
    %c0_20 = arith.constant 0 : index
    %c16 = arith.constant 16 : index
    %19 = vector.load %arg6[%c0_20, %c16] : memref<64x36xf32, #tpu.memory_space<vmem>>, vector<64x4xf32>
    tpu.vector_store %arg6[%c0_20, %c16], %18 {strides = array<i32>} : memref<64x36xf32, #tpu.memory_space<vmem>>, vector<64x4xf32>,
    %c0_21 = arith.constant 0 : index
    %c18_22 = arith.constant 18 : index
    %c1_23 = arith.constant 1 : index
    %c0_24 = arith.constant 0 : index
    %20 = vector.load %arg1[%c0_21, %c18_22, %c1_23, %c0_24] : memref<1x36x9x4xf32, #tpu.memory_space<vmem>>, vector<1x8x8x4xf32>
    %21 = vector.shape_cast %20 : vector<1x8x8x4xf32> to vector<8x8x4xf32>
    %22 = vector.shape_cast %21 : vector<8x8x4xf32> to vector<64x4xf32>
    %c0_25 = arith.constant 0 : index
    %c20 = arith.constant 20 : index
    %23 = vector.load %arg6[%c0_25, %c20] : memref<64x36xf32, #tpu.memory_space<vmem>>, vector<64x4xf32>
    tpu.vector_store %arg6[%c0_25, %c20], %22 {strides = array<i32>} : memref<64x36xf32, #tpu.memory_space<vmem>>, vector<64x4xf32>,
    %c0_26 = arith.constant 0 : index
    %c1_27 = arith.constant 1 : index
    %c0_28 = arith.constant 0 : index
    %c0_29 = arith.constant 0 : index
    %24 = vector.load %arg1[%c0_26, %c1_27, %c0_28, %c0_29] : memref<1x36x9x4xf32, #tpu.memory_space<vmem>>, vector<1x8x8x4xf32>
    %25 = vector.shape_cast %24 : vector<1x8x8x4xf32> to vector<8x8x4xf32>
    %26 = vector.shape_cast %25 : vector<8x8x4xf32> to vector<64x4xf32>
    %c0_30 = arith.constant 0 : index
    %c24 = arith.constant 24 : index
    %27 = vector.load %arg6[%c0_30, %c24] : memref<64x36xf32, #tpu.memory_space<vmem>>, vector<64x4xf32>
    tpu.vector_store %arg6[%c0_30, %c24], %26 {strides = array<i32>} : memref<64x36xf32, #tpu.memory_space<vmem>>, vector<64x4xf32>,
    %c0_31 = arith.constant 0 : index
    %c10 = arith.constant 10 : index
    %c0_32 = arith.constant 0 : index
    %c0_33 = arith.constant 0 : index
    %28 = vector.load %arg1[%c0_31, %c10, %c0_32, %c0_33] : memref<1x36x9x4xf32, #tpu.memory_space<vmem>>, vector<1x8x8x4xf32>
    %29 = vector.shape_cast %28 : vector<1x8x8x4xf32> to vector<8x8x4xf32>
    %30 = vector.shape_cast %29 : vector<8x8x4xf32> to vector<64x4xf32>
    %c0_34 = arith.constant 0 : index
    %c28 = arith.constant 28 : index
    %31 = vector.load %arg6[%c0_34, %c28] : memref<64x36xf32, #tpu.memory_space<vmem>>, vector<64x4xf32>
    tpu.vector_store %arg6[%c0_34, %c28], %30 {strides = array<i32>} : memref<64x36xf32, #tpu.memory_space<vmem>>, vector<64x4xf32>,
    %c0_35 = arith.constant 0 : index
    %c1_36 = arith.constant 1 : index
    %c1_37 = arith.constant 1 : index
    %c0_38 = arith.constant 0 : index
    %32 = vector.load %arg1[%c0_35, %c1_36, %c1_37, %c0_38] : memref<1x36x9x4xf32, #tpu.memory_space<vmem>>, vector<1x8x8x4xf32>
    %33 = vector.shape_cast %32 : vector<1x8x8x4xf32> to vector<8x8x4xf32>
    %34 = vector.shape_cast %33 : vector<8x8x4xf32> to vector<64x4xf32>
    %c0_39 = arith.constant 0 : index
    %c32 = arith.constant 32 : index
    %35 = vector.load %arg6[%c0_39, %c32] : memref<64x36xf32, #tpu.memory_space<vmem>>, vector<64x4xf32>
    tpu.vector_store %arg6[%c0_39, %c32], %34 {strides = array<i32>} : memref<64x36xf32, #tpu.memory_space<vmem>>, vector<64x4xf32>,
    %c0_40 = arith.constant 0 : index
    %c0_41 = arith.constant 0 : index
    %36 = vector.load %arg6[%c0_40, %c0_41] : memref<64x36xf32, #tpu.memory_space<vmem>>, vector<64x36xf32>
    %c0_42 = arith.constant 0 : index
    %c0_43 = arith.constant 0 : index
    %37 = vector.load %arg2[%c0_42, %c0_43] : memref<36x128xf32, #tpu.memory_space<vmem>>, vector<36x128xf32>
    %cst = arith.constant dense<0.000000e+00> : vector<64x128xf32>
    %38 = tpu.matmul %36, %37, %cst {dimension_numbers = #tpu.dot_dimension_numbers<[1], [0], [0], [1], [0, 0, 1, 1], [], []>} : vector<64x36xf32>, vector<36x128xf32>, vector<64x128xf32> -> vector<64x128xf32>
    %c0_44 = arith.constant 0 : index
    %c0_45 = arith.constant 0 : index
    %39 = vector.load %arg3[%c0_44, %c0_45] : memref<1x128xf32, #tpu.memory_space<vmem>>, vector<1x128xf32>
    %40 = vector.broadcast %39 : vector<1x128xf32> to vector<64x128xf32>
    %41 = arith.addf %38, %40 : vector<64x128xf32>
    %c0_46 = arith.constant 0 : index
    %c0_47 = arith.constant 0 : index
    %c0_48 = arith.constant 0 : index
    %42 = vector.load %arg4[%c0_46, %c0_47, %c0_48] : memref<1x64x128xf32, #tpu.memory_space<vmem>>, vector<1x64x128xf32>
    %43 = vector.shape_cast %42 : vector<1x64x128xf32> to vector<64x128xf32>
    %44 = vector.shape_cast %41 : vector<64x128xf32> to vector<1x64x128xf32>
    tpu.vector_store %arg4[%c0_46, %c0_47, %c0_48], %44 {strides = array<i32>} : memref<1x64x128xf32, #tpu.memory_space<vmem>>, vector<1x64x128xf32>,
    %cst_49 = arith.constant dense<0.000000e+00> : vector<128xf32>
    %45 = vector.multi_reduction <add>, %41, %cst_49 [0] : vector<64x128xf32> to vector<128xf32>
    %46 = vector.shape_cast %45 : vector<128xf32> to vector<1x128xf32>
    %c0_50 = arith.constant 0 : index
    %c0_51 = arith.constant 0 : index
    %c0_52 = arith.constant 0 : index
    %47 = vector.load %arg5[%c0_50, %c0_51, %c0_52] : memref<1x2x128xf32, #tpu.memory_space<vmem>>, vector<1x1x128xf32>
    %48 = vector.shape_cast %47 : vector<1x1x128xf32> to vector<1x128xf32>
    %49 = vector.shape_cast %46 : vector<1x128xf32> to vector<1x1x128xf32>
    tpu.vector_store %arg5[%c0_50, %c0_51, %c0_52], %49 {strides = array<i32>} : memref<1x2x128xf32, #tpu.memory_space<vmem>>, vector<1x1x128xf32>,
    %cst_53 = arith.constant 1.562500e-02 : f32
    %50 = vector.broadcast %cst_53 : f32 to vector<1x128xf32>
    %51 = arith.mulf %46, %50 : vector<1x128xf32>
    %52 = vector.broadcast %51 : vector<1x128xf32> to vector<64x128xf32>
    %53 = arith.subf %41, %52 : vector<64x128xf32>
    %54 = arith.mulf %53, %53 : vector<64x128xf32>
    %cst_54 = arith.constant dense<0.000000e+00> : vector<128xf32>
    %55 = vector.multi_reduction <add>, %54, %cst_54 [0] : vector<64x128xf32> to vector<128xf32>
    %56 = vector.shape_cast %55 : vector<128xf32> to vector<1x128xf32>
    %c0_55 = arith.constant 0 : index
    %c1_56 = arith.constant 1 : index
    %c0_57 = arith.constant 0 : index
    %57 = vector.load %arg5[%c0_55, %c1_56, %c0_57] : memref<1x2x128xf32, #tpu.memory_space<vmem>>, vector<1x1x128xf32>
    %58 = vector.shape_cast %57 : vector<1x1x128xf32> to vector<1x128xf32>
    %59 = vector.shape_cast %56 : vector<1x128xf32> to vector<1x1x128xf32>
    tpu.vector_store %arg5[%c0_55, %c1_56, %c0_57], %59 {strides = array<i32>} : memref<1x2x128xf32, #tpu.memory_space<vmem>>, vector<1x1x128xf32>,
    return
  }
  func.func @transform_0(%arg0: i32) -> (i32, i32, i32, i32) {
    %c0_i32 = arith.constant 0 : i32
    %c0_i32_0 = arith.constant 0 : i32
    %c0_i32_1 = arith.constant 0 : i32
    %c0_i32_2 = arith.constant 0 : i32
    return %arg0, %c0_i32, %c0_i32_0, %c0_i32_1 : i32, i32, i32, i32
  }
  func.func @transform_1(%arg0: i32) -> (i32, i32) {
    %c0_i32 = arith.constant 0 : i32
    %c0_i32_0 = arith.constant 0 : i32
    %c0_i32_1 = arith.constant 0 : i32
    return %c0_i32, %c0_i32_0 : i32, i32
  }
  func.func @transform_2(%arg0: i32) -> (i32, i32) {
    %c0_i32 = arith.constant 0 : i32
    %c0_i32_0 = arith.constant 0 : i32
    %c0_i32_1 = arith.constant 0 : i32
    return %c0_i32, %c0_i32_0 : i32, i32
  }
  func.func @transform_3(%arg0: i32) -> (i32, i32, i32) {
    %c0_i32 = arith.constant 0 : i32
    %c0_i32_0 = arith.constant 0 : i32
    %c0_i32_1 = arith.constant 0 : i32
    return %arg0, %c0_i32, %c0_i32_0 : i32, i32, i32
  }
  func.func @transform_4(%arg0: i32) -> (i32, i32, i32) {
    %c0_i32 = arith.constant 0 : i32
    %c0_i32_0 = arith.constant 0 : i32
    %c0_i32_1 = arith.constant 0 : i32
    return %arg0, %c0_i32, %c0_i32_0 : i32, i32, i32
  }
}

module attributes {stable_mosaic.version = 11 : i64} {
  func.func @kernel(%arg0: i32, %arg1: memref<1x10x10x8xf32, #tpu.memory_space<vmem>>, %arg2: memref<72x128xf32, #tpu.memory_space<vmem>>, %arg3: memref<1x128xf32, #tpu.memory_space<vmem>>, %arg4: memref<1x8xf32, #tpu.memory_space<vmem>>, %arg5: memref<1x8xf32, #tpu.memory_space<vmem>>, %arg6: memref<1x64x128xf32, #tpu.memory_space<vmem>>, %arg7: memref<1x2x128xf32, #tpu.memory_space<vmem>>, %arg8: memref<64x72xf32, #tpu.memory_space<vmem>>, %arg9: memref<10x10x8xf32, #tpu.memory_space<vmem>>) attributes {dimension_semantics = [#tpu.dimension_semantics<parallel>], iteration_bounds = array<i64: 2>, scalar_prefetch = 0 : i64, scratch_operands = 2 : i64, tpu.core_type = #tpu.core_type<tc>, window_params = [{transform_indices = @transform_0, window_bounds = array<i64: 1, 10, 10, 8>}, {pipeline_mode = #tpu.pipeline_mode<synchronous>, transform_indices = @transform_1, window_bounds = array<i64: 72, 128>}, {pipeline_mode = #tpu.pipeline_mode<synchronous>, transform_indices = @transform_2, window_bounds = array<i64: 1, 128>}, {pipeline_mode = #tpu.pipeline_mode<synchronous>, transform_indices = @transform_3, window_bounds = array<i64: 1, 8>}, {pipeline_mode = #tpu.pipeline_mode<synchronous>, transform_indices = @transform_4, window_bounds = array<i64: 1, 8>}, {transform_indices = @transform_5, window_bounds = array<i64: 1, 64, 128>}, {transform_indices = @transform_6, window_bounds = array<i64: 1, 2, 128>}]} {
    %c0 = arith.constant 0 : index
    %c0_0 = arith.constant 0 : index
    %0 = vector.load %arg4[%c0, %c0_0] : memref<1x8xf32, #tpu.memory_space<vmem>>, vector<1x8xf32>
    %1 = vector.shape_cast %0 : vector<1x8xf32> to vector<1x1x8xf32>
    %c0_1 = arith.constant 0 : index
    %c0_2 = arith.constant 0 : index
    %2 = vector.load %arg5[%c0_1, %c0_2] : memref<1x8xf32, #tpu.memory_space<vmem>>, vector<1x8xf32>
    %3 = vector.shape_cast %2 : vector<1x8xf32> to vector<1x1x8xf32>
    %c0_3 = arith.constant 0 : index
    %c0_4 = arith.constant 0 : index
    %c0_5 = arith.constant 0 : index
    %c0_6 = arith.constant 0 : index
    %4 = vector.load %arg1[%c0_3, %c0_4, %c0_5, %c0_6] : memref<1x10x10x8xf32, #tpu.memory_space<vmem>>, vector<1x10x10x8xf32>
    %5 = vector.shape_cast %4 : vector<1x10x10x8xf32> to vector<10x10x8xf32>
    %6 = vector.broadcast %1 : vector<1x1x8xf32> to vector<10x10x8xf32>
    %7 = arith.mulf %5, %6 : vector<10x10x8xf32>
    %8 = vector.broadcast %3 : vector<1x1x8xf32> to vector<10x10x8xf32>
    %9 = arith.addf %7, %8 : vector<10x10x8xf32>
    %cst = arith.constant 0.000000e+00 : f32
    %10 = vector.broadcast %cst : f32 to vector<10x10x8xf32>
    %11 = arith.maximumf %9, %10 : vector<10x10x8xf32>
    %12 = tpu.iota {dimensions = array<i32: 0>} : vector<10x10x1xi32>
    %13 = tpu.iota {dimensions = array<i32: 1>} : vector<10x10x1xi32>
    %c1_i32 = arith.constant 1 : i32
    %14 = vector.broadcast %c1_i32 : i32 to vector<10x10x1xi32>
    %15 = arith.cmpi sge, %12, %14 : vector<10x10x1xi32>
    %c8_i32 = arith.constant 8 : i32
    %16 = vector.broadcast %c8_i32 : i32 to vector<10x10x1xi32>
    %17 = arith.cmpi sle, %12, %16 : vector<10x10x1xi32>
    %18 = arith.andi %15, %17 : vector<10x10x1xi1>
    %c1_i32_7 = arith.constant 1 : i32
    %19 = vector.broadcast %c1_i32_7 : i32 to vector<10x10x1xi32>
    %20 = arith.cmpi sge, %13, %19 : vector<10x10x1xi32>
    %21 = arith.andi %18, %20 : vector<10x10x1xi1>
    %c8_i32_8 = arith.constant 8 : i32
    %22 = vector.broadcast %c8_i32_8 : i32 to vector<10x10x1xi32>
    %23 = arith.cmpi sle, %13, %22 : vector<10x10x1xi32>
    %24 = arith.andi %21, %23 : vector<10x10x1xi1>
    %cst_9 = arith.constant 0.000000e+00 : f32
    %25 = vector.shape_cast %24 : vector<10x10x1xi1> to vector<10x10x1xi1>
    %26 = vector.broadcast %25 : vector<10x10x1xi1> to vector<10x10x8xi1>
    %27 = vector.broadcast %cst_9 : f32 to vector<10x10x8xf32>
    %28 = arith.select %26, %11, %27 : vector<10x10x8xi1>, vector<10x10x8xf32>
    %c0_10 = arith.constant 0 : index
    %c0_11 = arith.constant 0 : index
    %c0_12 = arith.constant 0 : index
    %29 = vector.load %arg9[%c0_10, %c0_11, %c0_12] : memref<10x10x8xf32, #tpu.memory_space<vmem>>, vector<10x10x8xf32>
    tpu.vector_store %arg9[%c0_10, %c0_11, %c0_12], %28 {strides = array<i32>} : memref<10x10x8xf32, #tpu.memory_space<vmem>>, vector<10x10x8xf32>,
    %c0_13 = arith.constant 0 : index
    %c0_14 = arith.constant 0 : index
    %c0_15 = arith.constant 0 : index
    %30 = vector.load %arg9[%c0_13, %c0_14, %c0_15] : memref<10x10x8xf32, #tpu.memory_space<vmem>>, vector<8x8x8xf32>
    %31 = vector.shape_cast %30 : vector<8x8x8xf32> to vector<64x8xf32>
    %c0_16 = arith.constant 0 : index
    %c0_17 = arith.constant 0 : index
    %32 = vector.load %arg8[%c0_16, %c0_17] : memref<64x72xf32, #tpu.memory_space<vmem>>, vector<64x8xf32>
    tpu.vector_store %arg8[%c0_16, %c0_17], %31 {strides = array<i32>} : memref<64x72xf32, #tpu.memory_space<vmem>>, vector<64x8xf32>,
    %c0_18 = arith.constant 0 : index
    %c1 = arith.constant 1 : index
    %c0_19 = arith.constant 0 : index
    %33 = vector.load %arg9[%c0_18, %c1, %c0_19] : memref<10x10x8xf32, #tpu.memory_space<vmem>>, vector<8x8x8xf32>
    %34 = vector.shape_cast %33 : vector<8x8x8xf32> to vector<64x8xf32>
    %c0_20 = arith.constant 0 : index
    %c8 = arith.constant 8 : index
    %35 = vector.load %arg8[%c0_20, %c8] : memref<64x72xf32, #tpu.memory_space<vmem>>, vector<64x8xf32>
    tpu.vector_store %arg8[%c0_20, %c8], %34 {strides = array<i32>} : memref<64x72xf32, #tpu.memory_space<vmem>>, vector<64x8xf32>,
    %c0_21 = arith.constant 0 : index
    %c2 = arith.constant 2 : index
    %c0_22 = arith.constant 0 : index
    %36 = vector.load %arg9[%c0_21, %c2, %c0_22] : memref<10x10x8xf32, #tpu.memory_space<vmem>>, vector<8x8x8xf32>
    %37 = vector.shape_cast %36 : vector<8x8x8xf32> to vector<64x8xf32>
    %c0_23 = arith.constant 0 : index
    %c16 = arith.constant 16 : index
    %38 = vector.load %arg8[%c0_23, %c16] : memref<64x72xf32, #tpu.memory_space<vmem>>, vector<64x8xf32>
    tpu.vector_store %arg8[%c0_23, %c16], %37 {strides = array<i32>} : memref<64x72xf32, #tpu.memory_space<vmem>>, vector<64x8xf32>,
    %c1_24 = arith.constant 1 : index
    %c0_25 = arith.constant 0 : index
    %c0_26 = arith.constant 0 : index
    %39 = vector.load %arg9[%c1_24, %c0_25, %c0_26] : memref<10x10x8xf32, #tpu.memory_space<vmem>>, vector<8x8x8xf32>
    %40 = vector.shape_cast %39 : vector<8x8x8xf32> to vector<64x8xf32>
    %c0_27 = arith.constant 0 : index
    %c24 = arith.constant 24 : index
    %41 = vector.load %arg8[%c0_27, %c24] : memref<64x72xf32, #tpu.memory_space<vmem>>, vector<64x8xf32>
    tpu.vector_store %arg8[%c0_27, %c24], %40 {strides = array<i32>} : memref<64x72xf32, #tpu.memory_space<vmem>>, vector<64x8xf32>,
    %c1_28 = arith.constant 1 : index
    %c1_29 = arith.constant 1 : index
    %c0_30 = arith.constant 0 : index
    %42 = vector.load %arg9[%c1_28, %c1_29, %c0_30] : memref<10x10x8xf32, #tpu.memory_space<vmem>>, vector<8x8x8xf32>
    %43 = vector.shape_cast %42 : vector<8x8x8xf32> to vector<64x8xf32>
    %c0_31 = arith.constant 0 : index
    %c32 = arith.constant 32 : index
    %44 = vector.load %arg8[%c0_31, %c32] : memref<64x72xf32, #tpu.memory_space<vmem>>, vector<64x8xf32>
    tpu.vector_store %arg8[%c0_31, %c32], %43 {strides = array<i32>} : memref<64x72xf32, #tpu.memory_space<vmem>>, vector<64x8xf32>,
    %c1_32 = arith.constant 1 : index
    %c2_33 = arith.constant 2 : index
    %c0_34 = arith.constant 0 : index
    %45 = vector.load %arg9[%c1_32, %c2_33, %c0_34] : memref<10x10x8xf32, #tpu.memory_space<vmem>>, vector<8x8x8xf32>
    %46 = vector.shape_cast %45 : vector<8x8x8xf32> to vector<64x8xf32>
    %c0_35 = arith.constant 0 : index
    %c40 = arith.constant 40 : index
    %47 = vector.load %arg8[%c0_35, %c40] : memref<64x72xf32, #tpu.memory_space<vmem>>, vector<64x8xf32>
    tpu.vector_store %arg8[%c0_35, %c40], %46 {strides = array<i32>} : memref<64x72xf32, #tpu.memory_space<vmem>>, vector<64x8xf32>,
    %c2_36 = arith.constant 2 : index
    %c0_37 = arith.constant 0 : index
    %c0_38 = arith.constant 0 : index
    %48 = vector.load %arg9[%c2_36, %c0_37, %c0_38] : memref<10x10x8xf32, #tpu.memory_space<vmem>>, vector<8x8x8xf32>
    %49 = vector.shape_cast %48 : vector<8x8x8xf32> to vector<64x8xf32>
    %c0_39 = arith.constant 0 : index
    %c48 = arith.constant 48 : index
    %50 = vector.load %arg8[%c0_39, %c48] : memref<64x72xf32, #tpu.memory_space<vmem>>, vector<64x8xf32>
    tpu.vector_store %arg8[%c0_39, %c48], %49 {strides = array<i32>} : memref<64x72xf32, #tpu.memory_space<vmem>>, vector<64x8xf32>,
    %c2_40 = arith.constant 2 : index
    %c1_41 = arith.constant 1 : index
    %c0_42 = arith.constant 0 : index
    %51 = vector.load %arg9[%c2_40, %c1_41, %c0_42] : memref<10x10x8xf32, #tpu.memory_space<vmem>>, vector<8x8x8xf32>
    %52 = vector.shape_cast %51 : vector<8x8x8xf32> to vector<64x8xf32>
    %c0_43 = arith.constant 0 : index
    %c56 = arith.constant 56 : index
    %53 = vector.load %arg8[%c0_43, %c56] : memref<64x72xf32, #tpu.memory_space<vmem>>, vector<64x8xf32>
    tpu.vector_store %arg8[%c0_43, %c56], %52 {strides = array<i32>} : memref<64x72xf32, #tpu.memory_space<vmem>>, vector<64x8xf32>,
    %c2_44 = arith.constant 2 : index
    %c2_45 = arith.constant 2 : index
    %c0_46 = arith.constant 0 : index
    %54 = vector.load %arg9[%c2_44, %c2_45, %c0_46] : memref<10x10x8xf32, #tpu.memory_space<vmem>>, vector<8x8x8xf32>
    %55 = vector.shape_cast %54 : vector<8x8x8xf32> to vector<64x8xf32>
    %c0_47 = arith.constant 0 : index
    %c64 = arith.constant 64 : index
    %56 = vector.load %arg8[%c0_47, %c64] : memref<64x72xf32, #tpu.memory_space<vmem>>, vector<64x8xf32>
    tpu.vector_store %arg8[%c0_47, %c64], %55 {strides = array<i32>} : memref<64x72xf32, #tpu.memory_space<vmem>>, vector<64x8xf32>,
    %c0_48 = arith.constant 0 : index
    %c0_49 = arith.constant 0 : index
    %57 = vector.load %arg8[%c0_48, %c0_49] : memref<64x72xf32, #tpu.memory_space<vmem>>, vector<64x72xf32>
    %c0_50 = arith.constant 0 : index
    %c0_51 = arith.constant 0 : index
    %58 = vector.load %arg2[%c0_50, %c0_51] : memref<72x128xf32, #tpu.memory_space<vmem>>, vector<72x128xf32>
    %cst_52 = arith.constant dense<0.000000e+00> : vector<64x128xf32>
    %59 = tpu.matmul %57, %58, %cst_52 {dimension_numbers = #tpu.dot_dimension_numbers<[1], [0], [0], [1], [0, 0, 1, 1], [], []>} : vector<64x72xf32>, vector<72x128xf32>, vector<64x128xf32> -> vector<64x128xf32>
    %c0_53 = arith.constant 0 : index
    %c0_54 = arith.constant 0 : index
    %60 = vector.load %arg3[%c0_53, %c0_54] : memref<1x128xf32, #tpu.memory_space<vmem>>, vector<1x128xf32>
    %61 = vector.broadcast %60 : vector<1x128xf32> to vector<64x128xf32>
    %62 = arith.addf %59, %61 : vector<64x128xf32>
    %c0_55 = arith.constant 0 : index
    %c0_56 = arith.constant 0 : index
    %c0_57 = arith.constant 0 : index
    %63 = vector.load %arg6[%c0_55, %c0_56, %c0_57] : memref<1x64x128xf32, #tpu.memory_space<vmem>>, vector<1x64x128xf32>
    %64 = vector.shape_cast %63 : vector<1x64x128xf32> to vector<64x128xf32>
    %65 = vector.shape_cast %62 : vector<64x128xf32> to vector<1x64x128xf32>
    tpu.vector_store %arg6[%c0_55, %c0_56, %c0_57], %65 {strides = array<i32>} : memref<1x64x128xf32, #tpu.memory_space<vmem>>, vector<1x64x128xf32>,
    %cst_58 = arith.constant dense<0.000000e+00> : vector<128xf32>
    %66 = vector.multi_reduction <add>, %62, %cst_58 [0] : vector<64x128xf32> to vector<128xf32>
    %67 = vector.shape_cast %66 : vector<128xf32> to vector<1x128xf32>
    %c0_59 = arith.constant 0 : index
    %c0_60 = arith.constant 0 : index
    %c0_61 = arith.constant 0 : index
    %68 = vector.load %arg7[%c0_59, %c0_60, %c0_61] : memref<1x2x128xf32, #tpu.memory_space<vmem>>, vector<1x1x128xf32>
    %69 = vector.shape_cast %68 : vector<1x1x128xf32> to vector<1x128xf32>
    %70 = vector.shape_cast %67 : vector<1x128xf32> to vector<1x1x128xf32>
    tpu.vector_store %arg7[%c0_59, %c0_60, %c0_61], %70 {strides = array<i32>} : memref<1x2x128xf32, #tpu.memory_space<vmem>>, vector<1x1x128xf32>,
    %cst_62 = arith.constant 1.562500e-02 : f32
    %71 = vector.broadcast %cst_62 : f32 to vector<1x128xf32>
    %72 = arith.mulf %67, %71 : vector<1x128xf32>
    %73 = vector.broadcast %72 : vector<1x128xf32> to vector<64x128xf32>
    %74 = arith.subf %62, %73 : vector<64x128xf32>
    %75 = arith.mulf %74, %74 : vector<64x128xf32>
    %cst_63 = arith.constant dense<0.000000e+00> : vector<128xf32>
    %76 = vector.multi_reduction <add>, %75, %cst_63 [0] : vector<64x128xf32> to vector<128xf32>
    %77 = vector.shape_cast %76 : vector<128xf32> to vector<1x128xf32>
    %c0_64 = arith.constant 0 : index
    %c1_65 = arith.constant 1 : index
    %c0_66 = arith.constant 0 : index
    %78 = vector.load %arg7[%c0_64, %c1_65, %c0_66] : memref<1x2x128xf32, #tpu.memory_space<vmem>>, vector<1x1x128xf32>
    %79 = vector.shape_cast %78 : vector<1x1x128xf32> to vector<1x128xf32>
    %80 = vector.shape_cast %77 : vector<1x128xf32> to vector<1x1x128xf32>
    tpu.vector_store %arg7[%c0_64, %c1_65, %c0_66], %80 {strides = array<i32>} : memref<1x2x128xf32, #tpu.memory_space<vmem>>, vector<1x1x128xf32>,
    return
  }
  func.func @transform_0(%arg0: i32) -> (i32, i32, i32, i32) {
    %c0_i32 = arith.constant 0 : i32
    %c0_i32_0 = arith.constant 0 : i32
    %c0_i32_1 = arith.constant 0 : i32
    %c0_i32_2 = arith.constant 0 : i32
    return %arg0, %c0_i32, %c0_i32_0, %c0_i32_1 : i32, i32, i32, i32
  }
  func.func @transform_1(%arg0: i32) -> (i32, i32) {
    %c0_i32 = arith.constant 0 : i32
    %c0_i32_0 = arith.constant 0 : i32
    %c0_i32_1 = arith.constant 0 : i32
    return %c0_i32, %c0_i32_0 : i32, i32
  }
  func.func @transform_2(%arg0: i32) -> (i32, i32) {
    %c0_i32 = arith.constant 0 : i32
    %c0_i32_0 = arith.constant 0 : i32
    %c0_i32_1 = arith.constant 0 : i32
    return %c0_i32, %c0_i32_0 : i32, i32
  }
  func.func @transform_3(%arg0: i32) -> (i32, i32) {
    %c0_i32 = arith.constant 0 : i32
    %c0_i32_0 = arith.constant 0 : i32
    %c0_i32_1 = arith.constant 0 : i32
    return %c0_i32, %c0_i32_0 : i32, i32
  }
  func.func @transform_4(%arg0: i32) -> (i32, i32) {
    %c0_i32 = arith.constant 0 : i32
    %c0_i32_0 = arith.constant 0 : i32
    %c0_i32_1 = arith.constant 0 : i32
    return %c0_i32, %c0_i32_0 : i32, i32
  }
  func.func @transform_5(%arg0: i32) -> (i32, i32, i32) {
    %c0_i32 = arith.constant 0 : i32
    %c0_i32_0 = arith.constant 0 : i32
    %c0_i32_1 = arith.constant 0 : i32
    return %arg0, %c0_i32, %c0_i32_0 : i32, i32, i32
  }
  func.func @transform_6(%arg0: i32) -> (i32, i32, i32) {
    %c0_i32 = arith.constant 0 : i32
    %c0_i32_0 = arith.constant 0 : i32
    %c0_i32_1 = arith.constant 0 : i32
    return %arg0, %c0_i32, %c0_i32_0 : i32, i32, i32
  }
}

module attributes {stable_mosaic.version = 11 : i64} {
  func.func @kernel(%arg0: i32, %arg1: memref<1x8x8x4xf32, #tpu.memory_space<vmem>>, %arg2: memref<4x128xf32, #tpu.memory_space<vmem>>, %arg3: memref<1x128xf32, #tpu.memory_space<vmem>>, %arg4: memref<1x64x128xf32, #tpu.memory_space<vmem>>, %arg5: memref<1x2x128xf32, #tpu.memory_space<vmem>>, %arg6: memref<64x4xf32, #tpu.memory_space<vmem>>) attributes {dimension_semantics = [#tpu.dimension_semantics<parallel>], iteration_bounds = array<i64: 2>, scalar_prefetch = 0 : i64, scratch_operands = 1 : i64, tpu.core_type = #tpu.core_type<tc>, window_params = [{transform_indices = @transform_0, window_bounds = array<i64: 1, 8, 8, 4>}, {pipeline_mode = #tpu.pipeline_mode<synchronous>, transform_indices = @transform_1, window_bounds = array<i64: 4, 128>}, {pipeline_mode = #tpu.pipeline_mode<synchronous>, transform_indices = @transform_2, window_bounds = array<i64: 1, 128>}, {transform_indices = @transform_3, window_bounds = array<i64: 1, 64, 128>}, {transform_indices = @transform_4, window_bounds = array<i64: 1, 2, 128>}]} {
    %c0 = arith.constant 0 : index
    %c0_0 = arith.constant 0 : index
    %c0_1 = arith.constant 0 : index
    %c0_2 = arith.constant 0 : index
    %0 = vector.load %arg1[%c0, %c0_0, %c0_1, %c0_2] : memref<1x8x8x4xf32, #tpu.memory_space<vmem>>, vector<1x8x8x4xf32>
    %1 = vector.shape_cast %0 : vector<1x8x8x4xf32> to vector<8x8x4xf32>
    %2 = vector.shape_cast %1 : vector<8x8x4xf32> to vector<64x4xf32>
    %c0_3 = arith.constant 0 : index
    %c0_4 = arith.constant 0 : index
    %3 = vector.load %arg6[%c0_3, %c0_4] : memref<64x4xf32, #tpu.memory_space<vmem>>, vector<64x4xf32>
    tpu.vector_store %arg6[%c0_3, %c0_4], %2 {strides = array<i32>} : memref<64x4xf32, #tpu.memory_space<vmem>>, vector<64x4xf32>,
    %c0_5 = arith.constant 0 : index
    %c0_6 = arith.constant 0 : index
    %4 = vector.load %arg6[%c0_5, %c0_6] : memref<64x4xf32, #tpu.memory_space<vmem>>, vector<64x4xf32>
    %c0_7 = arith.constant 0 : index
    %c0_8 = arith.constant 0 : index
    %5 = vector.load %arg2[%c0_7, %c0_8] : memref<4x128xf32, #tpu.memory_space<vmem>>, vector<4x128xf32>
    %cst = arith.constant dense<0.000000e+00> : vector<64x128xf32>
    %6 = tpu.matmul %4, %5, %cst {dimension_numbers = #tpu.dot_dimension_numbers<[1], [0], [0], [1], [0, 0, 1, 1], [], []>} : vector<64x4xf32>, vector<4x128xf32>, vector<64x128xf32> -> vector<64x128xf32>
    %c0_9 = arith.constant 0 : index
    %c0_10 = arith.constant 0 : index
    %7 = vector.load %arg3[%c0_9, %c0_10] : memref<1x128xf32, #tpu.memory_space<vmem>>, vector<1x128xf32>
    %8 = vector.broadcast %7 : vector<1x128xf32> to vector<64x128xf32>
    %9 = arith.addf %6, %8 : vector<64x128xf32>
    %c0_11 = arith.constant 0 : index
    %c0_12 = arith.constant 0 : index
    %c0_13 = arith.constant 0 : index
    %10 = vector.load %arg4[%c0_11, %c0_12, %c0_13] : memref<1x64x128xf32, #tpu.memory_space<vmem>>, vector<1x64x128xf32>
    %11 = vector.shape_cast %10 : vector<1x64x128xf32> to vector<64x128xf32>
    %12 = vector.shape_cast %9 : vector<64x128xf32> to vector<1x64x128xf32>
    tpu.vector_store %arg4[%c0_11, %c0_12, %c0_13], %12 {strides = array<i32>} : memref<1x64x128xf32, #tpu.memory_space<vmem>>, vector<1x64x128xf32>,
    %cst_14 = arith.constant dense<0.000000e+00> : vector<128xf32>
    %13 = vector.multi_reduction <add>, %9, %cst_14 [0] : vector<64x128xf32> to vector<128xf32>
    %14 = vector.shape_cast %13 : vector<128xf32> to vector<1x128xf32>
    %c0_15 = arith.constant 0 : index
    %c0_16 = arith.constant 0 : index
    %c0_17 = arith.constant 0 : index
    %15 = vector.load %arg5[%c0_15, %c0_16, %c0_17] : memref<1x2x128xf32, #tpu.memory_space<vmem>>, vector<1x1x128xf32>
    %16 = vector.shape_cast %15 : vector<1x1x128xf32> to vector<1x128xf32>
    %17 = vector.shape_cast %14 : vector<1x128xf32> to vector<1x1x128xf32>
    tpu.vector_store %arg5[%c0_15, %c0_16, %c0_17], %17 {strides = array<i32>} : memref<1x2x128xf32, #tpu.memory_space<vmem>>, vector<1x1x128xf32>,
    %cst_18 = arith.constant 1.562500e-02 : f32
    %18 = vector.broadcast %cst_18 : f32 to vector<1x128xf32>
    %19 = arith.mulf %14, %18 : vector<1x128xf32>
    %20 = vector.broadcast %19 : vector<1x128xf32> to vector<64x128xf32>
    %21 = arith.subf %9, %20 : vector<64x128xf32>
    %22 = arith.mulf %21, %21 : vector<64x128xf32>
    %cst_19 = arith.constant dense<0.000000e+00> : vector<128xf32>
    %23 = vector.multi_reduction <add>, %22, %cst_19 [0] : vector<64x128xf32> to vector<128xf32>
    %24 = vector.shape_cast %23 : vector<128xf32> to vector<1x128xf32>
    %c0_20 = arith.constant 0 : index
    %c1 = arith.constant 1 : index
    %c0_21 = arith.constant 0 : index
    %25 = vector.load %arg5[%c0_20, %c1, %c0_21] : memref<1x2x128xf32, #tpu.memory_space<vmem>>, vector<1x1x128xf32>
    %26 = vector.shape_cast %25 : vector<1x1x128xf32> to vector<1x128xf32>
    %27 = vector.shape_cast %24 : vector<1x128xf32> to vector<1x1x128xf32>
    tpu.vector_store %arg5[%c0_20, %c1, %c0_21], %27 {strides = array<i32>} : memref<1x2x128xf32, #tpu.memory_space<vmem>>, vector<1x1x128xf32>,
    return
  }
  func.func @transform_0(%arg0: i32) -> (i32, i32, i32, i32) {
    %c0_i32 = arith.constant 0 : i32
    %c0_i32_0 = arith.constant 0 : i32
    %c0_i32_1 = arith.constant 0 : i32
    %c0_i32_2 = arith.constant 0 : i32
    return %arg0, %c0_i32, %c0_i32_0, %c0_i32_1 : i32, i32, i32, i32
  }
  func.func @transform_1(%arg0: i32) -> (i32, i32) {
    %c0_i32 = arith.constant 0 : i32
    %c0_i32_0 = arith.constant 0 : i32
    %c0_i32_1 = arith.constant 0 : i32
    return %c0_i32, %c0_i32_0 : i32, i32
  }
  func.func @transform_2(%arg0: i32) -> (i32, i32) {
    %c0_i32 = arith.constant 0 : i32
    %c0_i32_0 = arith.constant 0 : i32
    %c0_i32_1 = arith.constant 0 : i32
    return %c0_i32, %c0_i32_0 : i32, i32
  }
  func.func @transform_3(%arg0: i32) -> (i32, i32, i32) {
    %c0_i32 = arith.constant 0 : i32
    %c0_i32_0 = arith.constant 0 : i32
    %c0_i32_1 = arith.constant 0 : i32
    return %arg0, %c0_i32, %c0_i32_0 : i32, i32, i32
  }
  func.func @transform_4(%arg0: i32) -> (i32, i32, i32) {
    %c0_i32 = arith.constant 0 : i32
    %c0_i32_0 = arith.constant 0 : i32
    %c0_i32_1 = arith.constant 0 : i32
    return %arg0, %c0_i32, %c0_i32_0 : i32, i32, i32
  }
}

module attributes {stable_mosaic.version = 11 : i64} {
  func.func @_bn_add_relu_kernel(%arg0: i32, %arg1: memref<16x64xf32, #tpu.memory_space<vmem>>, %arg2: memref<1x64xf32, #tpu.memory_space<vmem>>, %arg3: memref<1x64xf32, #tpu.memory_space<vmem>>, %arg4: memref<16x64xf32, #tpu.memory_space<vmem>>, %arg5: memref<1x64xf32, #tpu.memory_space<vmem>>, %arg6: memref<1x64xf32, #tpu.memory_space<vmem>>, %arg7: memref<16x64xf32, #tpu.memory_space<vmem>>) attributes {dimension_semantics = [#tpu.dimension_semantics<parallel>], iteration_bounds = array<i64: 1>, scalar_prefetch = 0 : i64, scratch_operands = 0 : i64, tpu.core_type = #tpu.core_type<tc>, window_params = [{transform_indices = @transform_0, window_bounds = array<i64: 16, 64>}, {pipeline_mode = #tpu.pipeline_mode<synchronous>, transform_indices = @transform_1, window_bounds = array<i64: 1, 64>}, {pipeline_mode = #tpu.pipeline_mode<synchronous>, transform_indices = @transform_2, window_bounds = array<i64: 1, 64>}, {transform_indices = @transform_3, window_bounds = array<i64: 16, 64>}, {pipeline_mode = #tpu.pipeline_mode<synchronous>, transform_indices = @transform_4, window_bounds = array<i64: 1, 64>}, {pipeline_mode = #tpu.pipeline_mode<synchronous>, transform_indices = @transform_5, window_bounds = array<i64: 1, 64>}, {transform_indices = @transform_6, window_bounds = array<i64: 16, 64>}]} {
    %c0 = arith.constant 0 : index
    %c0_0 = arith.constant 0 : index
    %0 = vector.load %arg1[%c0, %c0_0] : memref<16x64xf32, #tpu.memory_space<vmem>>, vector<16x64xf32>
    %c0_1 = arith.constant 0 : index
    %c0_2 = arith.constant 0 : index
    %1 = vector.load %arg2[%c0_1, %c0_2] : memref<1x64xf32, #tpu.memory_space<vmem>>, vector<1x64xf32>
    %2 = vector.broadcast %1 : vector<1x64xf32> to vector<16x64xf32>
    %3 = arith.mulf %0, %2 : vector<16x64xf32>
    %c0_3 = arith.constant 0 : index
    %c0_4 = arith.constant 0 : index
    %4 = vector.load %arg3[%c0_3, %c0_4] : memref<1x64xf32, #tpu.memory_space<vmem>>, vector<1x64xf32>
    %5 = vector.broadcast %4 : vector<1x64xf32> to vector<16x64xf32>
    %6 = arith.addf %3, %5 : vector<16x64xf32>
    %c0_5 = arith.constant 0 : index
    %c0_6 = arith.constant 0 : index
    %7 = vector.load %arg4[%c0_5, %c0_6] : memref<16x64xf32, #tpu.memory_space<vmem>>, vector<16x64xf32>
    %c0_7 = arith.constant 0 : index
    %c0_8 = arith.constant 0 : index
    %8 = vector.load %arg5[%c0_7, %c0_8] : memref<1x64xf32, #tpu.memory_space<vmem>>, vector<1x64xf32>
    %9 = vector.broadcast %8 : vector<1x64xf32> to vector<16x64xf32>
    %10 = arith.mulf %7, %9 : vector<16x64xf32>
    %11 = arith.addf %6, %10 : vector<16x64xf32>
    %c0_9 = arith.constant 0 : index
    %c0_10 = arith.constant 0 : index
    %12 = vector.load %arg6[%c0_9, %c0_10] : memref<1x64xf32, #tpu.memory_space<vmem>>, vector<1x64xf32>
    %13 = vector.broadcast %12 : vector<1x64xf32> to vector<16x64xf32>
    %14 = arith.addf %11, %13 : vector<16x64xf32>
    %cst = arith.constant 0.000000e+00 : f32
    %15 = vector.broadcast %cst : f32 to vector<16x64xf32>
    %16 = arith.maximumf %14, %15 : vector<16x64xf32>
    %c0_11 = arith.constant 0 : index
    %c0_12 = arith.constant 0 : index
    %17 = vector.load %arg7[%c0_11, %c0_12] : memref<16x64xf32, #tpu.memory_space<vmem>>, vector<16x64xf32>
    tpu.vector_store %arg7[%c0_11, %c0_12], %16 {strides = array<i32>} : memref<16x64xf32, #tpu.memory_space<vmem>>, vector<16x64xf32>,
    return
  }
  func.func @transform_0(%arg0: i32) -> (i32, i32) {
    %c0_i32 = arith.constant 0 : i32
    %c0_i32_0 = arith.constant 0 : i32
    return %arg0, %c0_i32 : i32, i32
  }
  func.func @transform_1(%arg0: i32) -> (i32, i32) {
    %c0_i32 = arith.constant 0 : i32
    %c0_i32_0 = arith.constant 0 : i32
    %c0_i32_1 = arith.constant 0 : i32
    return %c0_i32, %c0_i32_0 : i32, i32
  }
  func.func @transform_2(%arg0: i32) -> (i32, i32) {
    %c0_i32 = arith.constant 0 : i32
    %c0_i32_0 = arith.constant 0 : i32
    %c0_i32_1 = arith.constant 0 : i32
    return %c0_i32, %c0_i32_0 : i32, i32
  }
  func.func @transform_3(%arg0: i32) -> (i32, i32) {
    %c0_i32 = arith.constant 0 : i32
    %c0_i32_0 = arith.constant 0 : i32
    return %arg0, %c0_i32 : i32, i32
  }
  func.func @transform_4(%arg0: i32) -> (i32, i32) {
    %c0_i32 = arith.constant 0 : i32
    %c0_i32_0 = arith.constant 0 : i32
    %c0_i32_1 = arith.constant 0 : i32
    return %c0_i32, %c0_i32_0 : i32, i32
  }
  func.func @transform_5(%arg0: i32) -> (i32, i32) {
    %c0_i32 = arith.constant 0 : i32
    %c0_i32_0 = arith.constant 0 : i32
    %c0_i32_1 = arith.constant 0 : i32
    return %c0_i32, %c0_i32_0 : i32, i32
  }
  func.func @transform_6(%arg0: i32) -> (i32, i32) {
    %c0_i32 = arith.constant 0 : i32
    %c0_i32_0 = arith.constant 0 : i32
    return %arg0, %c0_i32 : i32, i32
  }
}

</mosaic_0001>

<llo_original>
// kernel: tile.23
$region0: #{tile.23}
  #allocation0 [shape = 's32[1]{0}', space=sflag, size = 0x4, scoped, tag = 'scoped memory for tile.23']
  %s0 = inlined_call_operand.vmem [shape: f32[8], index: 0, kind: input, shape index: {}]
  %s1 = inlined_call_operand.vmem [shape: f32[8,8], index: 1, kind: output, shape index: {}]
  // Predicated region
  $region2: #{tile.23} parent=0 // pred_check
    _
  $region3: #{tile.23} parent=0 // pred_check_branch
    %3 = sbr.rel (0) target = $region5
  $region4: #{tile.23} parent=0 // pred_region
    _
  $region5: #{tile.23} parent=0 // pred_fallthru
    _
  %v4 = vld [vmem:[%s0] ss:$0 sm:$0xff]
  %5 = vst [vmem:[%s1] sm:$0xff] %v4

// kernel: tile.36
$region0: #{tile.36}
  %s0 = inlined_call_operand.vmem [shape: f32[8,8], index: 0, kind: input, shape index: {}]
  %s1 = inlined_call_operand.vmem [shape: f32[1,64], index: 1, kind: output, shape index: {}]
  $region1: #{tile.36} parent=0
    #allocation0 [shape = 'u8[4096]{0}', space=vmem, size = 0x1000, scoped, tag = 'scoped mem for output reshape']
    %v2 = vld [vmem:[%s0] sm:$0x1]
    %vm3 = vcmask 64512
    %4 = vst.msk [vmem:[#allocation0] sm:$0x1] %vm3, %v2
    %s5 = scalar_lea.vmem %s0, 7
    %v6 = vld [vmem:[%s5] sm:$0x1]
    %7 = vrot.lane.b32.xlu0 %v6, 56
    %v8 = vpop.permute.xlu0 %7
    %vm9 = vcmask 523712
    %10 = vst.msk [vmem:[#allocation0] sm:$0x1] %vm9, %v8
    %s11 = scalar_lea.vmem %s0, 6
    %v12 = vld [vmem:[%s11] sm:$0x1]
    %13 = vrot.lane.b32.xlu0 %v12, 48
    %v14 = vpop.permute.xlu0 %13
    %vm15 = vcmask 458112
    %16 = vst.msk [vmem:[#allocation0] sm:$0x1] %vm15, %v14
    %s17 = scalar_lea.vmem %s0, 5
    %v18 = vld [vmem:[%s17] sm:$0x1]
    %19 = vrot.lane.b32.xlu0 %v18, 40
    %v20 = vpop.permute.xlu0 %19
    %vm21 = vcmask 392512
    %22 = vst.msk [vmem:[#allocation0] sm:$0x1] %vm21, %v20
    %s23 = scalar_lea.vmem %s0, 4
    %v24 = vld [vmem:[%s23] sm:$0x1]
    %25 = vrot.lane.b32.xlu0 %v24, 32
    %v26 = vpop.permute.xlu0 %25
    %vm27 = vcmask 326912
    %28 = vst.msk [vmem:[#allocation0] sm:$0x1] %vm27, %v26
    %s29 = scalar_lea.vmem %s0, 3
    %v30 = vld [vmem:[%s29] sm:$0x1]
    %31 = vrot.lane.b32.xlu0 %v30, 24
    %v32 = vpop.permute.xlu0 %31
    %vm33 = vcmask 261312
    %34 = vst.msk [vmem:[#allocation0] sm:$0x1] %vm33, %v32
    %s35 = scalar_lea.vmem %s0, 2
    %v36 = vld [vmem:[%s35] sm:$0x1]
    %37 = vrot.lane.b32.xlu0 %v36, 16
    %v38 = vpop.permute.xlu0 %37
    %vm39 = vcmask 195712
    %40 = vst.msk [vmem:[#allocation0] sm:$0x1] %vm39, %v38
    %s41 = scalar_lea.vmem %s0, 1
    %v42 = vld [vmem:[%s41] sm:$0x1]
    %43 = vrot.lane.b32.xlu0 %v42, 8
    %v44 = vpop.permute.xlu0 %43
    %vm45 = vcmask 130112
    %46 = vst.msk [vmem:[#allocation0] sm:$0x1] %vm45, %v44
    %s48 = sshllo.u32 0, 1
    %v50 = vld [vmem:[#allocation0] sm:%s48]
    %s51 = sshllo.u32 0, 1
    %52 = vst [vmem:[%s1] sm:%s51] %v50

// kernel: residual_block_forward.6
$region0: #{residual_block_forward.6}
  #allocation0 [shape = 'u32[]', space=smem, size = 0x4, offset = 0x4, fixed_abs, tag = 'smem constant byte address 0x4 - core index']
  #allocation1 [shape = 'u32[144,128]{1,0:T(1,128)}', space=vmem, size = 0x12000, scoped, tag = 'internal scratch']
  #allocation2 [shape = 'f32[64,4]{1,0:T(8,128)}', space=vmem, size = 0x8000, scoped, tag = 'scratch operand']
  %s0 = inlined_call_operand.vmem [shape: f32[2,8,8,4], index: 0, kind: input, shape index: {}]
  %s1 = inlined_call_operand.vmem [shape: f32[4,128], index: 1, kind: input, shape index: {}]
  %s2 = inlined_call_operand.vmem [shape: f32[1,128], index: 2, kind: input, shape index: {}]
  %s3 = inlined_call_operand.vmem [shape: f32[2,64,128], index: 3, kind: output, shape index: {0}]
  %s4 = inlined_call_operand.vmem [shape: f32[2,2,128], index: 4, kind: output, shape index: {1}]
  %5 = xla_tuple %s3, %s4
  %s6 = sld [smem:[#allocation0]]
  $region53: #{residual_block_forward.6} parent=0
    _
  %s8 = ssub.s32 1, %s6
  %s9 = scalar_select 0, %s8, %s6
  loop: start=0, step=1, limit=4
  $region2: #{residual_block_forward.6} parent=0 // loop_pre_header
    _
  $region3: #{residual_block_forward.6} parent=0 // loop_header
    %s11 = sphi 0, %s15
    %p12 = scmp.ge.s32.totalorder %s11, 4
    %s21 = sphi 0, %s23
    %s24 = sphi 0, %s21
    %s25 = sphi 0, %s24
    %s41 = sphi 0, %s25
    %s45 = sphi 0, %s45
    %s47 = sphi 0, %s45
    %s48 = sphi 0, %s47
    %s62 = sphi 0, %s48
    %s66 = sphi 0, %s66
    %s68 = sphi 0, %s66
    %s69 = sphi 0, %s68
    %s83 = sphi 0, %s69
    %s89 = sphi 0, %s91
    %s92 = sphi 0, %s89
    %s93 = sphi 0, %s92
    %s109 = sphi 0, %s93
    %s115 = sphi 0, %s117
    %s118 = sphi 0, %s115
    %s119 = sphi 0, %s118
    %s135 = sphi 0, %s119
  $region4: #{residual_block_forward.6} parent=0 // loop_header_branch
    %14 = sbr.rel (%p12) target = $region8
  $region5: #{residual_block_forward.6} parent=0 // loop_body
    %s16 = ssub.s32 %s11, 1
    %s17 = ssub.s32 %s11, 2
    %s18 = sadd.s32 %s11, 1
    %s19 = ssub.s32 %s11, %s18
    %p20 = scmp.eq.s32.totalorder %s19, 0
    %s22 = sadd.s32 %s21, 1
    %s23 = scalar_select %p20, %s21, %s22
    %p26 = pneg %p20
    %p27 = scmp.eq.s32.totalorder %s11, 1
    %p28 = por %p26, %p27
    %p29 = scmp.ne.s32.totalorder %s21, %s24
    %p30 = scmp.eq.s32.totalorder %s11, 0
    %p31 = por %p29, %p30
    %p32 = scmp.ne.s32.totalorder %s21, %s24
    %p33 = scmp.eq.s32.totalorder %s16, 1
    %p34 = por %p32, %p33
    %p35 = scmp.ne.s32.totalorder %s24, %s25
    %p36 = scmp.eq.s32.totalorder %s16, 0
    %p37 = por %p35, %p36
    %p38 = scmp.ne.s32.totalorder %s24, %s25
    %p39 = scmp.eq.s32.totalorder %s17, 1
    %p40 = por %p38, %p39
    %p42 = scmp.ne.s32.totalorder %s25, %s41
    %p43 = scmp.eq.s32.totalorder %s17, 0
    %p44 = por %p42, %p43
    %s46 = sadd.s32 %s45, 1
    %p49 = scmp.eq.s32.totalorder %s11, 1
    %p50 = scmp.ne.s32.totalorder %s45, %s47
    %p51 = scmp.eq.s32.totalorder %s11, 0
    %p52 = por %p50, %p51
    %p53 = scmp.ne.s32.totalorder %s45, %s47
    %p54 = scmp.eq.s32.totalorder %s16, 1
    %p55 = por %p53, %p54
    %p56 = scmp.ne.s32.totalorder %s47, %s48
    %p57 = scmp.eq.s32.totalorder %s16, 0
    %p58 = por %p56, %p57
    %p59 = scmp.ne.s32.totalorder %s47, %s48
    %p60 = scmp.eq.s32.totalorder %s17, 1
    %p61 = por %p59, %p60
    %p63 = scmp.ne.s32.totalorder %s48, %s62
    %p64 = scmp.eq.s32.totalorder %s17, 0
    %p65 = por %p63, %p64
    %s67 = sadd.s32 %s66, 1
    %p70 = scmp.eq.s32.totalorder %s11, 1
    %p71 = scmp.ne.s32.totalorder %s66, %s68
    %p72 = scmp.eq.s32.totalorder %s11, 0
    %p73 = por %p71, %p72
    %p74 = scmp.ne.s32.totalorder %s66, %s68
    %p75 = scmp.eq.s32.totalorder %s16, 1
    %p76 = por %p74, %p75
    %p77 = scmp.ne.s32.totalorder %s68, %s69
    %p78 = scmp.eq.s32.totalorder %s16, 0
    %p79 = por %p77, %p78
    %p80 = scmp.ne.s32.totalorder %s68, %s69
    %p81 = scmp.eq.s32.totalorder %s17, 1
    %p82 = por %p80, %p81
    %p84 = scmp.ne.s32.totalorder %s69, %s83
    %p85 = scmp.eq.s32.totalorder %s17, 0
    %p86 = por %p84, %p85
    %s87 = ssub.s32 %s11, %s18
    %p88 = scmp.eq.s32.totalorder %s87, 0
    %s90 = sadd.s32 %s89, 1
    %s91 = scalar_select %p88, %s89, %s90
    %p94 = pneg %p88
    %p95 = scmp.eq.s32.totalorder %s11, 1
    %p96 = por %p94, %p95
    %p97 = scmp.ne.s32.totalorder %s89, %s92
    %p98 = scmp.eq.s32.totalorder %s11, 0
    %p99 = por %p97, %p98
    %p100 = scmp.ne.s32.totalorder %s89, %s92
    %p101 = scmp.eq.s32.totalorder %s16, 1
    %p102 = por %p100, %p101
    %p103 = scmp.ne.s32.totalorder %s92, %s93
    %p104 = scmp.eq.s32.totalorder %s16, 0
    %p105 = por %p103, %p104
    %p106 = scmp.ne.s32.totalorder %s92, %s93
    %p107 = scmp.eq.s32.totalorder %s17, 1
    %p108 = por %p106, %p107
    %p110 = scmp.ne.s32.totalorder %s93, %s109
    %p111 = scmp.eq.s32.totalorder %s17, 0
    %p112 = por %p110, %p111
    %s113 = ssub.s32 %s11, %s18
    %p114 = scmp.eq.s32.totalorder %s113, 0
    %s116 = sadd.s32 %s115, 1
    %s117 = scalar_select %p114, %s115, %s116
    %p120 = pneg %p114
    %p121 = scmp.eq.s32.totalorder %s11, 1
    %p122 = por %p120, %p121
    %p123 = scmp.ne.s32.totalorder %s115, %s118
    %p124 = scmp.eq.s32.totalorder %s11, 0
    %p125 = por %p123, %p124
    %p126 = scmp.ne.s32.totalorder %s115, %s118
    %p127 = scmp.eq.s32.totalorder %s16, 1
    %p128 = por %p126, %p127
    %p129 = scmp.ne.s32.totalorder %s118, %s119
    %p130 = scmp.eq.s32.totalorder %s16, 0
    %p131 = por %p129, %p130
    %p132 = scmp.ne.s32.totalorder %s118, %s119
    %p133 = scmp.eq.s32.totalorder %s17, 1
    %p134 = por %p132, %p133
    %p136 = scmp.ne.s32.totalorder %s119, %s135
    %p137 = scmp.eq.s32.totalorder %s17, 0
    %p138 = por %p136, %p137
    %p139 = scmp.le.s32.totalorder 1, %s11
    %p140 = scmp.lt.s32.totalorder %s11, 3
    %p141 = pnand %p139, %p140
    %p142 = pneg %p141
    // Predicated region
    $region9: #{residual_block_forward.6} parent=5 // pred_check
      _
    $region10: #{residual_block_forward.6} parent=5 // pred_check_branch
      %144 = sbr.rel (%p141) target = $region12
    $region11: #{residual_block_forward.6} parent=5 // pred_region
      %s145 = ssub.s32 %s11, 1
      // Predicated region
      $region13: #{residual_block_forward.6} parent=11 // pred_check
        %p146 = pneg %p58
      $region14: #{residual_block_forward.6} parent=11 // pred_check_branch
        %148 = sbr.rel (%p146) target = $region16
      $region15: #{residual_block_forward.6} parent=11 // pred_region
        _
      $region16: #{residual_block_forward.6} parent=11 // pred_fallthru
        _
      // Predicated region
      $region17: #{residual_block_forward.6} parent=11 // pred_check
        %p149 = pneg %p79
      $region18: #{residual_block_forward.6} parent=11 // pred_check_branch
        %151 = sbr.rel (%p149) target = $region20
      $region19: #{residual_block_forward.6} parent=11 // pred_region
        _
      $region20: #{residual_block_forward.6} parent=11 // pred_fallthru
        _
    $region12: #{residual_block_forward.6} parent=5 // pred_fallthru
      _
    %p152 = scmp.lt.s32.totalorder %s11, 2
    // Predicated region
    $region21: #{residual_block_forward.6} parent=5 // pred_check
      %p153 = pneg %p152
    $region22: #{residual_block_forward.6} parent=5 // pred_check_branch
      %155 = sbr.rel (%p153) target = $region24
    $region23: #{residual_block_forward.6} parent=5 // pred_region
      // Predicated region
      $region25: #{residual_block_forward.6} parent=23 // pred_check
        %p156 = pneg %p31
      $region26: #{residual_block_forward.6} parent=23 // pred_check_branch
        %158 = sbr.rel (%p156) target = $region28
      $region27: #{residual_block_forward.6} parent=23 // pred_region
        %p159 = scmp.lt.s32.totalorder %s11, 1
        %s160 = scalar_select %p159, %s11, 1
        %s161 = smul.addr %s160, 8
        %s162 = smul.addr %s161, 8
        %s163 = scalar_lea.vmem %s0, %s162
      $region28: #{residual_block_forward.6} parent=23 // pred_fallthru
        _
    $region24: #{residual_block_forward.6} parent=5 // pred_fallthru
      _
    %p164 = scmp.le.s32.totalorder 1, %s11
    %p165 = scmp.lt.s32.totalorder %s11, 3
    %p166 = pnand %p164, %p165
    %p167 = pneg %p166
    // Predicated region
    $region29: #{residual_block_forward.6} parent=5 // pred_check
      _
    $region30: #{residual_block_forward.6} parent=5 // pred_check_branch
      %169 = sbr.rel (%p166) target = $region32
    $region31: #{residual_block_forward.6} parent=5 // pred_region
      %s170 = ssub.s32 %s11, 1
      %p171 = scmp.lt.s32.totalorder %s16, 1
      %s172 = scalar_select %p171, %s16, 1
      %s173 = smul.addr %s172, 8
      %s174 = smul.addr %s173, 8
      %s175 = scalar_lea.vmem %s0, %s174
      %p176 = pneg %p37
      %p177 = pneg %p34
      %p178 = pneg %p58
      %p179 = pneg %p55
      %p180 = pneg %p79
      %p181 = pneg %p76
      %p182 = pneg %p105
      %p183 = pneg %p102
      %p184 = scmp.lt.s32.totalorder %s16, 1
      %s185 = scalar_select %p184, %s16, 1
      %s186 = smul.addr %s185, 8
      %s187 = smul.addr %s186, 8
      %s188 = scalar_lea.vmem %s3, %s187
      %p189 = pneg %p131
      %p190 = pneg %p128
      %p191 = scmp.lt.s32.totalorder %s16, 1
      %s192 = scalar_select %p191, %s16, 1
      %s193 = smul.addr %s192, 2
      %s194 = scalar_lea.vmem %s4, %s193
      %p195 = scmp.lt.s32.totalorder %s16, 1
      %s196 = scalar_select %p195, %s16, 1
      %s197 = smul.addr %s196, 8
      %s198 = smul.addr %s197, 8
      %s199 = scalar_lea.vmem %s0, %s198
      %p200 = scmp.lt.s32.totalorder %s16, 1
      %s201 = scalar_select %p200, %s16, 1
      %s202 = smul.addr %s201, 8
      %s203 = smul.addr %s202, 8
      %s204 = scalar_lea.vmem %s3, %s203
      %p205 = scmp.lt.s32.totalorder %s16, 1
      %s206 = scalar_select %p205, %s16, 1
      %s207 = smul.addr %s206, 2
      %s208 = scalar_lea.vmem %s4, %s207
      %v209 = vld [vmem:[%s199] sm:$0xff]
      %v210 = vld [vmem:[%s199 + $0x8] sm:$0xff]
      %v211 = vld [vmem:[%s199 + $0x10] sm:$0xff]
      %v212 = vld [vmem:[%s199 + $0x18] sm:$0xff]
      %v213 = vld [vmem:[%s199 + $0x20] sm:$0xff]
      %v214 = vld [vmem:[%s199 + $0x28] sm:$0xff]
      %v215 = vld [vmem:[%s199 + $0x30] sm:$0xff]
      %v216 = vld [vmem:[%s199 + $0x38] sm:$0xff]
      %vm217 = vcmask 31744
      %218 = vst.msk [vmem:[#allocation2] sm:$0xff] %vm217, %v209
      %219 = vst.msk [vmem:[#allocation2 + $0x8] sm:$0xff] %vm217, %v210
      %220 = vst.msk [vmem:[#allocation2 + $0x10] sm:$0xff] %vm217, %v211
      %221 = vst.msk [vmem:[#allocation2 + $0x18] sm:$0xff] %vm217, %v212
      %222 = vst.msk [vmem:[#allocation2 + $0x20] sm:$0xff] %vm217, %v213
      %223 = vst.msk [vmem:[#allocation2 + $0x28] sm:$0xff] %vm217, %v214
      %224 = vst.msk [vmem:[#allocation2 + $0x30] sm:$0xff] %vm217, %v215
      %225 = vst.msk [vmem:[#allocation2 + $0x38] sm:$0xff] %vm217, %v216
      %v226 = vld [vmem:[#allocation2] sm:$0xff]
      %v227 = vld [vmem:[#allocation2 + $0x8] sm:$0xff]
      %v228 = vld [vmem:[#allocation2 + $0x10] sm:$0xff]
      %v229 = vld [vmem:[#allocation2 + $0x18] sm:$0xff]
      %v230 = vld [vmem:[#allocation2 + $0x20] sm:$0xff]
      %v231 = vld [vmem:[#allocation2 + $0x28] sm:$0xff]
      %v232 = vld [vmem:[#allocation2 + $0x30] sm:$0xff]
      %v233 = vld [vmem:[#allocation2 + $0x38] sm:$0xff]
      %v234 = vld [vmem:[%s1] sm:$0xf]
      %v235 = vld [vmem:[%s2] sm:$0x1]
      %v237 = vlaneseq
      %v238 = vshrl.u32 %v237, 7
      %v239 = vsub.s32 0, %v238
      %v240 = vrot.slane %v235, %v239
      %v243 = vsel %vm217, %v226, 0
      %v246 = vsel %vm217, %v227, 0
      %v249 = vsel %vm217, %v228, 0
      %v252 = vsel %vm217, %v229, 0
      %v255 = vsel %vm217, %v230, 0
      %v258 = vsel %vm217, %v231, 0
      %v261 = vsel %vm217, %v232, 0
      %v264 = vsel %vm217, %v233, 0
      %vm266 = vcmask 1043456
      %v268 = vsel %vm266, %v234, 0
      %270 = vmatprep.subr.mxu0 0.0
      %271 = vmatpush1.msra.mxu0 %v268
      %272 = vmatprep.subr.mxu0 0.0
      %273 = vmatpush1.msra.mxu0 0.0
      %274 = vmatprep.subr.mxu0 0.0
      %275 = vmatpush1.msra.mxu0 0.0
      %276 = vmatprep.subr.mxu0 0.0
      %277 = vmatpush1.msra.mxu0 0.0
      %278 = vmatprep.subr.mxu0 0.0
      %279 = vmatpush1.msra.mxu0 0.0
      %280 = vmatprep.subr.mxu0 0.0
      %281 = vmatpush1.msra.mxu0 0.0
      %282 = vmatprep.subr.mxu0 0.0
      %283 = vmatpush1.msra.mxu0 0.0
      %284 = vmatprep.subr.mxu0 0.0
      %285 = vmatpush1.msra.mxu0 0.0
      %286 = vmatprep.subr.mxu0 0.0
      %287 = vmatpush1.msra.mxu0 0.0
      %288 = vmatprep.subr.mxu0 0.0
      %289 = vmatpush1.msra.mxu0 0.0
      %290 = vmatprep.subr.mxu0 0.0
      %291 = vmatpush1.msra.mxu0 0.0
      %292 = vmatprep.subr.mxu0 0.0
      %293 = vmatpush1.msra.mxu0 0.0
      %294 = vmatprep.subr.mxu0 0.0
      %295 = vmatpush1.msra.mxu0 0.0
      %296 = vmatprep.subr.mxu0 0.0
      %297 = vmatpush1.msra.mxu0 0.0
      %298 = vmatprep.subr.mxu0 0.0
      %299 = vmatpush1.msra.mxu0 0.0
      %300 = vmatprep.subr.mxu0 0.0
      %301 = vmatpush1.msra.mxu0 0.0
      %302 = vmatprep.subr.mxu0 0.0
      %303 = vmatpush1.msra.mxu0 0.0
      %304 = vmatprep.subr.mxu0 0.0
      %305 = vmatpush1.msra.mxu0 0.0
      %306 = vmatprep.subr.mxu0 0.0
      %307 = vmatpush1.msra.mxu0 0.0
      %308 = vmatprep.subr.mxu0 0.0
      %309 = vmatpush1.msra.mxu0 0.0
      %310 = vmatprep.subr.mxu0 0.0
      %311 = vmatpush1.msra.mxu0 0.0
      %312 = vmatprep.subr.mxu0 0.0
      %313 = vmatpush1.msra.mxu0 0.0
      %314 = vmatprep.subr.mxu0 0.0
      %315 = vmatpush1.msra.mxu0 0.0
      %316 = vmatprep.subr.mxu0 0.0
      %317 = vmatpush1.msra.mxu0 0.0
      %318 = vmatprep.subr.mxu0 0.0
      %319 = vmatpush1.msra.mxu0 0.0
      %320 = vmatprep.subr.mxu0 0.0
      %321 = vmatpush1.msra.mxu0 0.0
      %322 = vmatprep.subr.mxu0 0.0
      %323 = vmatpush1.msra.mxu0 0.0
      %324 = vmatprep.subr.mxu0 0.0
      %325 = vmatpush1.msra.mxu0 0.0
      %326 = vmatprep.subr.mxu0 0.0
      %327 = vmatpush1.msra.mxu0 0.0
      %328 = vmatprep.subr.mxu0 0.0
      %329 = vmatpush1.msra.mxu0 0.0
      %330 = vmatprep.subr.mxu0 0.0
      %331 = vmatpush1.msra.mxu0 0.0
      %332 = vmatprep.subr.mxu0 0.0
      %333 = vmatpush1.msra.mxu0 0.0
      %334 = vmatprep.mubr.f32.mxu0 0.0
      %335 = vmatmul.mubr.f32.gmra.mrb[0].mxu0 %v243
      %v336 = vpop.f32.mrb[0].mxu0
      %v337 = vadd.f32 %v240, %v336
      %v338 = vpop.f32.mrb[0].mxu0
      %339 = vmatprep.mubr.f32.mxu0 0.0
      %340 = vmatmul.mubr.f32.gmra.mrb[0].mxu0 %v246
      %v341 = vpop.f32.mrb[0].mxu0
      %v342 = vadd.f32 %v240, %v341
      %v343 = vpop.f32.mrb[0].mxu0
      %344 = vmatprep.mubr.f32.mxu0 0.0
      %345 = vmatmul.mubr.f32.gmra.mrb[0].mxu0 %v249
      %v346 = vpop.f32.mrb[0].mxu0
      %v347 = vadd.f32 %v240, %v346
      %v348 = vpop.f32.mrb[0].mxu0
      %349 = vmatprep.mubr.f32.mxu0 0.0
      %350 = vmatmul.mubr.f32.gmra.mrb[0].mxu0 %v252
      %v351 = vpop.f32.mrb[0].mxu0
      %v352 = vadd.f32 %v240, %v351
      %v353 = vpop.f32.mrb[0].mxu0
      %354 = vmatprep.mubr.f32.mxu0 0.0
      %355 = vmatmul.mubr.f32.gmra.mrb[0].mxu0 %v255
      %v356 = vpop.f32.mrb[0].mxu0
      %v357 = vadd.f32 %v240, %v356
      %v358 = vpop.f32.mrb[0].mxu0
      %359 = vmatprep.mubr.f32.mxu0 0.0
      %360 = vmatmul.mubr.f32.gmra.mrb[0].mxu0 %v258
      %v361 = vpop.f32.mrb[0].mxu0
      %v362 = vadd.f32 %v240, %v361
      %v363 = vpop.f32.mrb[0].mxu0
      %364 = vmatprep.mubr.f32.mxu0 0.0
      %365 = vmatmul.mubr.f32.gmra.mrb[0].mxu0 %v261
      %v366 = vpop.f32.mrb[0].mxu0
      %v367 = vadd.f32 %v240, %v366
      %v368 = vpop.f32.mrb[0].mxu0
      %369 = vmatprep.mubr.f32.mxu0 0.0
      %370 = vmatmul.mubr.f32.gmra.mrb[0].mxu0 %v264
      %v371 = vpop.f32.mrb[0].mxu0
      %v372 = vadd.f32 %v240, %v371
      %v373 = vpop.f32.mrb[0].mxu0
      %374 = vdwg.mxu0
      %375 = vst [vmem:[%s204] sm:$0xff] %v337
      %376 = vst [vmem:[%s204 + $0x8] sm:$0xff] %v342
      %377 = vst [vmem:[%s204 + $0x10] sm:$0xff] %v347
      %378 = vst [vmem:[%s204 + $0x18] sm:$0xff] %v352
      %379 = vst [vmem:[%s204 + $0x20] sm:$0xff] %v357
      %380 = vst [vmem:[%s204 + $0x28] sm:$0xff] %v362
      %381 = vst [vmem:[%s204 + $0x30] sm:$0xff] %v367
      %382 = vst [vmem:[%s204 + $0x38] sm:$0xff] %v372
      %v383 = vadd.f32 %v337, %v342
      %v384 = vadd.f32 %v383, %v347
      %v385 = vadd.f32 %v384, %v352
      %v386 = vadd.f32 %v385, %v357
      %v387 = vadd.f32 %v386, %v362
      %v388 = vadd.f32 %v387, %v367
      %v389 = vadd.f32 %v388, %v372
      %v390 = vrot.slane %v389, 4
      %v391 = vadd.f32 %v389, %v390
      %v392 = vrot.slane %v391, 2
      %v393 = vadd.f32 %v391, %v392
      %v394 = vrot.slane %v393, 1
      %v395 = vadd.f32 %v393, %v394
      %396 = vst [vmem:[%s208] sm:$0x1] %v395
      %v397 = vmul.f32 %v395, 0.015625
      %v398 = vsub.f32 %v337, %v397
      %v399 = vsub.f32 %v342, %v397
      %v400 = vsub.f32 %v347, %v397
      %v401 = vsub.f32 %v352, %v397
      %v402 = vsub.f32 %v357, %v397
      %v403 = vsub.f32 %v362, %v397
      %v404 = vsub.f32 %v367, %v397
      %v405 = vsub.f32 %v372, %v397
      %v406 = vmul.f32 %v398, %v398
      %v407 = vmul.f32 %v399, %v399
      %v408 = vmul.f32 %v400, %v400
      %v409 = vmul.f32 %v401, %v401
      %v410 = vmul.f32 %v402, %v402
      %v411 = vmul.f32 %v403, %v403
      %v412 = vmul.f32 %v404, %v404
      %v413 = vmul.f32 %v405, %v405
      %v414 = vadd.f32 %v406, %v407
      %v415 = vadd.f32 %v414, %v408
      %v416 = vadd.f32 %v415, %v409
      %v417 = vadd.f32 %v416, %v410
      %v418 = vadd.f32 %v417, %v411
      %v419 = vadd.f32 %v418, %v412
      %v420 = vadd.f32 %v419, %v413
      %v421 = vrot.slane %v420, 4
      %v422 = vadd.f32 %v420, %v421
      %v423 = vrot.slane %v422, 2
      %v424 = vadd.f32 %v422, %v423
      %v425 = vrot.slane %v424, 1
      %v426 = vadd.f32 %v424, %v425
      %427 = vst [vmem:[%s208 + $0x1] sm:$0x1] %v426
      %p428 = scmp.lt.s32.totalorder %s16, 1
      %s429 = scalar_select %p428, %s16, 1
      %s430 = smul.addr %s429, 8
      %s431 = smul.addr %s430, 8
      %s432 = scalar_lea.vmem %s3, %s431
      %p433 = scmp.lt.s32.totalorder %s16, 1
      %s434 = scalar_select %p433, %s16, 1
      %s435 = smul.addr %s434, 2
      %s436 = scalar_lea.vmem %s4, %s435
      // Predicated region
      $region33: #{residual_block_forward.6} parent=31 // pred_check
        %p437 = pneg %p102
      $region34: #{residual_block_forward.6} parent=31 // pred_check_branch
        %439 = sbr.rel (%p437) target = $region36
      $region35: #{residual_block_forward.6} parent=31 // pred_region
        _
      $region36: #{residual_block_forward.6} parent=31 // pred_fallthru
        _
      // Predicated region
      $region37: #{residual_block_forward.6} parent=31 // pred_check
        %p440 = pneg %p128
      $region38: #{residual_block_forward.6} parent=31 // pred_check_branch
        %442 = sbr.rel (%p440) target = $region40
      $region39: #{residual_block_forward.6} parent=31 // pred_region
        _
      $region40: #{residual_block_forward.6} parent=31 // pred_fallthru
        _
    $region32: #{residual_block_forward.6} parent=5 // pred_fallthru
      _
    %p443 = scmp.le.s32.totalorder 2, %s11
    // Predicated region
    $region41: #{residual_block_forward.6} parent=5 // pred_check
      %p444 = pneg %p443
    $region42: #{residual_block_forward.6} parent=5 // pred_check_branch
      %446 = sbr.rel (%p444) target = $region44
    $region43: #{residual_block_forward.6} parent=5 // pred_region
      %s447 = ssub.s32 %s11, 2
      // Predicated region
      $region45: #{residual_block_forward.6} parent=43 // pred_check
        %p448 = pneg %p108
      $region46: #{residual_block_forward.6} parent=43 // pred_check_branch
        %450 = sbr.rel (%p448) target = $region48
      $region47: #{residual_block_forward.6} parent=43 // pred_region
        %p451 = scmp.lt.s32.totalorder %s17, 1
        %s452 = scalar_select %p451, %s17, 1
        %s453 = smul.addr %s452, 8
        %s454 = smul.addr %s453, 8
        %s455 = scalar_lea.vmem %s3, %s454
      $region48: #{residual_block_forward.6} parent=43 // pred_fallthru
        _
      // Predicated region
      $region49: #{residual_block_forward.6} parent=43 // pred_check
        %p456 = pneg %p134
      $region50: #{residual_block_forward.6} parent=43 // pred_check_branch
        %458 = sbr.rel (%p456) target = $region52
      $region51: #{residual_block_forward.6} parent=43 // pred_region
        %p459 = scmp.lt.s32.totalorder %s17, 1
        %s460 = scalar_select %p459, %s17, 1
        %s461 = smul.addr %s460, 2
        %s462 = scalar_lea.vmem %s4, %s461
      $region52: #{residual_block_forward.6} parent=43 // pred_fallthru
        _
    $region44: #{residual_block_forward.6} parent=5 // pred_fallthru
      _
  $region6: #{residual_block_forward.6} parent=0 // loop_footer
    %s15 = sadd.s32 1, %s11
  $region7: #{residual_block_forward.6} parent=0 // loop_footer_branch
    %10 = sbr.rel target = $region3
  $region8: #{residual_block_forward.6} parent=0 // loop_exit
    _

// kernel: residual_block_forward.4
$region0: #{residual_block_forward.4}
  #allocation0 [shape = 'u32[]', space=smem, size = 0x4, offset = 0x4, fixed_abs, tag = 'smem constant byte address 0x4 - core index']
  #allocation1 [shape = 'u32[144,128]{1,0:T(1,128)}', space=vmem, size = 0x12000, scoped, tag = 'internal scratch']
  #allocation2 [shape = 'f32[64,36]{1,0:T(8,128)}', space=vmem, size = 0x8000, scoped, tag = 'scratch operand']
  %s0 = inlined_call_operand.vmem [shape: f32[2,36,9,4], index: 0, kind: input, shape index: {}]
  %s1 = inlined_call_operand.vmem [shape: f32[36,128], index: 1, kind: input, shape index: {}]
  %s2 = inlined_call_operand.vmem [shape: f32[1,128], index: 2, kind: input, shape index: {}]
  %s3 = inlined_call_operand.vmem [shape: f32[2,64,128], index: 3, kind: output, shape index: {0}]
  %s4 = inlined_call_operand.vmem [shape: f32[2,2,128], index: 4, kind: output, shape index: {1}]
  %5 = xla_tuple %s3, %s4
  %s6 = sld [smem:[#allocation0]]
  $region53: #{residual_block_forward.4} parent=0
    _
  %s8 = ssub.s32 1, %s6
  %s9 = scalar_select 0, %s8, %s6
  loop: start=0, step=1, limit=4
  $region2: #{residual_block_forward.4} parent=0 // loop_pre_header
    _
  $region3: #{residual_block_forward.4} parent=0 // loop_header
    %s11 = sphi 0, %s15
    %p12 = scmp.ge.s32.totalorder %s11, 4
    %s21 = sphi 0, %s23
    %s24 = sphi 0, %s21
    %s25 = sphi 0, %s24
    %s41 = sphi 0, %s25
    %s45 = sphi 0, %s45
    %s47 = sphi 0, %s45
    %s48 = sphi 0, %s47
    %s62 = sphi 0, %s48
    %s66 = sphi 0, %s66
    %s68 = sphi 0, %s66
    %s69 = sphi 0, %s68
    %s83 = sphi 0, %s69
    %s89 = sphi 0, %s91
    %s92 = sphi 0, %s89
    %s93 = sphi 0, %s92
    %s109 = sphi 0, %s93
    %s115 = sphi 0, %s117
    %s118 = sphi 0, %s115
    %s119 = sphi 0, %s118
    %s135 = sphi 0, %s119
  $region4: #{residual_block_forward.4} parent=0 // loop_header_branch
    %14 = sbr.rel (%p12) target = $region8
  $region5: #{residual_block_forward.4} parent=0 // loop_body
    %s16 = ssub.s32 %s11, 1
    %s17 = ssub.s32 %s11, 2
    %s18 = sadd.s32 %s11, 1
    %s19 = ssub.s32 %s11, %s18
    %p20 = scmp.eq.s32.totalorder %s19, 0
    %s22 = sadd.s32 %s21, 1
    %s23 = scalar_select %p20, %s21, %s22
    %p26 = pneg %p20
    %p27 = scmp.eq.s32.totalorder %s11, 1
    %p28 = por %p26, %p27
    %p29 = scmp.ne.s32.totalorder %s21, %s24
    %p30 = scmp.eq.s32.totalorder %s11, 0
    %p31 = por %p29, %p30
    %p32 = scmp.ne.s32.totalorder %s21, %s24
    %p33 = scmp.eq.s32.totalorder %s16, 1
    %p34 = por %p32, %p33
    %p35 = scmp.ne.s32.totalorder %s24, %s25
    %p36 = scmp.eq.s32.totalorder %s16, 0
    %p37 = por %p35, %p36
    %p38 = scmp.ne.s32.totalorder %s24, %s25
    %p39 = scmp.eq.s32.totalorder %s17, 1
    %p40 = por %p38, %p39
    %p42 = scmp.ne.s32.totalorder %s25, %s41
    %p43 = scmp.eq.s32.totalorder %s17, 0
    %p44 = por %p42, %p43
    %s46 = sadd.s32 %s45, 1
    %p49 = scmp.eq.s32.totalorder %s11, 1
    %p50 = scmp.ne.s32.totalorder %s45, %s47
    %p51 = scmp.eq.s32.totalorder %s11, 0
    %p52 = por %p50, %p51
    %p53 = scmp.ne.s32.totalorder %s45, %s47
    %p54 = scmp.eq.s32.totalorder %s16, 1
    %p55 = por %p53, %p54
    %p56 = scmp.ne.s32.totalorder %s47, %s48
    %p57 = scmp.eq.s32.totalorder %s16, 0
    %p58 = por %p56, %p57
    %p59 = scmp.ne.s32.totalorder %s47, %s48
    %p60 = scmp.eq.s32.totalorder %s17, 1
    %p61 = por %p59, %p60
    %p63 = scmp.ne.s32.totalorder %s48, %s62
    %p64 = scmp.eq.s32.totalorder %s17, 0
    %p65 = por %p63, %p64
    %s67 = sadd.s32 %s66, 1
    %p70 = scmp.eq.s32.totalorder %s11, 1
    %p71 = scmp.ne.s32.totalorder %s66, %s68
    %p72 = scmp.eq.s32.totalorder %s11, 0
    %p73 = por %p71, %p72
    %p74 = scmp.ne.s32.totalorder %s66, %s68
    %p75 = scmp.eq.s32.totalorder %s16, 1
    %p76 = por %p74, %p75
    %p77 = scmp.ne.s32.totalorder %s68, %s69
    %p78 = scmp.eq.s32.totalorder %s16, 0
    %p79 = por %p77, %p78
    %p80 = scmp.ne.s32.totalorder %s68, %s69
    %p81 = scmp.eq.s32.totalorder %s17, 1
    %p82 = por %p80, %p81
    %p84 = scmp.ne.s32.totalorder %s69, %s83
    %p85 = scmp.eq.s32.totalorder %s17, 0
    %p86 = por %p84, %p85
    %s87 = ssub.s32 %s11, %s18
    %p88 = scmp.eq.s32.totalorder %s87, 0
    %s90 = sadd.s32 %s89, 1
    %s91 = scalar_select %p88, %s89, %s90
    %p94 = pneg %p88
    %p95 = scmp.eq.s32.totalorder %s11, 1
    %p96 = por %p94, %p95
    %p97 = scmp.ne.s32.totalorder %s89, %s92
    %p98 = scmp.eq.s32.totalorder %s11, 0
    %p99 = por %p97, %p98
    %p100 = scmp.ne.s32.totalorder %s89, %s92
    %p101 = scmp.eq.s32.totalorder %s16, 1
    %p102 = por %p100, %p101
    %p103 = scmp.ne.s32.totalorder %s92, %s93
    %p104 = scmp.eq.s32.totalorder %s16, 0
    %p105 = por %p103, %p104
    %p106 = scmp.ne.s32.totalorder %s92, %s93
    %p107 = scmp.eq.s32.totalorder %s17, 1
    %p108 = por %p106, %p107
    %p110 = scmp.ne.s32.totalorder %s93, %s109
    %p111 = scmp.eq.s32.totalorder %s17, 0
    %p112 = por %p110, %p111
    %s113 = ssub.s32 %s11, %s18
    %p114 = scmp.eq.s32.totalorder %s113, 0
    %s116 = sadd.s32 %s115, 1
    %s117 = scalar_select %p114, %s115, %s116
    %p120 = pneg %p114
    %p121 = scmp.eq.s32.totalorder %s11, 1
    %p122 = por %p120, %p121
    %p123 = scmp.ne.s32.totalorder %s115, %s118
    %p124 = scmp.eq.s32.totalorder %s11, 0
    %p125 = por %p123, %p124
    %p126 = scmp.ne.s32.totalorder %s115, %s118
    %p127 = scmp.eq.s32.totalorder %s16, 1
    %p128 = por %p126, %p127
    %p129 = scmp.ne.s32.totalorder %s118, %s119
    %p130 = scmp.eq.s32.totalorder %s16, 0
    %p131 = por %p129, %p130
    %p132 = scmp.ne.s32.totalorder %s118, %s119
    %p133 = scmp.eq.s32.totalorder %s17, 1
    %p134 = por %p132, %p133
    %p136 = scmp.ne.s32.totalorder %s119, %s135
    %p137 = scmp.eq.s32.totalorder %s17, 0
    %p138 = por %p136, %p137
    %p139 = scmp.le.s32.totalorder 1, %s11
    %p140 = scmp.lt.s32.totalorder %s11, 3
    %p141 = pnand %p139, %p140
    %p142 = pneg %p141
    // Predicated region
    $region9: #{residual_block_forward.4} parent=5 // pred_check
      _
    $region10: #{residual_block_forward.4} parent=5 // pred_check_branch
      %144 = sbr.rel (%p141) target = $region12
    $region11: #{residual_block_forward.4} parent=5 // pred_region
      %s145 = ssub.s32 %s11, 1
      // Predicated region
      $region13: #{residual_block_forward.4} parent=11 // pred_check
        %p146 = pneg %p58
      $region14: #{residual_block_forward.4} parent=11 // pred_check_branch
        %148 = sbr.rel (%p146) target = $region16
      $region15: #{residual_block_forward.4} parent=11 // pred_region
        _
      $region16: #{residual_block_forward.4} parent=11 // pred_fallthru
        _
      // Predicated region
      $region17: #{residual_block_forward.4} parent=11 // pred_check
        %p149 = pneg %p79
      $region18: #{residual_block_forward.4} parent=11 // pred_check_branch
        %151 = sbr.rel (%p149) target = $region20
      $region19: #{residual_block_forward.4} parent=11 // pred_region
        _
      $region20: #{residual_block_forward.4} parent=11 // pred_fallthru
        _
    $region12: #{residual_block_forward.4} parent=5 // pred_fallthru
      _
    %p152 = scmp.lt.s32.totalorder %s11, 2
    // Predicated region
    $region21: #{residual_block_forward.4} parent=5 // pred_check
      %p153 = pneg %p152
    $region22: #{residual_block_forward.4} parent=5 // pred_check_branch
      %155 = sbr.rel (%p153) target = $region24
    $region23: #{residual_block_forward.4} parent=5 // pred_region
      // Predicated region
      $region25: #{residual_block_forward.4} parent=23 // pred_check
        %p156 = pneg %p31
      $region26: #{residual_block_forward.4} parent=23 // pred_check_branch
        %158 = sbr.rel (%p156) target = $region28
      $region27: #{residual_block_forward.4} parent=23 // pred_region
        %p159 = scmp.lt.s32.totalorder %s11, 1
        %s160 = scalar_select %p159, %s11, 1
        %s161 = smul.addr %s160, 72
        %s162 = smul.addr %s161, 8
        %s163 = scalar_lea.vmem %s0, %s162
      $region28: #{residual_block_forward.4} parent=23 // pred_fallthru
        _
    $region24: #{residual_block_forward.4} parent=5 // pred_fallthru
      _
    %p164 = scmp.le.s32.totalorder 1, %s11
    %p165 = scmp.lt.s32.totalorder %s11, 3
    %p166 = pnand %p164, %p165
    %p167 = pneg %p166
    // Predicated region
    $region29: #{residual_block_forward.4} parent=5 // pred_check
      _
    $region30: #{residual_block_forward.4} parent=5 // pred_check_branch
      %169 = sbr.rel (%p166) target = $region32
    $region31: #{residual_block_forward.4} parent=5 // pred_region
      %s170 = ssub.s32 %s11, 1
      %p171 = scmp.lt.s32.totalorder %s16, 1
      %s172 = scalar_select %p171, %s16, 1
      %s173 = smul.addr %s172, 72
      %s174 = smul.addr %s173, 8
      %s175 = scalar_lea.vmem %s0, %s174
      %p176 = pneg %p37
      %p177 = pneg %p34
      %p178 = pneg %p58
      %p179 = pneg %p55
      %p180 = pneg %p79
      %p181 = pneg %p76
      %p182 = pneg %p105
      %p183 = pneg %p102
      %p184 = scmp.lt.s32.totalorder %s16, 1
      %s185 = scalar_select %p184, %s16, 1
      %s186 = smul.addr %s185, 8
      %s187 = smul.addr %s186, 8
      %s188 = scalar_lea.vmem %s3, %s187
      %p189 = pneg %p131
      %p190 = pneg %p128
      %p191 = scmp.lt.s32.totalorder %s16, 1
      %s192 = scalar_select %p191, %s16, 1
      %s193 = smul.addr %s192, 2
      %s194 = scalar_lea.vmem %s4, %s193
      %p195 = scmp.lt.s32.totalorder %s16, 1
      %s196 = scalar_select %p195, %s16, 1
      %s197 = smul.addr %s196, 72
      %s198 = smul.addr %s197, 8
      %s199 = scalar_lea.vmem %s0, %s198
      %p200 = scmp.lt.s32.totalorder %s16, 1
      %s201 = scalar_select %p200, %s16, 1
      %s202 = smul.addr %s201, 8
      %s203 = smul.addr %s202, 8
      %s204 = scalar_lea.vmem %s3, %s203
      %p205 = scmp.lt.s32.totalorder %s16, 1
      %s206 = scalar_select %p205, %s16, 1
      %s207 = smul.addr %s206, 2
      %s208 = scalar_lea.vmem %s4, %s207
      %v209 = vld [vmem:[%s199] sm:$0xff]
      %v210 = vld [vmem:[%s199 + $0x10] sm:$0xff]
      %v211 = vld [vmem:[%s199 + $0x20] sm:$0xff]
      %v212 = vld [vmem:[%s199 + $0x30] sm:$0xff]
      %v213 = vld [vmem:[%s199 + $0x40] sm:$0xff]
      %v214 = vld [vmem:[%s199 + $0x50] sm:$0xff]
      %v215 = vld [vmem:[%s199 + $0x60] sm:$0xff]
      %v216 = vld [vmem:[%s199 + $0x70] sm:$0xff]
      %vm217 = vcmask 31744
      %218 = vst.msk [vmem:[#allocation2] sm:$0xff] %vm217, %v209
      %219 = vst.msk [vmem:[#allocation2 + $0x8] sm:$0xff] %vm217, %v210
      %220 = vst.msk [vmem:[#allocation2 + $0x10] sm:$0xff] %vm217, %v211
      %221 = vst.msk [vmem:[#allocation2 + $0x18] sm:$0xff] %vm217, %v212
      %222 = vst.msk [vmem:[#allocation2 + $0x20] sm:$0xff] %vm217, %v213
      %223 = vst.msk [vmem:[#allocation2 + $0x28] sm:$0xff] %vm217, %v214
      %224 = vst.msk [vmem:[#allocation2 + $0x30] sm:$0xff] %vm217, %v215
      %225 = vst.msk [vmem:[#allocation2 + $0x38] sm:$0xff] %vm217, %v216
      %s226 = scalar_lea.vmem %s199, 144
      %v227 = vld [vmem:[%s226] sm:$0xff]
      %v228 = vld [vmem:[%s226 + $0x10] sm:$0xff]
      %v229 = vld [vmem:[%s226 + $0x20] sm:$0xff]
      %v230 = vld [vmem:[%s226 + $0x30] sm:$0xff]
      %v231 = vld [vmem:[%s226 + $0x40] sm:$0xff]
      %v232 = vld [vmem:[%s226 + $0x50] sm:$0xff]
      %v233 = vld [vmem:[%s226 + $0x60] sm:$0xff]
      %v234 = vld [vmem:[%s226 + $0x70] sm:$0xff]
      %243 = vrot.lane.b32.xlu0 %v227, 4
      %v244 = vpop.permute.xlu0 %243
      %245 = vrot.lane.b32.xlu0 %v228, 4
      %v246 = vpop.permute.xlu0 %245
      %247 = vrot.lane.b32.xlu0 %v229, 4
      %v248 = vpop.permute.xlu0 %247
      %249 = vrot.lane.b32.xlu0 %v230, 4
      %v250 = vpop.permute.xlu0 %249
      %251 = vrot.lane.b32.xlu0 %v231, 4
      %v252 = vpop.permute.xlu0 %251
      %253 = vrot.lane.b32.xlu0 %v232, 4
      %v254 = vpop.permute.xlu0 %253
      %255 = vrot.lane.b32.xlu0 %v233, 4
      %v256 = vpop.permute.xlu0 %255
      %257 = vrot.lane.b32.xlu0 %v234, 4
      %v258 = vpop.permute.xlu0 %257
      %vm267 = vcmask 64544
      %268 = vst.msk [vmem:[#allocation2] sm:$0xff] %vm267, %v244
      %269 = vst.msk [vmem:[#allocation2 + $0x8] sm:$0xff] %vm267, %v246
      %270 = vst.msk [vmem:[#allocation2 + $0x10] sm:$0xff] %vm267, %v248
      %271 = vst.msk [vmem:[#allocation2 + $0x18] sm:$0xff] %vm267, %v250
      %272 = vst.msk [vmem:[#allocation2 + $0x20] sm:$0xff] %vm267, %v252
      %273 = vst.msk [vmem:[#allocation2 + $0x28] sm:$0xff] %vm267, %v254
      %274 = vst.msk [vmem:[#allocation2 + $0x30] sm:$0xff] %vm267, %v256
      %275 = vst.msk [vmem:[#allocation2 + $0x38] sm:$0xff] %vm267, %v258
      %v276 = vld [vmem:[%s199 + $0x1] sm:$0xff]
      %v277 = vld [vmem:[%s199 + $0x11] sm:$0xff]
      %v278 = vld [vmem:[%s199 + $0x21] sm:$0xff]
      %v279 = vld [vmem:[%s199 + $0x31] sm:$0xff]
      %v280 = vld [vmem:[%s199 + $0x41] sm:$0xff]
      %v281 = vld [vmem:[%s199 + $0x51] sm:$0xff]
      %v282 = vld [vmem:[%s199 + $0x61] sm:$0xff]
      %v283 = vld [vmem:[%s199 + $0x71] sm:$0xff]
      %292 = vrot.lane.b32.xlu0 %v276, 8
      %v293 = vpop.permute.xlu0 %292
      %294 = vrot.lane.b32.xlu0 %v277, 8
      %v295 = vpop.permute.xlu0 %294
      %296 = vrot.lane.b32.xlu0 %v278, 8
      %v297 = vpop.permute.xlu0 %296
      %298 = vrot.lane.b32.xlu0 %v279, 8
      %v299 = vpop.permute.xlu0 %298
      %300 = vrot.lane.b32.xlu0 %v280, 8
      %v301 = vpop.permute.xlu0 %300
      %302 = vrot.lane.b32.xlu0 %v281, 8
      %v303 = vpop.permute.xlu0 %302
      %304 = vrot.lane.b32.xlu0 %v282, 8
      %v305 = vpop.permute.xlu0 %304
      %306 = vrot.lane.b32.xlu0 %v283, 8
      %v307 = vpop.permute.xlu0 %306
      %vm316 = vcmask 97344
      %317 = vst.msk [vmem:[#allocation2] sm:$0xff] %vm316, %v293
      %318 = vst.msk [vmem:[#allocation2 + $0x8] sm:$0xff] %vm316, %v295
      %319 = vst.msk [vmem:[#allocation2 + $0x10] sm:$0xff] %vm316, %v297
      %320 = vst.msk [vmem:[#allocation2 + $0x18] sm:$0xff] %vm316, %v299
      %321 = vst.msk [vmem:[#allocation2 + $0x20] sm:$0xff] %vm316, %v301
      %322 = vst.msk [vmem:[#allocation2 + $0x28] sm:$0xff] %vm316, %v303
      %323 = vst.msk [vmem:[#allocation2 + $0x30] sm:$0xff] %vm316, %v305
      %324 = vst.msk [vmem:[#allocation2 + $0x38] sm:$0xff] %vm316, %v307
      %s325 = scalar_lea.vmem %s199, 288
      %v326 = vld [vmem:[%s325] sm:$0xff]
      %v327 = vld [vmem:[%s325 + $0x10] sm:$0xff]
      %v328 = vld [vmem:[%s325 + $0x20] sm:$0xff]
      %v329 = vld [vmem:[%s325 + $0x30] sm:$0xff]
      %v330 = vld [vmem:[%s325 + $0x40] sm:$0xff]
      %v331 = vld [vmem:[%s325 + $0x50] sm:$0xff]
      %v332 = vld [vmem:[%s325 + $0x60] sm:$0xff]
      %v333 = vld [vmem:[%s325 + $0x70] sm:$0xff]
      %342 = vrot.lane.b32.xlu0 %v326, 12
      %v343 = vpop.permute.xlu0 %342
      %344 = vrot.lane.b32.xlu0 %v327, 12
      %v345 = vpop.permute.xlu0 %344
      %346 = vrot.lane.b32.xlu0 %v328, 12
      %v347 = vpop.permute.xlu0 %346
      %348 = vrot.lane.b32.xlu0 %v329, 12
      %v349 = vpop.permute.xlu0 %348
      %350 = vrot.lane.b32.xlu0 %v330, 12
      %v351 = vpop.permute.xlu0 %350
      %352 = vrot.lane.b32.xlu0 %v331, 12
      %v353 = vpop.permute.xlu0 %352
      %354 = vrot.lane.b32.xlu0 %v332, 12
      %v355 = vpop.permute.xlu0 %354
      %356 = vrot.lane.b32.xlu0 %v333, 12
      %v357 = vpop.permute.xlu0 %356
      %vm366 = vcmask 130144
      %367 = vst.msk [vmem:[#allocation2] sm:$0xff] %vm366, %v343
      %368 = vst.msk [vmem:[#allocation2 + $0x8] sm:$0xff] %vm366, %v345
      %369 = vst.msk [vmem:[#allocation2 + $0x10] sm:$0xff] %vm366, %v347
      %370 = vst.msk [vmem:[#allocation2 + $0x18] sm:$0xff] %vm366, %v349
      %371 = vst.msk [vmem:[#allocation2 + $0x20] sm:$0xff] %vm366, %v351
      %372 = vst.msk [vmem:[#allocation2 + $0x28] sm:$0xff] %vm366, %v353
      %373 = vst.msk [vmem:[#allocation2 + $0x30] sm:$0xff] %vm366, %v355
      %374 = vst.msk [vmem:[#allocation2 + $0x38] sm:$0xff] %vm366, %v357
      %s375 = scalar_lea.vmem %s199, 432
      %v376 = vld [vmem:[%s375] sm:$0xff]
      %v377 = vld [vmem:[%s375 + $0x10] sm:$0xff]
      %v378 = vld [vmem:[%s375 + $0x20] sm:$0xff]
      %v379 = vld [vmem:[%s375 + $0x30] sm:$0xff]
      %v380 = vld [vmem:[%s375 + $0x40] sm:$0xff]
      %v381 = vld [vmem:[%s375 + $0x50] sm:$0xff]
      %v382 = vld [vmem:[%s375 + $0x60] sm:$0xff]
      %v383 = vld [vmem:[%s375 + $0x70] sm:$0xff]
      %392 = vrot.lane.b32.xlu0 %v376, 16
      %v393 = vpop.permute.xlu0 %392
      %394 = vrot.lane.b32.xlu0 %v377, 16
      %v395 = vpop.permute.xlu0 %394
      %396 = vrot.lane.b32.xlu0 %v378, 16
      %v397 = vpop.permute.xlu0 %396
      %398 = vrot.lane.b32.xlu0 %v379, 16
      %v399 = vpop.permute.xlu0 %398
      %400 = vrot.lane.b32.xlu0 %v380, 16
      %v401 = vpop.permute.xlu0 %400
      %402 = vrot.lane.b32.xlu0 %v381, 16
      %v403 = vpop.permute.xlu0 %402
      %404 = vrot.lane.b32.xlu0 %v382, 16
      %v405 = vpop.permute.xlu0 %404
      %406 = vrot.lane.b32.xlu0 %v383, 16
      %v407 = vpop.permute.xlu0 %406
      %vm416 = vcmask 162944
      %417 = vst.msk [vmem:[#allocation2] sm:$0xff] %vm416, %v393
      %418 = vst.msk [vmem:[#allocation2 + $0x8] sm:$0xff] %vm416, %v395
      %419 = vst.msk [vmem:[#allocation2 + $0x10] sm:$0xff] %vm416, %v397
      %420 = vst.msk [vmem:[#allocation2 + $0x18] sm:$0xff] %vm416, %v399
      %421 = vst.msk [vmem:[#allocation2 + $0x20] sm:$0xff] %vm416, %v401
      %422 = vst.msk [vmem:[#allocation2 + $0x28] sm:$0xff] %vm416, %v403
      %423 = vst.msk [vmem:[#allocation2 + $0x30] sm:$0xff] %vm416, %v405
      %424 = vst.msk [vmem:[#allocation2 + $0x38] sm:$0xff] %vm416, %v407
      %v425 = vld [vmem:[%s325 + $0x1] sm:$0xff]
      %v426 = vld [vmem:[%s325 + $0x11] sm:$0xff]
      %v427 = vld [vmem:[%s325 + $0x21] sm:$0xff]
      %v428 = vld [vmem:[%s325 + $0x31] sm:$0xff]
      %v429 = vld [vmem:[%s325 + $0x41] sm:$0xff]
      %v430 = vld [vmem:[%s325 + $0x51] sm:$0xff]
      %v431 = vld [vmem:[%s325 + $0x61] sm:$0xff]
      %v432 = vld [vmem:[%s325 + $0x71] sm:$0xff]
      %441 = vrot.lane.b32.xlu0 %v425, 20
      %v442 = vpop.permute.xlu0 %441
      %443 = vrot.lane.b32.xlu0 %v426, 20
      %v444 = vpop.permute.xlu0 %443
      %445 = vrot.lane.b32.xlu0 %v427, 20
      %v446 = vpop.permute.xlu0 %445
      %447 = vrot.lane.b32.xlu0 %v428, 20
      %v448 = vpop.permute.xlu0 %447
      %449 = vrot.lane.b32.xlu0 %v429, 20
      %v450 = vpop.permute.xlu0 %449
      %451 = vrot.lane.b32.xlu0 %v430, 20
      %v452 = vpop.permute.xlu0 %451
      %453 = vrot.lane.b32.xlu0 %v431, 20
      %v454 = vpop.permute.xlu0 %453
      %455 = vrot.lane.b32.xlu0 %v432, 20
      %v456 = vpop.permute.xlu0 %455
      %vm465 = vcmask 195744
      %466 = vst.msk [vmem:[#allocation2] sm:$0xff] %vm465, %v442
      %467 = vst.msk [vmem:[#allocation2 + $0x8] sm:$0xff] %vm465, %v444
      %468 = vst.msk [vmem:[#allocation2 + $0x10] sm:$0xff] %vm465, %v446
      %469 = vst.msk [vmem:[#allocation2 + $0x18] sm:$0xff] %vm465, %v448
      %470 = vst.msk [vmem:[#allocation2 + $0x20] sm:$0xff] %vm465, %v450
      %471 = vst.msk [vmem:[#allocation2 + $0x28] sm:$0xff] %vm465, %v452
      %472 = vst.msk [vmem:[#allocation2 + $0x30] sm:$0xff] %vm465, %v454
      %473 = vst.msk [vmem:[#allocation2 + $0x38] sm:$0xff] %vm465, %v456
      %s474 = scalar_lea.vmem %s199, 16
      %v475 = vld [vmem:[%s474] sm:$0xff]
      %v476 = vld [vmem:[%s474 + $0x10] sm:$0xff]
      %v477 = vld [vmem:[%s474 + $0x20] sm:$0xff]
      %v478 = vld [vmem:[%s474 + $0x30] sm:$0xff]
      %v479 = vld [vmem:[%s474 + $0x40] sm:$0xff]
      %v480 = vld [vmem:[%s474 + $0x50] sm:$0xff]
      %v481 = vld [vmem:[%s474 + $0x60] sm:$0xff]
      %v482 = vld [vmem:[%s474 + $0x70] sm:$0xff]
      %491 = vrot.lane.b32.xlu0 %v475, 24
      %v492 = vpop.permute.xlu0 %491
      %493 = vrot.lane.b32.xlu0 %v476, 24
      %v494 = vpop.permute.xlu0 %493
      %495 = vrot.lane.b32.xlu0 %v477, 24
      %v496 = vpop.permute.xlu0 %495
      %497 = vrot.lane.b32.xlu0 %v478, 24
      %v498 = vpop.permute.xlu0 %497
      %499 = vrot.lane.b32.xlu0 %v479, 24
      %v500 = vpop.permute.xlu0 %499
      %501 = vrot.lane.b32.xlu0 %v480, 24
      %v502 = vpop.permute.xlu0 %501
      %503 = vrot.lane.b32.xlu0 %v481, 24
      %v504 = vpop.permute.xlu0 %503
      %505 = vrot.lane.b32.xlu0 %v482, 24
      %v506 = vpop.permute.xlu0 %505
      %vm515 = vcmask 228544
      %516 = vst.msk [vmem:[#allocation2] sm:$0xff] %vm515, %v492
      %517 = vst.msk [vmem:[#allocation2 + $0x8] sm:$0xff] %vm515, %v494
      %518 = vst.msk [vmem:[#allocation2 + $0x10] sm:$0xff] %vm515, %v496
      %519 = vst.msk [vmem:[#allocation2 + $0x18] sm:$0xff] %vm515, %v498
      %520 = vst.msk [vmem:[#allocation2 + $0x20] sm:$0xff] %vm515, %v500
      %521 = vst.msk [vmem:[#allocation2 + $0x28] sm:$0xff] %vm515, %v502
      %522 = vst.msk [vmem:[#allocation2 + $0x30] sm:$0xff] %vm515, %v504
      %523 = vst.msk [vmem:[#allocation2 + $0x38] sm:$0xff] %vm515, %v506
      %s524 = scalar_lea.vmem %s199, 160
      %v525 = vld [vmem:[%s524] sm:$0xff]
      %v526 = vld [vmem:[%s524 + $0x10] sm:$0xff]
      %v527 = vld [vmem:[%s524 + $0x20] sm:$0xff]
      %v528 = vld [vmem:[%s524 + $0x30] sm:$0xff]
      %v529 = vld [vmem:[%s524 + $0x40] sm:$0xff]
      %v530 = vld [vmem:[%s524 + $0x50] sm:$0xff]
      %v531 = vld [vmem:[%s524 + $0x60] sm:$0xff]
      %v532 = vld [vmem:[%s524 + $0x70] sm:$0xff]
      %541 = vrot.lane.b32.xlu0 %v525, 28
      %v542 = vpop.permute.xlu0 %541
      %543 = vrot.lane.b32.xlu0 %v526, 28
      %v544 = vpop.permute.xlu0 %543
      %545 = vrot.lane.b32.xlu0 %v527, 28
      %v546 = vpop.permute.xlu0 %545
      %547 = vrot.lane.b32.xlu0 %v528, 28
      %v548 = vpop.permute.xlu0 %547
      %549 = vrot.lane.b32.xlu0 %v529, 28
      %v550 = vpop.permute.xlu0 %549
      %551 = vrot.lane.b32.xlu0 %v530, 28
      %v552 = vpop.permute.xlu0 %551
      %553 = vrot.lane.b32.xlu0 %v531, 28
      %v554 = vpop.permute.xlu0 %553
      %555 = vrot.lane.b32.xlu0 %v532, 28
      %v556 = vpop.permute.xlu0 %555
      %vm565 = vcmask 261344
      %566 = vst.msk [vmem:[#allocation2] sm:$0xff] %vm565, %v542
      %567 = vst.msk [vmem:[#allocation2 + $0x8] sm:$0xff] %vm565, %v544
      %568 = vst.msk [vmem:[#allocation2 + $0x10] sm:$0xff] %vm565, %v546
      %569 = vst.msk [vmem:[#allocation2 + $0x18] sm:$0xff] %vm565, %v548
      %570 = vst.msk [vmem:[#allocation2 + $0x20] sm:$0xff] %vm565, %v550
      %571 = vst.msk [vmem:[#allocation2 + $0x28] sm:$0xff] %vm565, %v552
      %572 = vst.msk [vmem:[#allocation2 + $0x30] sm:$0xff] %vm565, %v554
      %573 = vst.msk [vmem:[#allocation2 + $0x38] sm:$0xff] %vm565, %v556
      %v574 = vld [vmem:[%s474 + $0x1] sm:$0xff]
      %v575 = vld [vmem:[%s474 + $0x11] sm:$0xff]
      %v576 = vld [vmem:[%s474 + $0x21] sm:$0xff]
      %v577 = vld [vmem:[%s474 + $0x31] sm:$0xff]
      %v578 = vld [vmem:[%s474 + $0x41] sm:$0xff]
      %v579 = vld [vmem:[%s474 + $0x51] sm:$0xff]
      %v580 = vld [vmem:[%s474 + $0x61] sm:$0xff]
      %v581 = vld [vmem:[%s474 + $0x71] sm:$0xff]
      %590 = vrot.lane.b32.xlu0 %v574, 32
      %v591 = vpop.permute.xlu0 %590
      %592 = vrot.lane.b32.xlu0 %v575, 32
      %v593 = vpop.permute.xlu0 %592
      %594 = vrot.lane.b32.xlu0 %v576, 32
      %v595 = vpop.permute.xlu0 %594
      %596 = vrot.lane.b32.xlu0 %v577, 32
      %v597 = vpop.permute.xlu0 %596
      %598 = vrot.lane.b32.xlu0 %v578, 32
      %v599 = vpop.permute.xlu0 %598
      %600 = vrot.lane.b32.xlu0 %v579, 32
      %v601 = vpop.permute.xlu0 %600
      %602 = vrot.lane.b32.xlu0 %v580, 32
      %v603 = vpop.permute.xlu0 %602
      %604 = vrot.lane.b32.xlu0 %v581, 32
      %v605 = vpop.permute.xlu0 %604
      %vm614 = vcmask 294144
      %615 = vst.msk [vmem:[#allocation2] sm:$0xff] %vm614, %v591
      %616 = vst.msk [vmem:[#allocation2 + $0x8] sm:$0xff] %vm614, %v593
      %617 = vst.msk [vmem:[#allocation2 + $0x10] sm:$0xff] %vm614, %v595
      %618 = vst.msk [vmem:[#allocation2 + $0x18] sm:$0xff] %vm614, %v597
      %619 = vst.msk [vmem:[#allocation2 + $0x20] sm:$0xff] %vm614, %v599
      %620 = vst.msk [vmem:[#allocation2 + $0x28] sm:$0xff] %vm614, %v601
      %621 = vst.msk [vmem:[#allocation2 + $0x30] sm:$0xff] %vm614, %v603
      %622 = vst.msk [vmem:[#allocation2 + $0x38] sm:$0xff] %vm614, %v605
      %v623 = vld [vmem:[#allocation2] sm:$0xff]
      %v624 = vld [vmem:[#allocation2 + $0x8] sm:$0xff]
      %v625 = vld [vmem:[#allocation2 + $0x10] sm:$0xff]
      %v626 = vld [vmem:[#allocation2 + $0x18] sm:$0xff]
      %v627 = vld [vmem:[#allocation2 + $0x20] sm:$0xff]
      %v628 = vld [vmem:[#allocation2 + $0x28] sm:$0xff]
      %v629 = vld [vmem:[#allocation2 + $0x30] sm:$0xff]
      %v630 = vld [vmem:[#allocation2 + $0x38] sm:$0xff]
      %v631 = vld [vmem:[%s1] sm:$0xff]
      %v632 = vld [vmem:[%s1 + $0x8] sm:$0xff]
      %v633 = vld [vmem:[%s1 + $0x10] sm:$0xff]
      %v634 = vld [vmem:[%s1 + $0x18] sm:$0xff]
      %v635 = vld [vmem:[%s1 + $0x20] sm:$0xf]
      %v636 = vld [vmem:[%s2] sm:$0x1]
      %v638 = vlaneseq
      %v639 = vshrl.u32 %v638, 7
      %v640 = vsub.s32 0, %v639
      %v641 = vrot.slane %v636, %v640
      %vm643 = vcmask 293888
      %v645 = vsel %vm643, %v623, 0
      %v648 = vsel %vm643, %v624, 0
      %v651 = vsel %vm643, %v625, 0
      %v654 = vsel %vm643, %v626, 0
      %v657 = vsel %vm643, %v627, 0
      %v660 = vsel %vm643, %v628, 0
      %v663 = vsel %vm643, %v629, 0
      %v666 = vsel %vm643, %v630, 0
      %vm668 = vcmask 1043456
      %v670 = vsel %vm668, %v635, 0
      %672 = vmatprep.subr.mxu0 0.0
      %673 = vmatpush1.msra.mxu0 %v631
      %674 = vmatprep.subr.mxu0 0.0
      %675 = vmatpush1.msra.mxu0 %v632
      %676 = vmatprep.subr.mxu0 0.0
      %677 = vmatpush1.msra.mxu0 %v633
      %678 = vmatprep.subr.mxu0 0.0
      %679 = vmatpush1.msra.mxu0 %v634
      %680 = vmatprep.subr.mxu0 0.0
      %681 = vmatpush1.msra.mxu0 %v670
      %682 = vmatprep.subr.mxu0 0.0
      %683 = vmatpush1.msra.mxu0 0.0
      %684 = vmatprep.subr.mxu0 0.0
      %685 = vmatpush1.msra.mxu0 0.0
      %686 = vmatprep.subr.mxu0 0.0
      %687 = vmatpush1.msra.mxu0 0.0
      %688 = vmatprep.subr.mxu0 0.0
      %689 = vmatpush1.msra.mxu0 0.0
      %690 = vmatprep.subr.mxu0 0.0
      %691 = vmatpush1.msra.mxu0 0.0
      %692 = vmatprep.subr.mxu0 0.0
      %693 = vmatpush1.msra.mxu0 0.0
      %694 = vmatprep.subr.mxu0 0.0
      %695 = vmatpush1.msra.mxu0 0.0
      %696 = vmatprep.subr.mxu0 0.0
      %697 = vmatpush1.msra.mxu0 0.0
      %698 = vmatprep.subr.mxu0 0.0
      %699 = vmatpush1.msra.mxu0 0.0
      %700 = vmatprep.subr.mxu0 0.0
      %701 = vmatpush1.msra.mxu0 0.0
      %702 = vmatprep.subr.mxu0 0.0
      %703 = vmatpush1.msra.mxu0 0.0
      %704 = vmatprep.subr.mxu0 0.0
      %705 = vmatpush1.msra.mxu0 0.0
      %706 = vmatprep.subr.mxu0 0.0
      %707 = vmatpush1.msra.mxu0 0.0
      %708 = vmatprep.subr.mxu0 0.0
      %709 = vmatpush1.msra.mxu0 0.0
      %710 = vmatprep.subr.mxu0 0.0
      %711 = vmatpush1.msra.mxu0 0.0
      %712 = vmatprep.subr.mxu0 0.0
      %713 = vmatpush1.msra.mxu0 0.0
      %714 = vmatprep.subr.mxu0 0.0
      %715 = vmatpush1.msra.mxu0 0.0
      %716 = vmatprep.subr.mxu0 0.0
      %717 = vmatpush1.msra.mxu0 0.0
      %718 = vmatprep.subr.mxu0 0.0
      %719 = vmatpush1.msra.mxu0 0.0
      %720 = vmatprep.subr.mxu0 0.0
      %721 = vmatpush1.msra.mxu0 0.0
      %722 = vmatprep.subr.mxu0 0.0
      %723 = vmatpush1.msra.mxu0 0.0
      %724 = vmatprep.subr.mxu0 0.0
      %725 = vmatpush1.msra.mxu0 0.0
      %726 = vmatprep.subr.mxu0 0.0
      %727 = vmatpush1.msra.mxu0 0.0
      %728 = vmatprep.subr.mxu0 0.0
      %729 = vmatpush1.msra.mxu0 0.0
      %730 = vmatprep.subr.mxu0 0.0
      %731 = vmatpush1.msra.mxu0 0.0
      %732 = vmatprep.subr.mxu0 0.0
      %733 = vmatpush1.msra.mxu0 0.0
      %734 = vmatprep.subr.mxu0 0.0
      %735 = vmatpush1.msra.mxu0 0.0
      %736 = vmatprep.mubr.f32.mxu0 0.0
      %737 = vmatmul.mubr.f32.gmra.mrb[0].mxu0 %v645
      %v738 = vpop.f32.mrb[0].mxu0
      %v739 = vadd.f32 %v641, %v738
      %v740 = vpop.f32.mrb[0].mxu0
      %741 = vmatprep.mubr.f32.mxu0 0.0
      %742 = vmatmul.mubr.f32.gmra.mrb[0].mxu0 %v648
      %v743 = vpop.f32.mrb[0].mxu0
      %v744 = vadd.f32 %v641, %v743
      %v745 = vpop.f32.mrb[0].mxu0
      %746 = vmatprep.mubr.f32.mxu0 0.0
      %747 = vmatmul.mubr.f32.gmra.mrb[0].mxu0 %v651
      %v748 = vpop.f32.mrb[0].mxu0
      %v749 = vadd.f32 %v641, %v748
      %v750 = vpop.f32.mrb[0].mxu0
      %751 = vmatprep.mubr.f32.mxu0 0.0
      %752 = vmatmul.mubr.f32.gmra.mrb[0].mxu0 %v654
      %v753 = vpop.f32.mrb[0].mxu0
      %v754 = vadd.f32 %v641, %v753
      %v755 = vpop.f32.mrb[0].mxu0
      %756 = vmatprep.mubr.f32.mxu0 0.0
      %757 = vmatmul.mubr.f32.gmra.mrb[0].mxu0 %v657
      %v758 = vpop.f32.mrb[0].mxu0
      %v759 = vadd.f32 %v641, %v758
      %v760 = vpop.f32.mrb[0].mxu0
      %761 = vmatprep.mubr.f32.mxu0 0.0
      %762 = vmatmul.mubr.f32.gmra.mrb[0].mxu0 %v660
      %v763 = vpop.f32.mrb[0].mxu0
      %v764 = vadd.f32 %v641, %v763
      %v765 = vpop.f32.mrb[0].mxu0
      %766 = vmatprep.mubr.f32.mxu0 0.0
      %767 = vmatmul.mubr.f32.gmra.mrb[0].mxu0 %v663
      %v768 = vpop.f32.mrb[0].mxu0
      %v769 = vadd.f32 %v641, %v768
      %v770 = vpop.f32.mrb[0].mxu0
      %771 = vmatprep.mubr.f32.mxu0 0.0
      %772 = vmatmul.mubr.f32.gmra.mrb[0].mxu0 %v666
      %v773 = vpop.f32.mrb[0].mxu0
      %v774 = vadd.f32 %v641, %v773
      %v775 = vpop.f32.mrb[0].mxu0
      %776 = vdwg.mxu0
      %777 = vst [vmem:[%s204] sm:$0xff] %v739
      %778 = vst [vmem:[%s204 + $0x8] sm:$0xff] %v744
      %779 = vst [vmem:[%s204 + $0x10] sm:$0xff] %v749
      %780 = vst [vmem:[%s204 + $0x18] sm:$0xff] %v754
      %781 = vst [vmem:[%s204 + $0x20] sm:$0xff] %v759
      %782 = vst [vmem:[%s204 + $0x28] sm:$0xff] %v764
      %783 = vst [vmem:[%s204 + $0x30] sm:$0xff] %v769
      %784 = vst [vmem:[%s204 + $0x38] sm:$0xff] %v774
      %v785 = vadd.f32 %v739, %v744
      %v786 = vadd.f32 %v785, %v749
      %v787 = vadd.f32 %v786, %v754
      %v788 = vadd.f32 %v787, %v759
      %v789 = vadd.f32 %v788, %v764
      %v790 = vadd.f32 %v789, %v769
      %v791 = vadd.f32 %v790, %v774
      %v792 = vrot.slane %v791, 4
      %v793 = vadd.f32 %v791, %v792
      %v794 = vrot.slane %v793, 2
      %v795 = vadd.f32 %v793, %v794
      %v796 = vrot.slane %v795, 1
      %v797 = vadd.f32 %v795, %v796
      %798 = vst [vmem:[%s208] sm:$0x1] %v797
      %v799 = vmul.f32 %v797, 0.015625
      %v800 = vsub.f32 %v739, %v799
      %v801 = vsub.f32 %v744, %v799
      %v802 = vsub.f32 %v749, %v799
      %v803 = vsub.f32 %v754, %v799
      %v804 = vsub.f32 %v759, %v799
      %v805 = vsub.f32 %v764, %v799
      %v806 = vsub.f32 %v769, %v799
      %v807 = vsub.f32 %v774, %v799
      %v808 = vmul.f32 %v800, %v800
      %v809 = vmul.f32 %v801, %v801
      %v810 = vmul.f32 %v802, %v802
      %v811 = vmul.f32 %v803, %v803
      %v812 = vmul.f32 %v804, %v804
      %v813 = vmul.f32 %v805, %v805
      %v814 = vmul.f32 %v806, %v806
      %v815 = vmul.f32 %v807, %v807
      %v816 = vadd.f32 %v808, %v809
      %v817 = vadd.f32 %v816, %v810
      %v818 = vadd.f32 %v817, %v811
      %v819 = vadd.f32 %v818, %v812
      %v820 = vadd.f32 %v819, %v813
      %v821 = vadd.f32 %v820, %v814
      %v822 = vadd.f32 %v821, %v815
      %v823 = vrot.slane %v822, 4
      %v824 = vadd.f32 %v822, %v823
      %v825 = vrot.slane %v824, 2
      %v826 = vadd.f32 %v824, %v825
      %v827 = vrot.slane %v826, 1
      %v828 = vadd.f32 %v826, %v827
      %829 = vst [vmem:[%s208 + $0x1] sm:$0x1] %v828
      %p830 = scmp.lt.s32.totalorder %s16, 1
      %s831 = scalar_select %p830, %s16, 1
      %s832 = smul.addr %s831, 8
      %s833 = smul.addr %s832, 8
      %s834 = scalar_lea.vmem %s3, %s833
      %p835 = scmp.lt.s32.totalorder %s16, 1
      %s836 = scalar_select %p835, %s16, 1
      %s837 = smul.addr %s836, 2
      %s838 = scalar_lea.vmem %s4, %s837
      // Predicated region
      $region33: #{residual_block_forward.4} parent=31 // pred_check
        %p839 = pneg %p102
      $region34: #{residual_block_forward.4} parent=31 // pred_check_branch
        %841 = sbr.rel (%p839) target = $region36
      $region35: #{residual_block_forward.4} parent=31 // pred_region
        _
      $region36: #{residual_block_forward.4} parent=31 // pred_fallthru
        _
      // Predicated region
      $region37: #{residual_block_forward.4} parent=31 // pred_check
        %p842 = pneg %p128
      $region38: #{residual_block_forward.4} parent=31 // pred_check_branch
        %844 = sbr.rel (%p842) target = $region40
      $region39: #{residual_block_forward.4} parent=31 // pred_region
        _
      $region40: #{residual_block_forward.4} parent=31 // pred_fallthru
        _
    $region32: #{residual_block_forward.4} parent=5 // pred_fallthru
      _
    %p845 = scmp.le.s32.totalorder 2, %s11
    // Predicated region
    $region41: #{residual_block_forward.4} parent=5 // pred_check
      %p846 = pneg %p845
    $region42: #{residual_block_forward.4} parent=5 // pred_check_branch
      %848 = sbr.rel (%p846) target = $region44
    $region43: #{residual_block_forward.4} parent=5 // pred_region
      %s849 = ssub.s32 %s11, 2
      // Predicated region
      $region45: #{residual_block_forward.4} parent=43 // pred_check
        %p850 = pneg %p108
      $region46: #{residual_block_forward.4} parent=43 // pred_check_branch
        %852 = sbr.rel (%p850) target = $region48
      $region47: #{residual_block_forward.4} parent=43 // pred_region
        %p853 = scmp.lt.s32.totalorder %s17, 1
        %s854 = scalar_select %p853, %s17, 1
        %s855 = smul.addr %s854, 8
        %s856 = smul.addr %s855, 8
        %s857 = scalar_lea.vmem %s3, %s856
      $region48: #{residual_block_forward.4} parent=43 // pred_fallthru
        _
      // Predicated region
      $region49: #{residual_block_forward.4} parent=43 // pred_check
        %p858 = pneg %p134
      $region50: #{residual_block_forward.4} parent=43 // pred_check_branch
        %860 = sbr.rel (%p858) target = $region52
      $region51: #{residual_block_forward.4} parent=43 // pred_region
        %p861 = scmp.lt.s32.totalorder %s17, 1
        %s862 = scalar_select %p861, %s17, 1
        %s863 = smul.addr %s862, 2
        %s864 = scalar_lea.vmem %s4, %s863
      $region52: #{residual_block_forward.4} parent=43 // pred_fallthru
        _
    $region44: #{residual_block_forward.4} parent=5 // pred_fallthru
      _
  $region6: #{residual_block_forward.4} parent=0 // loop_footer
    %s15 = sadd.s32 1, %s11
  $region7: #{residual_block_forward.4} parent=0 // loop_footer_branch
    %10 = sbr.rel target = $region3
  $region8: #{residual_block_forward.4} parent=0 // loop_exit
    _

// kernel: residual_block_forward.7
$region0: #{residual_block_forward.7}
  #allocation0 [shape = 'u32[]', space=smem, size = 0x4, offset = 0x4, fixed_abs, tag = 'smem constant byte address 0x4 - core index']
  #allocation1 [shape = 'u32[144,128]{1,0:T(1,128)}', space=vmem, size = 0x12000, scoped, tag = 'internal scratch']
  %s0 = inlined_call_operand.vmem [shape: f32[16,64], index: 0, kind: input, shape index: {}]
  %s1 = inlined_call_operand.vmem [shape: f32[1,64], index: 1, kind: input, shape index: {}]
  %s2 = inlined_call_operand.vmem [shape: f32[1,64], index: 2, kind: input, shape index: {}]
  %s3 = inlined_call_operand.vmem [shape: f32[16,64], index: 3, kind: input, shape index: {}]
  %s4 = inlined_call_operand.vmem [shape: f32[1,64], index: 4, kind: input, shape index: {}]
  %s5 = inlined_call_operand.vmem [shape: f32[1,64], index: 5, kind: input, shape index: {}]
  %s6 = inlined_call_operand.vmem [shape: f32[16,64], index: 6, kind: output, shape index: {}]
  %s7 = sld [smem:[#allocation0]]
  $region34: #{residual_block_forward.7} parent=0
    _
  %s9 = ssub.s32 1, %s7
  %s10 = scalar_select 0, %s9, %s7
  // Predicated region
  $region2: #{residual_block_forward.7} parent=0 // pred_check
    _
  $region3: #{residual_block_forward.7} parent=0 // pred_check_branch
    %12 = sbr.rel (0) target = $region5
  $region4: #{residual_block_forward.7} parent=0 // pred_region
    _
  $region5: #{residual_block_forward.7} parent=0 // pred_fallthru
    _
  // Predicated region
  $region6: #{residual_block_forward.7} parent=0 // pred_check
    _
  $region7: #{residual_block_forward.7} parent=0 // pred_check_branch
    %14 = sbr.rel (0) target = $region9
  $region8: #{residual_block_forward.7} parent=0 // pred_region
    _
  $region9: #{residual_block_forward.7} parent=0 // pred_fallthru
    _
  // Predicated region
  $region10: #{residual_block_forward.7} parent=0 // pred_check
    _
  $region11: #{residual_block_forward.7} parent=0 // pred_check_branch
    %16 = sbr.rel (0) target = $region13
  $region12: #{residual_block_forward.7} parent=0 // pred_region
    _
  $region13: #{residual_block_forward.7} parent=0 // pred_fallthru
    _
  // Predicated region
  $region14: #{residual_block_forward.7} parent=0 // pred_check
    _
  $region15: #{residual_block_forward.7} parent=0 // pred_check_branch
    %18 = sbr.rel (0) target = $region17
  $region16: #{residual_block_forward.7} parent=0 // pred_region
    _
  $region17: #{residual_block_forward.7} parent=0 // pred_fallthru
    _
  // Predicated region
  $region18: #{residual_block_forward.7} parent=0 // pred_check
    _
  $region19: #{residual_block_forward.7} parent=0 // pred_check_branch
    %20 = sbr.rel (0) target = $region21
  $region20: #{residual_block_forward.7} parent=0 // pred_region
    _
  $region21: #{residual_block_forward.7} parent=0 // pred_fallthru
    _
  // Predicated region
  $region22: #{residual_block_forward.7} parent=0 // pred_check
    _
  $region23: #{residual_block_forward.7} parent=0 // pred_check_branch
    %22 = sbr.rel (0) target = $region25
  $region24: #{residual_block_forward.7} parent=0 // pred_region
    _
  $region25: #{residual_block_forward.7} parent=0 // pred_fallthru
    _
  %v23 = vld [vmem:[%s0] sm:$0xff]
  %v24 = vld [vmem:[%s0 + $0x8] sm:$0xff]
  %v25 = vld [vmem:[%s1] sm:$0x1]
  %v27 = vlaneseq
  %v28 = vshrl.u32 %v27, 7
  %v29 = vsub.s32 0, %v28
  %v30 = vrot.slane %v25, %v29
  %v32 = vmul.f32 %v23, %v30
  %v33 = vmul.f32 %v24, %v30
  %v34 = vld [vmem:[%s2] sm:$0x1]
  %v36 = vlaneseq
  %v37 = vshrl.u32 %v36, 7
  %v38 = vsub.s32 0, %v37
  %v39 = vrot.slane %v34, %v38
  %v41 = vadd.f32 %v32, %v39
  %v42 = vadd.f32 %v33, %v39
  %v43 = vld [vmem:[%s3] sm:$0xff]
  %v44 = vld [vmem:[%s3 + $0x8] sm:$0xff]
  %v45 = vld [vmem:[%s4] sm:$0x1]
  %v47 = vlaneseq
  %v48 = vshrl.u32 %v47, 7
  %v49 = vsub.s32 0, %v48
  %v50 = vrot.slane %v45, %v49
  %v52 = vmul.f32 %v43, %v50
  %v53 = vmul.f32 %v44, %v50
  %v54 = vadd.f32 %v41, %v52
  %v55 = vadd.f32 %v42, %v53
  %v56 = vld [vmem:[%s5] sm:$0x1]
  %v58 = vlaneseq
  %v59 = vshrl.u32 %v58, 7
  %v60 = vsub.s32 0, %v59
  %v61 = vrot.slane %v56, %v60
  %v63 = vadd.f32 %v54, %v61
  %v64 = vadd.f32 %v55, %v61
  %v65 = vmax.f32 %v63, 0.0
  %v66 = vmax.f32 %v64, 0.0
  %vm67 = vcmask 523264
  %68 = vst.msk [vmem:[%s6] sm:$0xff] %vm67, %v65
  %69 = vst.msk [vmem:[%s6 + $0x8] sm:$0xff] %vm67, %v66
  // Predicated region
  $region26: #{residual_block_forward.7} parent=0 // pred_check
    _
  $region27: #{residual_block_forward.7} parent=0 // pred_check_branch
    %71 = sbr.rel (0) target = $region29
  $region28: #{residual_block_forward.7} parent=0 // pred_region
    _
  $region29: #{residual_block_forward.7} parent=0 // pred_fallthru
    _
  // Predicated region
  $region30: #{residual_block_forward.7} parent=0 // pred_check
    _
  $region31: #{residual_block_forward.7} parent=0 // pred_check_branch
    %73 = sbr.rel (0) target = $region33
  $region32: #{residual_block_forward.7} parent=0 // pred_region
    _
  $region33: #{residual_block_forward.7} parent=0 // pred_fallthru
    _

// kernel: residual_block_forward.5
$region0: #{residual_block_forward.5}
  #allocation0 [shape = 'u32[]', space=smem, size = 0x4, offset = 0x4, fixed_abs, tag = 'smem constant byte address 0x4 - core index']
  #allocation1 [shape = 'u32[144,128]{1,0:T(1,128)}', space=vmem, size = 0x12000, scoped, tag = 'internal scratch']
  #allocation2 [shape = 'f32[64,72]{1,0:T(8,128)}', space=vmem, size = 0x8000, scoped, tag = 'scratch operand']
  #allocation3 [shape = 'f32[10,10,8]{2,1,0:T(8,128)}', space=vmem, size = 0x14000, scoped, tag = 'scratch operand']
  %s0 = inlined_call_operand.vmem [shape: f32[2,10,10,8], index: 0, kind: input, shape index: {}]
  %s1 = inlined_call_operand.vmem [shape: f32[72,128], index: 1, kind: input, shape index: {}]
  %s2 = inlined_call_operand.vmem [shape: f32[1,128], index: 2, kind: input, shape index: {}]
  %s3 = inlined_call_operand.vmem [shape: f32[1,8], index: 3, kind: input, shape index: {}]
  %s4 = inlined_call_operand.vmem [shape: f32[1,8], index: 4, kind: input, shape index: {}]
  %s5 = inlined_call_operand.vmem [shape: f32[2,64,128], index: 5, kind: output, shape index: {0}]
  %s6 = inlined_call_operand.vmem [shape: f32[2,2,128], index: 6, kind: output, shape index: {1}]
  %7 = xla_tuple %s5, %s6
  %s8 = sld [smem:[#allocation0]]
  $region61: #{residual_block_forward.5} parent=0
    _
  %s10 = ssub.s32 1, %s8
  %s11 = scalar_select 0, %s10, %s8
  loop: start=0, step=1, limit=4
  $region2: #{residual_block_forward.5} parent=0 // loop_pre_header
    _
  $region3: #{residual_block_forward.5} parent=0 // loop_header
    %s13 = sphi 0, %s17
    %p14 = scmp.ge.s32.totalorder %s13, 4
    %s23 = sphi 0, %s25
    %s26 = sphi 0, %s23
    %s27 = sphi 0, %s26
    %s43 = sphi 0, %s27
    %s47 = sphi 0, %s47
    %s49 = sphi 0, %s47
    %s50 = sphi 0, %s49
    %s64 = sphi 0, %s50
    %s68 = sphi 0, %s68
    %s70 = sphi 0, %s68
    %s71 = sphi 0, %s70
    %s85 = sphi 0, %s71
    %s89 = sphi 0, %s89
    %s91 = sphi 0, %s89
    %s92 = sphi 0, %s91
    %s106 = sphi 0, %s92
    %s110 = sphi 0, %s110
    %s112 = sphi 0, %s110
    %s113 = sphi 0, %s112
    %s127 = sphi 0, %s113
    %s133 = sphi 0, %s135
    %s136 = sphi 0, %s133
    %s137 = sphi 0, %s136
    %s153 = sphi 0, %s137
    %s159 = sphi 0, %s161
    %s162 = sphi 0, %s159
    %s163 = sphi 0, %s162
    %s179 = sphi 0, %s163
  $region4: #{residual_block_forward.5} parent=0 // loop_header_branch
    %16 = sbr.rel (%p14) target = $region8
  $region5: #{residual_block_forward.5} parent=0 // loop_body
    %s18 = ssub.s32 %s13, 1
    %s19 = ssub.s32 %s13, 2
    %s20 = sadd.s32 %s13, 1
    %s21 = ssub.s32 %s13, %s20
    %p22 = scmp.eq.s32.totalorder %s21, 0
    %s24 = sadd.s32 %s23, 1
    %s25 = scalar_select %p22, %s23, %s24
    %p28 = pneg %p22
    %p29 = scmp.eq.s32.totalorder %s13, 1
    %p30 = por %p28, %p29
    %p31 = scmp.ne.s32.totalorder %s23, %s26
    %p32 = scmp.eq.s32.totalorder %s13, 0
    %p33 = por %p31, %p32
    %p34 = scmp.ne.s32.totalorder %s23, %s26
    %p35 = scmp.eq.s32.totalorder %s18, 1
    %p36 = por %p34, %p35
    %p37 = scmp.ne.s32.totalorder %s26, %s27
    %p38 = scmp.eq.s32.totalorder %s18, 0
    %p39 = por %p37, %p38
    %p40 = scmp.ne.s32.totalorder %s26, %s27
    %p41 = scmp.eq.s32.totalorder %s19, 1
    %p42 = por %p40, %p41
    %p44 = scmp.ne.s32.totalorder %s27, %s43
    %p45 = scmp.eq.s32.totalorder %s19, 0
    %p46 = por %p44, %p45
    %s48 = sadd.s32 %s47, 1
    %p51 = scmp.eq.s32.totalorder %s13, 1
    %p52 = scmp.ne.s32.totalorder %s47, %s49
    %p53 = scmp.eq.s32.totalorder %s13, 0
    %p54 = por %p52, %p53
    %p55 = scmp.ne.s32.totalorder %s47, %s49
    %p56 = scmp.eq.s32.totalorder %s18, 1
    %p57 = por %p55, %p56
    %p58 = scmp.ne.s32.totalorder %s49, %s50
    %p59 = scmp.eq.s32.totalorder %s18, 0
    %p60 = por %p58, %p59
    %p61 = scmp.ne.s32.totalorder %s49, %s50
    %p62 = scmp.eq.s32.totalorder %s19, 1
    %p63 = por %p61, %p62
    %p65 = scmp.ne.s32.totalorder %s50, %s64
    %p66 = scmp.eq.s32.totalorder %s19, 0
    %p67 = por %p65, %p66
    %s69 = sadd.s32 %s68, 1
    %p72 = scmp.eq.s32.totalorder %s13, 1
    %p73 = scmp.ne.s32.totalorder %s68, %s70
    %p74 = scmp.eq.s32.totalorder %s13, 0
    %p75 = por %p73, %p74
    %p76 = scmp.ne.s32.totalorder %s68, %s70
    %p77 = scmp.eq.s32.totalorder %s18, 1
    %p78 = por %p76, %p77
    %p79 = scmp.ne.s32.totalorder %s70, %s71
    %p80 = scmp.eq.s32.totalorder %s18, 0
    %p81 = por %p79, %p80
    %p82 = scmp.ne.s32.totalorder %s70, %s71
    %p83 = scmp.eq.s32.totalorder %s19, 1
    %p84 = por %p82, %p83
    %p86 = scmp.ne.s32.totalorder %s71, %s85
    %p87 = scmp.eq.s32.totalorder %s19, 0
    %p88 = por %p86, %p87
    %s90 = sadd.s32 %s89, 1
    %p93 = scmp.eq.s32.totalorder %s13, 1
    %p94 = scmp.ne.s32.totalorder %s89, %s91
    %p95 = scmp.eq.s32.totalorder %s13, 0
    %p96 = por %p94, %p95
    %p97 = scmp.ne.s32.totalorder %s89, %s91
    %p98 = scmp.eq.s32.totalorder %s18, 1
    %p99 = por %p97, %p98
    %p100 = scmp.ne.s32.totalorder %s91, %s92
    %p101 = scmp.eq.s32.totalorder %s18, 0
    %p102 = por %p100, %p101
    %p103 = scmp.ne.s32.totalorder %s91, %s92
    %p104 = scmp.eq.s32.totalorder %s19, 1
    %p105 = por %p103, %p104
    %p107 = scmp.ne.s32.totalorder %s92, %s106
    %p108 = scmp.eq.s32.totalorder %s19, 0
    %p109 = por %p107, %p108
    %s111 = sadd.s32 %s110, 1
    %p114 = scmp.eq.s32.totalorder %s13, 1
    %p115 = scmp.ne.s32.totalorder %s110, %s112
    %p116 = scmp.eq.s32.totalorder %s13, 0
    %p117 = por %p115, %p116
    %p118 = scmp.ne.s32.totalorder %s110, %s112
    %p119 = scmp.eq.s32.totalorder %s18, 1
    %p120 = por %p118, %p119
    %p121 = scmp.ne.s32.totalorder %s112, %s113
    %p122 = scmp.eq.s32.totalorder %s18, 0
    %p123 = por %p121, %p122
    %p124 = scmp.ne.s32.totalorder %s112, %s113
    %p125 = scmp.eq.s32.totalorder %s19, 1
    %p126 = por %p124, %p125
    %p128 = scmp.ne.s32.totalorder %s113, %s127
    %p129 = scmp.eq.s32.totalorder %s19, 0
    %p130 = por %p128, %p129
    %s131 = ssub.s32 %s13, %s20
    %p132 = scmp.eq.s32.totalorder %s131, 0
    %s134 = sadd.s32 %s133, 1
    %s135 = scalar_select %p132, %s133, %s134
    %p138 = pneg %p132
    %p139 = scmp.eq.s32.totalorder %s13, 1
    %p140 = por %p138, %p139
    %p141 = scmp.ne.s32.totalorder %s133, %s136
    %p142 = scmp.eq.s32.totalorder %s13, 0
    %p143 = por %p141, %p142
    %p144 = scmp.ne.s32.totalorder %s133, %s136
    %p145 = scmp.eq.s32.totalorder %s18, 1
    %p146 = por %p144, %p145
    %p147 = scmp.ne.s32.totalorder %s136, %s137
    %p148 = scmp.eq.s32.totalorder %s18, 0
    %p149 = por %p147, %p148
    %p150 = scmp.ne.s32.totalorder %s136, %s137
    %p151 = scmp.eq.s32.totalorder %s19, 1
    %p152 = por %p150, %p151
    %p154 = scmp.ne.s32.totalorder %s137, %s153
    %p155 = scmp.eq.s32.totalorder %s19, 0
    %p156 = por %p154, %p155
    %s157 = ssub.s32 %s13, %s20
    %p158 = scmp.eq.s32.totalorder %s157, 0
    %s160 = sadd.s32 %s159, 1
    %s161 = scalar_select %p158, %s159, %s160
    %p164 = pneg %p158
    %p165 = scmp.eq.s32.totalorder %s13, 1
    %p166 = por %p164, %p165
    %p167 = scmp.ne.s32.totalorder %s159, %s162
    %p168 = scmp.eq.s32.totalorder %s13, 0
    %p169 = por %p167, %p168
    %p170 = scmp.ne.s32.totalorder %s159, %s162
    %p171 = scmp.eq.s32.totalorder %s18, 1
    %p172 = por %p170, %p171
    %p173 = scmp.ne.s32.totalorder %s162, %s163
    %p174 = scmp.eq.s32.totalorder %s18, 0
    %p175 = por %p173, %p174
    %p176 = scmp.ne.s32.totalorder %s162, %s163
    %p177 = scmp.eq.s32.totalorder %s19, 1
    %p178 = por %p176, %p177
    %p180 = scmp.ne.s32.totalorder %s163, %s179
    %p181 = scmp.eq.s32.totalorder %s19, 0
    %p182 = por %p180, %p181
    %p183 = scmp.le.s32.totalorder 1, %s13
    %p184 = scmp.lt.s32.totalorder %s13, 3
    %p185 = pnand %p183, %p184
    %p186 = pneg %p185
    // Predicated region
    $region9: #{residual_block_forward.5} parent=5 // pred_check
      _
    $region10: #{residual_block_forward.5} parent=5 // pred_check_branch
      %188 = sbr.rel (%p185) target = $region12
    $region11: #{residual_block_forward.5} parent=5 // pred_region
      %s189 = ssub.s32 %s13, 1
      // Predicated region
      $region13: #{residual_block_forward.5} parent=11 // pred_check
        %p190 = pneg %p60
      $region14: #{residual_block_forward.5} parent=11 // pred_check_branch
        %192 = sbr.rel (%p190) target = $region16
      $region15: #{residual_block_forward.5} parent=11 // pred_region
        _
      $region16: #{residual_block_forward.5} parent=11 // pred_fallthru
        _
      // Predicated region
      $region17: #{residual_block_forward.5} parent=11 // pred_check
        %p193 = pneg %p81
      $region18: #{residual_block_forward.5} parent=11 // pred_check_branch
        %195 = sbr.rel (%p193) target = $region20
      $region19: #{residual_block_forward.5} parent=11 // pred_region
        _
      $region20: #{residual_block_forward.5} parent=11 // pred_fallthru
        _
      // Predicated region
      $region21: #{residual_block_forward.5} parent=11 // pred_check
        %p196 = pneg %p102
      $region22: #{residual_block_forward.5} parent=11 // pred_check_branch
        %198 = sbr.rel (%p196) target = $region24
      $region23: #{residual_block_forward.5} parent=11 // pred_region
        _
      $region24: #{residual_block_forward.5} parent=11 // pred_fallthru
        _
      // Predicated region
      $region25: #{residual_block_forward.5} parent=11 // pred_check
        %p199 = pneg %p123
      $region26: #{residual_block_forward.5} parent=11 // pred_check_branch
        %201 = sbr.rel (%p199) target = $region28
      $region27: #{residual_block_forward.5} parent=11 // pred_region
        _
      $region28: #{residual_block_forward.5} parent=11 // pred_fallthru
        _
    $region12: #{residual_block_forward.5} parent=5 // pred_fallthru
      _
    %p202 = scmp.lt.s32.totalorder %s13, 2
    // Predicated region
    $region29: #{residual_block_forward.5} parent=5 // pred_check
      %p203 = pneg %p202
    $region30: #{residual_block_forward.5} parent=5 // pred_check_branch
      %205 = sbr.rel (%p203) target = $region32
    $region31: #{residual_block_forward.5} parent=5 // pred_region
      // Predicated region
      $region33: #{residual_block_forward.5} parent=31 // pred_check
        %p206 = pneg %p33
      $region34: #{residual_block_forward.5} parent=31 // pred_check_branch
        %208 = sbr.rel (%p206) target = $region36
      $region35: #{residual_block_forward.5} parent=31 // pred_region
        %p209 = scmp.lt.s32.totalorder %s13, 1
        %s210 = scalar_select %p209, %s13, 1
        %s211 = smul.addr %s210, 20
        %s212 = smul.addr %s211, 8
        %s213 = scalar_lea.vmem %s0, %s212
      $region36: #{residual_block_forward.5} parent=31 // pred_fallthru
        _
    $region32: #{residual_block_forward.5} parent=5 // pred_fallthru
      _
    %p214 = scmp.le.s32.totalorder 1, %s13
    %p215 = scmp.lt.s32.totalorder %s13, 3
    %p216 = pnand %p214, %p215
    %p217 = pneg %p216
    // Predicated region
    $region37: #{residual_block_forward.5} parent=5 // pred_check
      _
    $region38: #{residual_block_forward.5} parent=5 // pred_check_branch
      %219 = sbr.rel (%p216) target = $region40
    $region39: #{residual_block_forward.5} parent=5 // pred_region
      %s220 = ssub.s32 %s13, 1
      %p221 = scmp.lt.s32.totalorder %s18, 1
      %s222 = scalar_select %p221, %s18, 1
      %s223 = smul.addr %s222, 20
      %s224 = smul.addr %s223, 8
      %s225 = scalar_lea.vmem %s0, %s224
      %p226 = pneg %p39
      %p227 = pneg %p36
      %p228 = pneg %p60
      %p229 = pneg %p57
      %p230 = pneg %p81
      %p231 = pneg %p78
      %p232 = pneg %p102
      %p233 = pneg %p99
      %p234 = pneg %p123
      %p235 = pneg %p120
      %p236 = pneg %p149
      %p237 = pneg %p146
      %p238 = scmp.lt.s32.totalorder %s18, 1
      %s239 = scalar_select %p238, %s18, 1
      %s240 = smul.addr %s239, 8
      %s241 = smul.addr %s240, 8
      %s242 = scalar_lea.vmem %s5, %s241
      %p243 = pneg %p175
      %p244 = pneg %p172
      %p245 = scmp.lt.s32.totalorder %s18, 1
      %s246 = scalar_select %p245, %s18, 1
      %s247 = smul.addr %s246, 2
      %s248 = scalar_lea.vmem %s6, %s247
      %p249 = scmp.lt.s32.totalorder %s18, 1
      %s250 = scalar_select %p249, %s18, 1
      %s251 = smul.addr %s250, 20
      %s252 = smul.addr %s251, 8
      %s253 = scalar_lea.vmem %s0, %s252
      %p254 = scmp.lt.s32.totalorder %s18, 1
      %s255 = scalar_select %p254, %s18, 1
      %s256 = smul.addr %s255, 8
      %s257 = smul.addr %s256, 8
      %s258 = scalar_lea.vmem %s5, %s257
      %p259 = scmp.lt.s32.totalorder %s18, 1
      %s260 = scalar_select %p259, %s18, 1
      %s261 = smul.addr %s260, 2
      %s262 = scalar_lea.vmem %s6, %s261
      %v263 = vld [vmem:[%s3] sm:$0x1]
      %v264 = vld [vmem:[%s4] sm:$0x1]
      %v265 = vld [vmem:[%s253] sm:$0xff]
      %v266 = vld [vmem:[%s253 + $0x8] sm:$0x3]
      %v267 = vld [vmem:[%s253 + $0x10] sm:$0xff]
      %v268 = vld [vmem:[%s253 + $0x18] sm:$0x3]
      %v269 = vld [vmem:[%s253 + $0x20] sm:$0xff]
      %v270 = vld [vmem:[%s253 + $0x28] sm:$0x3]
      %v271 = vld [vmem:[%s253 + $0x30] sm:$0xff]
      %v272 = vld [vmem:[%s253 + $0x38] sm:$0x3]
      %v273 = vld [vmem:[%s253 + $0x40] sm:$0xff]
      %v274 = vld [vmem:[%s253 + $0x48] sm:$0x3]
      %v275 = vld [vmem:[%s253 + $0x50] sm:$0xff]
      %v276 = vld [vmem:[%s253 + $0x58] sm:$0x3]
      %v277 = vld [vmem:[%s253 + $0x60] sm:$0xff]
      %v278 = vld [vmem:[%s253 + $0x68] sm:$0x3]
      %v279 = vld [vmem:[%s253 + $0x70] sm:$0xff]
      %v280 = vld [vmem:[%s253 + $0x78] sm:$0x3]
      %v281 = vld [vmem:[%s253 + $0x80] sm:$0xff]
      %v282 = vld [vmem:[%s253 + $0x88] sm:$0x3]
      %v283 = vld [vmem:[%s253 + $0x90] sm:$0xff]
      %v284 = vld [vmem:[%s253 + $0x98] sm:$0x3]
      %v286 = vlaneseq
      %v287 = vshrl.u32 %v286, 7
      %v288 = vsub.s32 0, %v287
      %v289 = vrot.slane %v263, %v288
      %v291 = vmul.f32 %v265, %v289
      %v292 = vmul.f32 %v266, %v289
      %v293 = vmul.f32 %v267, %v289
      %v294 = vmul.f32 %v268, %v289
      %v295 = vmul.f32 %v269, %v289
      %v296 = vmul.f32 %v270, %v289
      %v297 = vmul.f32 %v271, %v289
      %v298 = vmul.f32 %v272, %v289
      %v299 = vmul.f32 %v273, %v289
      %v300 = vmul.f32 %v274, %v289
      %v301 = vmul.f32 %v275, %v289
      %v302 = vmul.f32 %v276, %v289
      %v303 = vmul.f32 %v277, %v289
      %v304 = vmul.f32 %v278, %v289
      %v305 = vmul.f32 %v279, %v289
      %v306 = vmul.f32 %v280, %v289
      %v307 = vmul.f32 %v281, %v289
      %v308 = vmul.f32 %v282, %v289
      %v309 = vmul.f32 %v283, %v289
      %v310 = vmul.f32 %v284, %v289
      %v312 = vlaneseq
      %v313 = vshrl.u32 %v312, 7
      %v314 = vsub.s32 0, %v313
      %v315 = vrot.slane %v264, %v314
      %v317 = vadd.f32 %v291, %v315
      %v318 = vadd.f32 %v292, %v315
      %v319 = vadd.f32 %v293, %v315
      %v320 = vadd.f32 %v294, %v315
      %v321 = vadd.f32 %v295, %v315
      %v322 = vadd.f32 %v296, %v315
      %v323 = vadd.f32 %v297, %v315
      %v324 = vadd.f32 %v298, %v315
      %v325 = vadd.f32 %v299, %v315
      %v326 = vadd.f32 %v300, %v315
      %v327 = vadd.f32 %v301, %v315
      %v328 = vadd.f32 %v302, %v315
      %v329 = vadd.f32 %v303, %v315
      %v330 = vadd.f32 %v304, %v315
      %v331 = vadd.f32 %v305, %v315
      %v332 = vadd.f32 %v306, %v315
      %v333 = vadd.f32 %v307, %v315
      %v334 = vadd.f32 %v308, %v315
      %v335 = vadd.f32 %v309, %v315
      %v336 = vadd.f32 %v310, %v315
      %v337 = vmax.f32 %v317, 0.0
      %v338 = vmax.f32 %v318, 0.0
      %v339 = vmax.f32 %v319, 0.0
      %v340 = vmax.f32 %v320, 0.0
      %v341 = vmax.f32 %v321, 0.0
      %v342 = vmax.f32 %v322, 0.0
      %v343 = vmax.f32 %v323, 0.0
      %v344 = vmax.f32 %v324, 0.0
      %v345 = vmax.f32 %v325, 0.0
      %v346 = vmax.f32 %v326, 0.0
      %v347 = vmax.f32 %v327, 0.0
      %v348 = vmax.f32 %v328, 0.0
      %v349 = vmax.f32 %v329, 0.0
      %v350 = vmax.f32 %v330, 0.0
      %v351 = vmax.f32 %v331, 0.0
      %v352 = vmax.f32 %v332, 0.0
      %v353 = vmax.f32 %v333, 0.0
      %v354 = vmax.f32 %v334, 0.0
      %v355 = vmax.f32 %v335, 0.0
      %v356 = vmax.f32 %v336, 0.0
      %v357 = vlaneseq
      %v358 = vshrl.u32 %v357, 7
      %v359 = vadd.s32 %v358, 8
      %vm360 = vcmp.ge.s32.totalorder %v358, 1
      %vm361 = vcmp.ge.s32.totalorder %v359, 1
      %vm362 = vmand 0, %vm360
      %vm363 = vmand 0, %vm361
      %vm364 = vmand 1, %vm360
      %vm365 = vmand 1, %vm361
      %vm366 = vcmp.le.s32.totalorder %v358, 8
      %vm367 = vcmp.le.s32.totalorder %v359, 8
      %vm368 = vmand %vm362, %vm366
      %vm369 = vmand %vm363, %vm367
      %vm370 = vmand %vm364, %vm366
      %vm371 = vmand %vm365, %vm367
      %v372 = vsel %vm368, 1, 0
      %v373 = vsel %vm369, 1, 0
      %v374 = vsel %vm370, 1, 0
      %v375 = vsel %vm371, 1, 0
      %vm376 = vcmp.eq.s32.totalorder %v372, 1
      %vm377 = vcmp.eq.s32.totalorder %v373, 1
      %vm378 = vcmp.eq.s32.totalorder %v374, 1
      %vm379 = vcmp.eq.s32.totalorder %v375, 1
      %v380 = vsel %vm376, %v337, 0.0
      %v381 = vsel %vm377, %v338, 0.0
      %v382 = vsel %vm378, %v339, 0.0
      %v383 = vsel %vm379, %v340, 0.0
      %v384 = vsel %vm378, %v341, 0.0
      %v385 = vsel %vm379, %v342, 0.0
      %v386 = vsel %vm378, %v343, 0.0
      %v387 = vsel %vm379, %v344, 0.0
      %v388 = vsel %vm378, %v345, 0.0
      %v389 = vsel %vm379, %v346, 0.0
      %v390 = vsel %vm378, %v347, 0.0
      %v391 = vsel %vm379, %v348, 0.0
      %v392 = vsel %vm378, %v349, 0.0
      %v393 = vsel %vm379, %v350, 0.0
      %v394 = vsel %vm378, %v351, 0.0
      %v395 = vsel %vm379, %v352, 0.0
      %v396 = vsel %vm378, %v353, 0.0
      %v397 = vsel %vm379, %v354, 0.0
      %v398 = vsel %vm376, %v355, 0.0
      %v399 = vsel %vm377, %v356, 0.0
      %vm400 = vcmask 64512
      %401 = vst.msk [vmem:[#allocation3] sm:$0xff] %vm400, %v380
      %vm402 = vcmask 58368
      %403 = vst.msk [vmem:[#allocation3 + $0x8] sm:$0x3] %vm402, %v381
      %404 = vst.msk [vmem:[#allocation3 + $0x10] sm:$0xff] %vm400, %v382
      %405 = vst.msk [vmem:[#allocation3 + $0x18] sm:$0x3] %vm402, %v383
      %406 = vst.msk [vmem:[#allocation3 + $0x20] sm:$0xff] %vm400, %v384
      %407 = vst.msk [vmem:[#allocation3 + $0x28] sm:$0x3] %vm402, %v385
      %408 = vst.msk [vmem:[#allocation3 + $0x30] sm:$0xff] %vm400, %v386
      %409 = vst.msk [vmem:[#allocation3 + $0x38] sm:$0x3] %vm402, %v387
      %410 = vst.msk [vmem:[#allocation3 + $0x40] sm:$0xff] %vm400, %v388
      %411 = vst.msk [vmem:[#allocation3 + $0x48] sm:$0x3] %vm402, %v389
      %412 = vst.msk [vmem:[#allocation3 + $0x50] sm:$0xff] %vm400, %v390
      %413 = vst.msk [vmem:[#allocation3 + $0x58] sm:$0x3] %vm402, %v391
      %414 = vst.msk [vmem:[#allocation3 + $0x60] sm:$0xff] %vm400, %v392
      %415 = vst.msk [vmem:[#allocation3 + $0x68] sm:$0x3] %vm402, %v393
      %416 = vst.msk [vmem:[#allocation3 + $0x70] sm:$0xff] %vm400, %v394
      %417 = vst.msk [vmem:[#allocation3 + $0x78] sm:$0x3] %vm402, %v395
      %418 = vst.msk [vmem:[#allocation3 + $0x80] sm:$0xff] %vm400, %v396
      %419 = vst.msk [vmem:[#allocation3 + $0x88] sm:$0x3] %vm402, %v397
      %420 = vst.msk [vmem:[#allocation3 + $0x90] sm:$0xff] %vm400, %v398
      %421 = vst.msk [vmem:[#allocation3 + $0x98] sm:$0x3] %vm402, %v399
      %v422 = vld [vmem:[#allocation3] sm:$0xff]
      %v423 = vld [vmem:[#allocation3 + $0x10] sm:$0xff]
      %v424 = vld [vmem:[#allocation3 + $0x20] sm:$0xff]
      %v425 = vld [vmem:[#allocation3 + $0x30] sm:$0xff]
      %v426 = vld [vmem:[#allocation3 + $0x40] sm:$0xff]
      %v427 = vld [vmem:[#allocation3 + $0x50] sm:$0xff]
      %v428 = vld [vmem:[#allocation3 + $0x60] sm:$0xff]
      %v429 = vld [vmem:[#allocation3 + $0x70] sm:$0xff]
      %430 = vst.msk [vmem:[#allocation2] sm:$0xff] %vm400, %v422
      %431 = vst.msk [vmem:[#allocation2 + $0x8] sm:$0xff] %vm400, %v423
      %432 = vst.msk [vmem:[#allocation2 + $0x10] sm:$0xff] %vm400, %v424
      %433 = vst.msk [vmem:[#allocation2 + $0x18] sm:$0xff] %vm400, %v425
      %434 = vst.msk [vmem:[#allocation2 + $0x20] sm:$0xff] %vm400, %v426
      %435 = vst.msk [vmem:[#allocation2 + $0x28] sm:$0xff] %vm400, %v427
      %436 = vst.msk [vmem:[#allocation2 + $0x30] sm:$0xff] %vm400, %v428
      %437 = vst.msk [vmem:[#allocation2 + $0x38] sm:$0xff] %vm400, %v429
      %v438 = vld [vmem:[#allocation3 + $0x1] sm:$0xff]
      %v439 = vld [vmem:[#allocation3 + $0x11] sm:$0xff]
      %v440 = vld [vmem:[#allocation3 + $0x21] sm:$0xff]
      %v441 = vld [vmem:[#allocation3 + $0x31] sm:$0xff]
      %v442 = vld [vmem:[#allocation3 + $0x41] sm:$0xff]
      %v443 = vld [vmem:[#allocation3 + $0x51] sm:$0xff]
      %v444 = vld [vmem:[#allocation3 + $0x61] sm:$0xff]
      %v445 = vld [vmem:[#allocation3 + $0x71] sm:$0xff]
      %454 = vrot.lane.b32.xlu0 %v438, 8
      %v455 = vpop.permute.xlu0 %454
      %456 = vrot.lane.b32.xlu0 %v439, 8
      %v457 = vpop.permute.xlu0 %456
      %458 = vrot.lane.b32.xlu0 %v440, 8
      %v459 = vpop.permute.xlu0 %458
      %460 = vrot.lane.b32.xlu0 %v441, 8
      %v461 = vpop.permute.xlu0 %460
      %462 = vrot.lane.b32.xlu0 %v442, 8
      %v463 = vpop.permute.xlu0 %462
      %464 = vrot.lane.b32.xlu0 %v443, 8
      %v465 = vpop.permute.xlu0 %464
      %466 = vrot.lane.b32.xlu0 %v444, 8
      %v467 = vpop.permute.xlu0 %466
      %468 = vrot.lane.b32.xlu0 %v445, 8
      %v469 = vpop.permute.xlu0 %468
      %vm478 = vcmask 130112
      %479 = vst.msk [vmem:[#allocation2] sm:$0xff] %vm478, %v455
      %480 = vst.msk [vmem:[#allocation2 + $0x8] sm:$0xff] %vm478, %v457
      %481 = vst.msk [vmem:[#allocation2 + $0x10] sm:$0xff] %vm478, %v459
      %482 = vst.msk [vmem:[#allocation2 + $0x18] sm:$0xff] %vm478, %v461
      %483 = vst.msk [vmem:[#allocation2 + $0x20] sm:$0xff] %vm478, %v463
      %484 = vst.msk [vmem:[#allocation2 + $0x28] sm:$0xff] %vm478, %v465
      %485 = vst.msk [vmem:[#allocation2 + $0x30] sm:$0xff] %vm478, %v467
      %486 = vst.msk [vmem:[#allocation2 + $0x38] sm:$0xff] %vm478, %v469
      %v487 = vld [vmem:[#allocation3 + $0x2] sm:$0xff]
      %v488 = vld [vmem:[#allocation3 + $0x12] sm:$0xff]
      %v489 = vld [vmem:[#allocation3 + $0x22] sm:$0xff]
      %v490 = vld [vmem:[#allocation3 + $0x32] sm:$0xff]
      %v491 = vld [vmem:[#allocation3 + $0x42] sm:$0xff]
      %v492 = vld [vmem:[#allocation3 + $0x52] sm:$0xff]
      %v493 = vld [vmem:[#allocation3 + $0x62] sm:$0xff]
      %v494 = vld [vmem:[#allocation3 + $0x72] sm:$0xff]
      %503 = vrot.lane.b32.xlu0 %v487, 16
      %v504 = vpop.permute.xlu0 %503
      %505 = vrot.lane.b32.xlu0 %v488, 16
      %v506 = vpop.permute.xlu0 %505
      %507 = vrot.lane.b32.xlu0 %v489, 16
      %v508 = vpop.permute.xlu0 %507
      %509 = vrot.lane.b32.xlu0 %v490, 16
      %v510 = vpop.permute.xlu0 %509
      %511 = vrot.lane.b32.xlu0 %v491, 16
      %v512 = vpop.permute.xlu0 %511
      %513 = vrot.lane.b32.xlu0 %v492, 16
      %v514 = vpop.permute.xlu0 %513
      %515 = vrot.lane.b32.xlu0 %v493, 16
      %v516 = vpop.permute.xlu0 %515
      %517 = vrot.lane.b32.xlu0 %v494, 16
      %v518 = vpop.permute.xlu0 %517
      %vm527 = vcmask 195712
      %528 = vst.msk [vmem:[#allocation2] sm:$0xff] %vm527, %v504
      %529 = vst.msk [vmem:[#allocation2 + $0x8] sm:$0xff] %vm527, %v506
      %530 = vst.msk [vmem:[#allocation2 + $0x10] sm:$0xff] %vm527, %v508
      %531 = vst.msk [vmem:[#allocation2 + $0x18] sm:$0xff] %vm527, %v510
      %532 = vst.msk [vmem:[#allocation2 + $0x20] sm:$0xff] %vm527, %v512
      %533 = vst.msk [vmem:[#allocation2 + $0x28] sm:$0xff] %vm527, %v514
      %534 = vst.msk [vmem:[#allocation2 + $0x30] sm:$0xff] %vm527, %v516
      %535 = vst.msk [vmem:[#allocation2 + $0x38] sm:$0xff] %vm527, %v518
      %s536 = scalar_lea.vmem [#allocation3], 16
      %v537 = vld [vmem:[%s536] sm:$0xff]
      %v538 = vld [vmem:[%s536 + $0x10] sm:$0xff]
      %v539 = vld [vmem:[%s536 + $0x20] sm:$0xff]
      %v540 = vld [vmem:[%s536 + $0x30] sm:$0xff]
      %v541 = vld [vmem:[%s536 + $0x40] sm:$0xff]
      %v542 = vld [vmem:[%s536 + $0x50] sm:$0xff]
      %v543 = vld [vmem:[%s536 + $0x60] sm:$0xff]
      %v544 = vld [vmem:[%s536 + $0x70] sm:$0xff]
      %553 = vrot.lane.b32.xlu0 %v537, 24
      %v554 = vpop.permute.xlu0 %553
      %555 = vrot.lane.b32.xlu0 %v538, 24
      %v556 = vpop.permute.xlu0 %555
      %557 = vrot.lane.b32.xlu0 %v539, 24
      %v558 = vpop.permute.xlu0 %557
      %559 = vrot.lane.b32.xlu0 %v540, 24
      %v560 = vpop.permute.xlu0 %559
      %561 = vrot.lane.b32.xlu0 %v541, 24
      %v562 = vpop.permute.xlu0 %561
      %563 = vrot.lane.b32.xlu0 %v542, 24
      %v564 = vpop.permute.xlu0 %563
      %565 = vrot.lane.b32.xlu0 %v543, 24
      %v566 = vpop.permute.xlu0 %565
      %567 = vrot.lane.b32.xlu0 %v544, 24
      %v568 = vpop.permute.xlu0 %567
      %vm577 = vcmask 261312
      %578 = vst.msk [vmem:[#allocation2] sm:$0xff] %vm577, %v554
      %579 = vst.msk [vmem:[#allocation2 + $0x8] sm:$0xff] %vm577, %v556
      %580 = vst.msk [vmem:[#allocation2 + $0x10] sm:$0xff] %vm577, %v558
      %581 = vst.msk [vmem:[#allocation2 + $0x18] sm:$0xff] %vm577, %v560
      %582 = vst.msk [vmem:[#allocation2 + $0x20] sm:$0xff] %vm577, %v562
      %583 = vst.msk [vmem:[#allocation2 + $0x28] sm:$0xff] %vm577, %v564
      %584 = vst.msk [vmem:[#allocation2 + $0x30] sm:$0xff] %vm577, %v566
      %585 = vst.msk [vmem:[#allocation2 + $0x38] sm:$0xff] %vm577, %v568
      %v586 = vld [vmem:[%s536 + $0x1] sm:$0xff]
      %v587 = vld [vmem:[%s536 + $0x11] sm:$0xff]
      %v588 = vld [vmem:[%s536 + $0x21] sm:$0xff]
      %v589 = vld [vmem:[%s536 + $0x31] sm:$0xff]
      %v590 = vld [vmem:[%s536 + $0x41] sm:$0xff]
      %v591 = vld [vmem:[%s536 + $0x51] sm:$0xff]
      %v592 = vld [vmem:[%s536 + $0x61] sm:$0xff]
      %v593 = vld [vmem:[%s536 + $0x71] sm:$0xff]
      %602 = vrot.lane.b32.xlu0 %v586, 32
      %v603 = vpop.permute.xlu0 %602
      %604 = vrot.lane.b32.xlu0 %v587, 32
      %v605 = vpop.permute.xlu0 %604
      %606 = vrot.lane.b32.xlu0 %v588, 32
      %v607 = vpop.permute.xlu0 %606
      %608 = vrot.lane.b32.xlu0 %v589, 32
      %v609 = vpop.permute.xlu0 %608
      %610 = vrot.lane.b32.xlu0 %v590, 32
      %v611 = vpop.permute.xlu0 %610
      %612 = vrot.lane.b32.xlu0 %v591, 32
      %v613 = vpop.permute.xlu0 %612
      %614 = vrot.lane.b32.xlu0 %v592, 32
      %v615 = vpop.permute.xlu0 %614
      %616 = vrot.lane.b32.xlu0 %v593, 32
      %v617 = vpop.permute.xlu0 %616
      %vm626 = vcmask 326912
      %627 = vst.msk [vmem:[#allocation2] sm:$0xff] %vm626, %v603
      %628 = vst.msk [vmem:[#allocation2 + $0x8] sm:$0xff] %vm626, %v605
      %629 = vst.msk [vmem:[#allocation2 + $0x10] sm:$0xff] %vm626, %v607
      %630 = vst.msk [vmem:[#allocation2 + $0x18] sm:$0xff] %vm626, %v609
      %631 = vst.msk [vmem:[#allocation2 + $0x20] sm:$0xff] %vm626, %v611
      %632 = vst.msk [vmem:[#allocation2 + $0x28] sm:$0xff] %vm626, %v613
      %633 = vst.msk [vmem:[#allocation2 + $0x30] sm:$0xff] %vm626, %v615
      %634 = vst.msk [vmem:[#allocation2 + $0x38] sm:$0xff] %vm626, %v617
      %v635 = vld [vmem:[%s536 + $0x2] sm:$0xff]
      %v636 = vld [vmem:[%s536 + $0x12] sm:$0xff]
      %v637 = vld [vmem:[%s536 + $0x22] sm:$0xff]
      %v638 = vld [vmem:[%s536 + $0x32] sm:$0xff]
      %v639 = vld [vmem:[%s536 + $0x42] sm:$0xff]
      %v640 = vld [vmem:[%s536 + $0x52] sm:$0xff]
      %v641 = vld [vmem:[%s536 + $0x62] sm:$0xff]
      %v642 = vld [vmem:[%s536 + $0x72] sm:$0xff]
      %651 = vrot.lane.b32.xlu0 %v635, 40
      %v652 = vpop.permute.xlu0 %651
      %653 = vrot.lane.b32.xlu0 %v636, 40
      %v654 = vpop.permute.xlu0 %653
      %655 = vrot.lane.b32.xlu0 %v637, 40
      %v656 = vpop.permute.xlu0 %655
      %657 = vrot.lane.b32.xlu0 %v638, 40
      %v658 = vpop.permute.xlu0 %657
      %659 = vrot.lane.b32.xlu0 %v639, 40
      %v660 = vpop.permute.xlu0 %659
      %661 = vrot.lane.b32.xlu0 %v640, 40
      %v662 = vpop.permute.xlu0 %661
      %663 = vrot.lane.b32.xlu0 %v641, 40
      %v664 = vpop.permute.xlu0 %663
      %665 = vrot.lane.b32.xlu0 %v642, 40
      %v666 = vpop.permute.xlu0 %665
      %vm675 = vcmask 392512
      %676 = vst.msk [vmem:[#allocation2] sm:$0xff] %vm675, %v652
      %677 = vst.msk [vmem:[#allocation2 + $0x8] sm:$0xff] %vm675, %v654
      %678 = vst.msk [vmem:[#allocation2 + $0x10] sm:$0xff] %vm675, %v656
      %679 = vst.msk [vmem:[#allocation2 + $0x18] sm:$0xff] %vm675, %v658
      %680 = vst.msk [vmem:[#allocation2 + $0x20] sm:$0xff] %vm675, %v660
      %681 = vst.msk [vmem:[#allocation2 + $0x28] sm:$0xff] %vm675, %v662
      %682 = vst.msk [vmem:[#allocation2 + $0x30] sm:$0xff] %vm675, %v664
      %683 = vst.msk [vmem:[#allocation2 + $0x38] sm:$0xff] %vm675, %v666
      %s684 = scalar_lea.vmem [#allocation3], 32
      %v685 = vld [vmem:[%s684] sm:$0xff]
      %v686 = vld [vmem:[%s684 + $0x10] sm:$0xff]
      %v687 = vld [vmem:[%s684 + $0x20] sm:$0xff]
      %v688 = vld [vmem:[%s684 + $0x30] sm:$0xff]
      %v689 = vld [vmem:[%s684 + $0x40] sm:$0xff]
      %v690 = vld [vmem:[%s684 + $0x50] sm:$0xff]
      %v691 = vld [vmem:[%s684 + $0x60] sm:$0xff]
      %v692 = vld [vmem:[%s684 + $0x70] sm:$0xff]
      %701 = vrot.lane.b32.xlu0 %v685, 48
      %v702 = vpop.permute.xlu0 %701
      %703 = vrot.lane.b32.xlu0 %v686, 48
      %v704 = vpop.permute.xlu0 %703
      %705 = vrot.lane.b32.xlu0 %v687, 48
      %v706 = vpop.permute.xlu0 %705
      %707 = vrot.lane.b32.xlu0 %v688, 48
      %v708 = vpop.permute.xlu0 %707
      %709 = vrot.lane.b32.xlu0 %v689, 48
      %v710 = vpop.permute.xlu0 %709
      %711 = vrot.lane.b32.xlu0 %v690, 48
      %v712 = vpop.permute.xlu0 %711
      %713 = vrot.lane.b32.xlu0 %v691, 48
      %v714 = vpop.permute.xlu0 %713
      %715 = vrot.lane.b32.xlu0 %v692, 48
      %v716 = vpop.permute.xlu0 %715
      %vm725 = vcmask 458112
      %726 = vst.msk [vmem:[#allocation2] sm:$0xff] %vm725, %v702
      %727 = vst.msk [vmem:[#allocation2 + $0x8] sm:$0xff] %vm725, %v704
      %728 = vst.msk [vmem:[#allocation2 + $0x10] sm:$0xff] %vm725, %v706
      %729 = vst.msk [vmem:[#allocation2 + $0x18] sm:$0xff] %vm725, %v708
      %730 = vst.msk [vmem:[#allocation2 + $0x20] sm:$0xff] %vm725, %v710
      %731 = vst.msk [vmem:[#allocation2 + $0x28] sm:$0xff] %vm725, %v712
      %732 = vst.msk [vmem:[#allocation2 + $0x30] sm:$0xff] %vm725, %v714
      %733 = vst.msk [vmem:[#allocation2 + $0x38] sm:$0xff] %vm725, %v716
      %v734 = vld [vmem:[%s684 + $0x1] sm:$0xff]
      %v735 = vld [vmem:[%s684 + $0x11] sm:$0xff]
      %v736 = vld [vmem:[%s684 + $0x21] sm:$0xff]
      %v737 = vld [vmem:[%s684 + $0x31] sm:$0xff]
      %v738 = vld [vmem:[%s684 + $0x41] sm:$0xff]
      %v739 = vld [vmem:[%s684 + $0x51] sm:$0xff]
      %v740 = vld [vmem:[%s684 + $0x61] sm:$0xff]
      %v741 = vld [vmem:[%s684 + $0x71] sm:$0xff]
      %750 = vrot.lane.b32.xlu0 %v734, 56
      %v751 = vpop.permute.xlu0 %750
      %752 = vrot.lane.b32.xlu0 %v735, 56
      %v753 = vpop.permute.xlu0 %752
      %754 = vrot.lane.b32.xlu0 %v736, 56
      %v755 = vpop.permute.xlu0 %754
      %756 = vrot.lane.b32.xlu0 %v737, 56
      %v757 = vpop.permute.xlu0 %756
      %758 = vrot.lane.b32.xlu0 %v738, 56
      %v759 = vpop.permute.xlu0 %758
      %760 = vrot.lane.b32.xlu0 %v739, 56
      %v761 = vpop.permute.xlu0 %760
      %762 = vrot.lane.b32.xlu0 %v740, 56
      %v763 = vpop.permute.xlu0 %762
      %764 = vrot.lane.b32.xlu0 %v741, 56
      %v765 = vpop.permute.xlu0 %764
      %vm774 = vcmask 523712
      %775 = vst.msk [vmem:[#allocation2] sm:$0xff] %vm774, %v751
      %776 = vst.msk [vmem:[#allocation2 + $0x8] sm:$0xff] %vm774, %v753
      %777 = vst.msk [vmem:[#allocation2 + $0x10] sm:$0xff] %vm774, %v755
      %778 = vst.msk [vmem:[#allocation2 + $0x18] sm:$0xff] %vm774, %v757
      %779 = vst.msk [vmem:[#allocation2 + $0x20] sm:$0xff] %vm774, %v759
      %780 = vst.msk [vmem:[#allocation2 + $0x28] sm:$0xff] %vm774, %v761
      %781 = vst.msk [vmem:[#allocation2 + $0x30] sm:$0xff] %vm774, %v763
      %782 = vst.msk [vmem:[#allocation2 + $0x38] sm:$0xff] %vm774, %v765
      %v783 = vld [vmem:[%s684 + $0x2] sm:$0xff]
      %v784 = vld [vmem:[%s684 + $0x12] sm:$0xff]
      %v785 = vld [vmem:[%s684 + $0x22] sm:$0xff]
      %v786 = vld [vmem:[%s684 + $0x32] sm:$0xff]
      %v787 = vld [vmem:[%s684 + $0x42] sm:$0xff]
      %v788 = vld [vmem:[%s684 + $0x52] sm:$0xff]
      %v789 = vld [vmem:[%s684 + $0x62] sm:$0xff]
      %v790 = vld [vmem:[%s684 + $0x72] sm:$0xff]
      %799 = vrot.lane.b32.xlu0 %v783, 64
      %v800 = vpop.permute.xlu0 %799
      %801 = vrot.lane.b32.xlu0 %v784, 64
      %v802 = vpop.permute.xlu0 %801
      %803 = vrot.lane.b32.xlu0 %v785, 64
      %v804 = vpop.permute.xlu0 %803
      %805 = vrot.lane.b32.xlu0 %v786, 64
      %v806 = vpop.permute.xlu0 %805
      %807 = vrot.lane.b32.xlu0 %v787, 64
      %v808 = vpop.permute.xlu0 %807
      %809 = vrot.lane.b32.xlu0 %v788, 64
      %v810 = vpop.permute.xlu0 %809
      %811 = vrot.lane.b32.xlu0 %v789, 64
      %v812 = vpop.permute.xlu0 %811
      %813 = vrot.lane.b32.xlu0 %v790, 64
      %v814 = vpop.permute.xlu0 %813
      %vm823 = vcmask 589312
      %824 = vst.msk [vmem:[#allocation2] sm:$0xff] %vm823, %v800
      %825 = vst.msk [vmem:[#allocation2 + $0x8] sm:$0xff] %vm823, %v802
      %826 = vst.msk [vmem:[#allocation2 + $0x10] sm:$0xff] %vm823, %v804
      %827 = vst.msk [vmem:[#allocation2 + $0x18] sm:$0xff] %vm823, %v806
      %828 = vst.msk [vmem:[#allocation2 + $0x20] sm:$0xff] %vm823, %v808
      %829 = vst.msk [vmem:[#allocation2 + $0x28] sm:$0xff] %vm823, %v810
      %830 = vst.msk [vmem:[#allocation2 + $0x30] sm:$0xff] %vm823, %v812
      %831 = vst.msk [vmem:[#allocation2 + $0x38] sm:$0xff] %vm823, %v814
      %v832 = vld [vmem:[#allocation2] sm:$0xff]
      %v833 = vld [vmem:[#allocation2 + $0x8] sm:$0xff]
      %v834 = vld [vmem:[#allocation2 + $0x10] sm:$0xff]
      %v835 = vld [vmem:[#allocation2 + $0x18] sm:$0xff]
      %v836 = vld [vmem:[#allocation2 + $0x20] sm:$0xff]
      %v837 = vld [vmem:[#allocation2 + $0x28] sm:$0xff]
      %v838 = vld [vmem:[#allocation2 + $0x30] sm:$0xff]
      %v839 = vld [vmem:[#allocation2 + $0x38] sm:$0xff]
      %v840 = vld [vmem:[%s1] sm:$0xff]
      %v841 = vld [vmem:[%s1 + $0x8] sm:$0xff]
      %v842 = vld [vmem:[%s1 + $0x10] sm:$0xff]
      %v843 = vld [vmem:[%s1 + $0x18] sm:$0xff]
      %v844 = vld [vmem:[%s1 + $0x20] sm:$0xff]
      %v845 = vld [vmem:[%s1 + $0x28] sm:$0xff]
      %v846 = vld [vmem:[%s1 + $0x30] sm:$0xff]
      %v847 = vld [vmem:[%s1 + $0x38] sm:$0xff]
      %v848 = vld [vmem:[%s1 + $0x40] sm:$0xff]
      %v849 = vld [vmem:[%s2] sm:$0x1]
      %v851 = vlaneseq
      %v852 = vshrl.u32 %v851, 7
      %v853 = vsub.s32 0, %v852
      %v854 = vrot.slane %v849, %v853
      %vm856 = vcmask 588800
      %v858 = vsel %vm856, %v832, 0
      %v861 = vsel %vm856, %v833, 0
      %v864 = vsel %vm856, %v834, 0
      %v867 = vsel %vm856, %v835, 0
      %v870 = vsel %vm856, %v836, 0
      %v873 = vsel %vm856, %v837, 0
      %v876 = vsel %vm856, %v838, 0
      %v879 = vsel %vm856, %v839, 0
      %881 = vmatprep.subr.mxu0 0.0
      %882 = vmatpush1.msra.mxu0 %v840
      %883 = vmatprep.subr.mxu0 0.0
      %884 = vmatpush1.msra.mxu0 %v841
      %885 = vmatprep.subr.mxu0 0.0
      %886 = vmatpush1.msra.mxu0 %v842
      %887 = vmatprep.subr.mxu0 0.0
      %888 = vmatpush1.msra.mxu0 %v843
      %889 = vmatprep.subr.mxu0 0.0
      %890 = vmatpush1.msra.mxu0 %v844
      %891 = vmatprep.subr.mxu0 0.0
      %892 = vmatpush1.msra.mxu0 %v845
      %893 = vmatprep.subr.mxu0 0.0
      %894 = vmatpush1.msra.mxu0 %v846
      %895 = vmatprep.subr.mxu0 0.0
      %896 = vmatpush1.msra.mxu0 %v847
      %897 = vmatprep.subr.mxu0 0.0
      %898 = vmatpush1.msra.mxu0 %v848
      %899 = vmatprep.subr.mxu0 0.0
      %900 = vmatpush1.msra.mxu0 0.0
      %901 = vmatprep.subr.mxu0 0.0
      %902 = vmatpush1.msra.mxu0 0.0
      %903 = vmatprep.subr.mxu0 0.0
      %904 = vmatpush1.msra.mxu0 0.0
      %905 = vmatprep.subr.mxu0 0.0
      %906 = vmatpush1.msra.mxu0 0.0
      %907 = vmatprep.subr.mxu0 0.0
      %908 = vmatpush1.msra.mxu0 0.0
      %909 = vmatprep.subr.mxu0 0.0
      %910 = vmatpush1.msra.mxu0 0.0
      %911 = vmatprep.subr.mxu0 0.0
      %912 = vmatpush1.msra.mxu0 0.0
      %913 = vmatprep.subr.mxu0 0.0
      %914 = vmatpush1.msra.mxu0 0.0
      %915 = vmatprep.subr.mxu0 0.0
      %916 = vmatpush1.msra.mxu0 0.0
      %917 = vmatprep.subr.mxu0 0.0
      %918 = vmatpush1.msra.mxu0 0.0
      %919 = vmatprep.subr.mxu0 0.0
      %920 = vmatpush1.msra.mxu0 0.0
      %921 = vmatprep.subr.mxu0 0.0
      %922 = vmatpush1.msra.mxu0 0.0
      %923 = vmatprep.subr.mxu0 0.0
      %924 = vmatpush1.msra.mxu0 0.0
      %925 = vmatprep.subr.mxu0 0.0
      %926 = vmatpush1.msra.mxu0 0.0
      %927 = vmatprep.subr.mxu0 0.0
      %928 = vmatpush1.msra.mxu0 0.0
      %929 = vmatprep.subr.mxu0 0.0
      %930 = vmatpush1.msra.mxu0 0.0
      %931 = vmatprep.subr.mxu0 0.0
      %932 = vmatpush1.msra.mxu0 0.0
      %933 = vmatprep.subr.mxu0 0.0
      %934 = vmatpush1.msra.mxu0 0.0
      %935 = vmatprep.subr.mxu0 0.0
      %936 = vmatpush1.msra.mxu0 0.0
      %937 = vmatprep.subr.mxu0 0.0
      %938 = vmatpush1.msra.mxu0 0.0
      %939 = vmatprep.subr.mxu0 0.0
      %940 = vmatpush1.msra.mxu0 0.0
      %941 = vmatprep.subr.mxu0 0.0
      %942 = vmatpush1.msra.mxu0 0.0
      %943 = vmatprep.subr.mxu0 0.0
      %944 = vmatpush1.msra.mxu0 0.0
      %945 = vmatprep.mubr.f32.mxu0 0.0
      %946 = vmatmul.mubr.f32.gmra.mrb[0].mxu0 %v858
      %v947 = vpop.f32.mrb[0].mxu0
      %v948 = vadd.f32 %v854, %v947
      %v949 = vpop.f32.mrb[0].mxu0
      %950 = vmatprep.mubr.f32.mxu0 0.0
      %951 = vmatmul.mubr.f32.gmra.mrb[0].mxu0 %v861
      %v952 = vpop.f32.mrb[0].mxu0
      %v953 = vadd.f32 %v854, %v952
      %v954 = vpop.f32.mrb[0].mxu0
      %955 = vmatprep.mubr.f32.mxu0 0.0
      %956 = vmatmul.mubr.f32.gmra.mrb[0].mxu0 %v864
      %v957 = vpop.f32.mrb[0].mxu0
      %v958 = vadd.f32 %v854, %v957
      %v959 = vpop.f32.mrb[0].mxu0
      %960 = vmatprep.mubr.f32.mxu0 0.0
      %961 = vmatmul.mubr.f32.gmra.mrb[0].mxu0 %v867
      %v962 = vpop.f32.mrb[0].mxu0
      %v963 = vadd.f32 %v854, %v962
      %v964 = vpop.f32.mrb[0].mxu0
      %965 = vmatprep.mubr.f32.mxu0 0.0
      %966 = vmatmul.mubr.f32.gmra.mrb[0].mxu0 %v870
      %v967 = vpop.f32.mrb[0].mxu0
      %v968 = vadd.f32 %v854, %v967
      %v969 = vpop.f32.mrb[0].mxu0
      %970 = vmatprep.mubr.f32.mxu0 0.0
      %971 = vmatmul.mubr.f32.gmra.mrb[0].mxu0 %v873
      %v972 = vpop.f32.mrb[0].mxu0
      %v973 = vadd.f32 %v854, %v972
      %v974 = vpop.f32.mrb[0].mxu0
      %975 = vmatprep.mubr.f32.mxu0 0.0
      %976 = vmatmul.mubr.f32.gmra.mrb[0].mxu0 %v876
      %v977 = vpop.f32.mrb[0].mxu0
      %v978 = vadd.f32 %v854, %v977
      %v979 = vpop.f32.mrb[0].mxu0
      %980 = vmatprep.mubr.f32.mxu0 0.0
      %981 = vmatmul.mubr.f32.gmra.mrb[0].mxu0 %v879
      %v982 = vpop.f32.mrb[0].mxu0
      %v983 = vadd.f32 %v854, %v982
      %v984 = vpop.f32.mrb[0].mxu0
      %985 = vdwg.mxu0
      %986 = vst [vmem:[%s258] sm:$0xff] %v948
      %987 = vst [vmem:[%s258 + $0x8] sm:$0xff] %v953
      %988 = vst [vmem:[%s258 + $0x10] sm:$0xff] %v958
      %989 = vst [vmem:[%s258 + $0x18] sm:$0xff] %v963
      %990 = vst [vmem:[%s258 + $0x20] sm:$0xff] %v968
      %991 = vst [vmem:[%s258 + $0x28] sm:$0xff] %v973
      %992 = vst [vmem:[%s258 + $0x30] sm:$0xff] %v978
      %993 = vst [vmem:[%s258 + $0x38] sm:$0xff] %v983
      %v994 = vadd.f32 %v948, %v953
      %v995 = vadd.f32 %v994, %v958
      %v996 = vadd.f32 %v995, %v963
      %v997 = vadd.f32 %v996, %v968
      %v998 = vadd.f32 %v997, %v973
      %v999 = vadd.f32 %v998, %v978
      %v1000 = vadd.f32 %v999, %v983
      %v1001 = vrot.slane %v1000, 4
      %v1002 = vadd.f32 %v1000, %v1001
      %v1003 = vrot.slane %v1002, 2
      %v1004 = vadd.f32 %v1002, %v1003
      %v1005 = vrot.slane %v1004, 1
      %v1006 = vadd.f32 %v1004, %v1005
      %1007 = vst [vmem:[%s262] sm:$0x1] %v1006
      %v1008 = vmul.f32 %v1006, 0.015625
      %v1009 = vsub.f32 %v948, %v1008
      %v1010 = vsub.f32 %v953, %v1008
      %v1011 = vsub.f32 %v958, %v1008
      %v1012 = vsub.f32 %v963, %v1008
      %v1013 = vsub.f32 %v968, %v1008
      %v1014 = vsub.f32 %v973, %v1008
      %v1015 = vsub.f32 %v978, %v1008
      %v1016 = vsub.f32 %v983, %v1008
      %v1017 = vmul.f32 %v1009, %v1009
      %v1018 = vmul.f32 %v1010, %v1010
      %v1019 = vmul.f32 %v1011, %v1011
      %v1020 = vmul.f32 %v1012, %v1012
      %v1021 = vmul.f32 %v1013, %v1013
      %v1022 = vmul.f32 %v1014, %v1014
      %v1023 = vmul.f32 %v1015, %v1015
      %v1024 = vmul.f32 %v1016, %v1016
      %v1025 = vadd.f32 %v1017, %v1018
      %v1026 = vadd.f32 %v1025, %v1019
      %v1027 = vadd.f32 %v1026, %v1020
      %v1028 = vadd.f32 %v1027, %v1021
      %v1029 = vadd.f32 %v1028, %v1022
      %v1030 = vadd.f32 %v1029, %v1023
      %v1031 = vadd.f32 %v1030, %v1024
      %v1032 = vrot.slane %v1031, 4
      %v1033 = vadd.f32 %v1031, %v1032
      %v1034 = vrot.slane %v1033, 2
      %v1035 = vadd.f32 %v1033, %v1034
      %v1036 = vrot.slane %v1035, 1
      %v1037 = vadd.f32 %v1035, %v1036
      %1038 = vst [vmem:[%s262 + $0x1] sm:$0x1] %v1037
      %p1039 = scmp.lt.s32.totalorder %s18, 1
      %s1040 = scalar_select %p1039, %s18, 1
      %s1041 = smul.addr %s1040, 8
      %s1042 = smul.addr %s1041, 8
      %s1043 = scalar_lea.vmem %s5, %s1042
      %p1044 = scmp.lt.s32.totalorder %s18, 1
      %s1045 = scalar_select %p1044, %s18, 1
      %s1046 = smul.addr %s1045, 2
      %s1047 = scalar_lea.vmem %s6, %s1046
      // Predicated region
      $region41: #{residual_block_forward.5} parent=39 // pred_check
        %p1048 = pneg %p146
      $region42: #{residual_block_forward.5} parent=39 // pred_check_branch
        %1050 = sbr.rel (%p1048) target = $region44
      $region43: #{residual_block_forward.5} parent=39 // pred_region
        _
      $region44: #{residual_block_forward.5} parent=39 // pred_fallthru
        _
      // Predicated region
      $region45: #{residual_block_forward.5} parent=39 // pred_check
        %p1051 = pneg %p172
      $region46: #{residual_block_forward.5} parent=39 // pred_check_branch
        %1053 = sbr.rel (%p1051) target = $region48
      $region47: #{residual_block_forward.5} parent=39 // pred_region
        _
      $region48: #{residual_block_forward.5} parent=39 // pred_fallthru
        _
    $region40: #{residual_block_forward.5} parent=5 // pred_fallthru
      _
    %p1054 = scmp.le.s32.totalorder 2, %s13
    // Predicated region
    $region49: #{residual_block_forward.5} parent=5 // pred_check
      %p1055 = pneg %p1054
    $region50: #{residual_block_forward.5} parent=5 // pred_check_branch
      %1057 = sbr.rel (%p1055) target = $region52
    $region51: #{residual_block_forward.5} parent=5 // pred_region
      %s1058 = ssub.s32 %s13, 2
      // Predicated region
      $region53: #{residual_block_forward.5} parent=51 // pred_check
        %p1059 = pneg %p152
      $region54: #{residual_block_forward.5} parent=51 // pred_check_branch
        %1061 = sbr.rel (%p1059) target = $region56
      $region55: #{residual_block_forward.5} parent=51 // pred_region
        %p1062 = scmp.lt.s32.totalorder %s19, 1
        %s1063 = scalar_select %p1062, %s19, 1
        %s1064 = smul.addr %s1063, 8
        %s1065 = smul.addr %s1064, 8
        %s1066 = scalar_lea.vmem %s5, %s1065
      $region56: #{residual_block_forward.5} parent=51 // pred_fallthru
        _
      // Predicated region
      $region57: #{residual_block_forward.5} parent=51 // pred_check
        %p1067 = pneg %p178
      $region58: #{residual_block_forward.5} parent=51 // pred_check_branch
        %1069 = sbr.rel (%p1067) target = $region60
      $region59: #{residual_block_forward.5} parent=51 // pred_region
        %p1070 = scmp.lt.s32.totalorder %s19, 1
        %s1071 = scalar_select %p1070, %s19, 1
        %s1072 = smul.addr %s1071, 2
        %s1073 = scalar_lea.vmem %s6, %s1072
      $region60: #{residual_block_forward.5} parent=51 // pred_fallthru
        _
    $region52: #{residual_block_forward.5} parent=5 // pred_fallthru
      _
  $region6: #{residual_block_forward.5} parent=0 // loop_footer
    %s17 = sadd.s32 1, %s13
  $region7: #{residual_block_forward.5} parent=0 // loop_footer_branch
    %12 = sbr.rel target = $region3
  $region8: #{residual_block_forward.5} parent=0 // loop_exit
    _

</llo_original>
